<compile_context>
chip_gen: v6e
topology: v6e:2x2x1
jax: 0.10.0
libtpu: 0.0.40
codegen_flags: <defaults>
</compile_context>

<pallas_src>
import jax
import jax.numpy as jnp
from jax import lax
from jax.experimental import pallas as pl
from jax.experimental.pallas import tpu as pltpu

SS_H = 100        # SpatialSoftmax height (hard-coded in the PyTorch module)
SS_W = 100        # SpatialSoftmax width
NUM_PATHS = 6     # number of tconv4 branches / command-mask entries


def _round_up(v, m):
    return ((v + m - 1) // m) * m


# ---------------------------------------------------------------------------
# Pallas kernel: fused Tanh + mask-weighted branch sum + SpatialSoftmax head
# ---------------------------------------------------------------------------
def _multipath_head_kernel(mask_ref, z_ref, px_ref, py_ref, out_ref):
    """One grid step = one batch element x one tile of CB output channels.

    mask_ref: (6, 1, 1)      command mask for this batch element
    z_ref:    (6, CB, H, W)  pre-Tanh outputs of the 6 ConvTranspose branches
    px_ref:   (H, W)         SpatialSoftmax x-coordinate grid
    py_ref:   (H, W)         SpatialSoftmax y-coordinate grid
    out_ref:  (CB, 2)        keypoints (x*12, (y-1)*12)
    """
    # sum_k tanh(z_k) * mask_k  (branch dim is static -> unrolled; tanh runs on the EUP)
    acc = jnp.tanh(z_ref[0]) * mask_ref[0]
    for k in range(1, NUM_PATHS):
        acc = acc + jnp.tanh(z_ref[k]) * mask_ref[k]

    # softmax over the full spatial extent, per channel (temperature == 1.0)
    m = jnp.max(jnp.max(acc, axis=2, keepdims=True), axis=1, keepdims=True)  # (CB,1,1)
    e = jnp.exp(acc - m)
    denom = jnp.sum(jnp.sum(e, axis=2, keepdims=True), axis=1, keepdims=True)

    ex = jnp.sum(jnp.sum(e * px_ref[...], axis=2, keepdims=True), axis=1, keepdims=True)
    ey = jnp.sum(jnp.sum(e * py_ref[...], axis=2, keepdims=True), axis=1, keepdims=True)

    inv = 1.0 / denom
    kx = ex * inv * 12.0                  # feature_keypoints[:, :, 0] * 12
    ky = (ey * inv - 1.0) * 12.0          # (feature_keypoints[:, :, 1] - 1) * 12
    out_ref[:, 0:1] = kx[:, :, 0].astype(out_ref.dtype)
    out_ref[:, 1:2] = ky[:, :, 0].astype(out_ref.dtype)


def _choose_channel_block(C, H, W, budget_bytes=8 * (1 << 20)):
    """Largest channel tile whose double-buffered z-block fits the VMEM budget."""
    hp, wp = _round_up(H, 8), _round_up(W, 128)

    def z_bytes(cb):
        return 2 * NUM_PATHS * cb * hp * wp * 4  # double-buffered f32 input block

    if z_bytes(C) <= budget_bytes:
        return C
    for cb in range((C // 8) * 8, 0, -8):        # multiples of 8, descending
        if C % cb == 0 and z_bytes(cb) <= budget_bytes:
            return cb
    return C


def multipath_spatial_softmax_head(z5, mask):
    """z5: (N, 6, C, H, W) pre-Tanh branch maps; mask: (N, 6).  Returns (N, C, 2)."""
    n, paths, C, H, W = z5.shape
    assert paths == NUM_PATHS and H * W == SS_H * SS_W

    # SpatialSoftmax coordinate buffers, built exactly like the PyTorch module
    # (np.meshgrid(linspace(h), linspace(w)) then flattened); reshaped onto the
    # (H, W) feature-map layout -> identical element pairing as the torch buffers.
    lin_h = jnp.linspace(-1.0, 1.0, SS_H, dtype=jnp.float32)
    lin_w = jnp.linspace(-1.0, 1.0, SS_W, dtype=jnp.float32)
    pos_x, pos_y = jnp.meshgrid(lin_h, lin_w)          # each (SS_W, SS_H)
    px2d = pos_x.reshape(H, W)
    py2d = pos_y.reshape(H, W)

    cb = _choose_channel_block(C, H, W)
    assert C % cb == 0
    mask4 = mask.reshape(n, NUM_PATHS, 1, 1).astype(z5.dtype)

    # Explicit VMEM budget computed from the actual block sizes (portable to v7x 64 MiB).
    hp, wp = _round_up(H, 8), _round_up(W, 128)
    need = (2 * NUM_PATHS * cb * hp * wp * 4       # double-buffered z block
            + 2 * hp * wp * 4                      # resident pos_x / pos_y
            + 4 * 8 * 128 * 4)                     # mask + out blocks (padded, generous)
    vmem_limit = int(min(max(2 * need, 4 << 20), 64 << 20))

    return pl.pallas_call(
        _multipath_head_kernel,
        out_shape=jax.ShapeDtypeStruct((n, C, 2), z5.dtype),
        grid_spec=pltpu.PrefetchScalarGridSpec(
            num_scalar_prefetch=0,
            grid=(n, C // cb),
            in_specs=[
                pl.BlockSpec((None, NUM_PATHS, 1, 1), lambda b, ct: (b, 0, 0, 0)),
                pl.BlockSpec((None, NUM_PATHS, cb, H, W),
                             lambda b, ct: (b, 0, ct, 0, 0)),
                pl.BlockSpec((H, W), lambda b, ct: (0, 0)),   # resident (constant index)
                pl.BlockSpec((H, W), lambda b, ct: (0, 0)),
            ],
            out_specs=pl.BlockSpec((None, cb, 2), lambda b, ct: (b, ct, 0)),
        ),
        compiler_params=pltpu.CompilerParams(
            dimension_semantics=("parallel", "parallel"),   # no carried state -> 2-TC shard
            vmem_limit_bytes=vmem_limit,
        ),
    )(mask4, z5, px2d, py2d)


# ---------------------------------------------------------------------------
# Trunk glue (plain JAX / XLA)
# ---------------------------------------------------------------------------
# TODO(synk): ConvTranspose2d stacks, BatchNorm2d(+ReLU) and bilinear Upsample are left as
# XLA glue (lax.conv_general_dilated with lhs_dilation / jax.image.resize); BatchNorm is
# implemented in inference (eval) mode with explicit running statistics.
def _conv_transpose_nchw(x, w_t, stride, padding):
    """PyTorch ConvTranspose2d(bias=False); w_t layout (Cin, Cout, k, k)."""
    k = w_t.shape[-1]
    w_conv = jnp.flip(jnp.transpose(w_t, (1, 0, 2, 3)), axis=(2, 3))  # (Cout, Cin, k, k)
    p = k - 1 - padding
    return lax.conv_general_dilated(
        x, w_conv, window_strides=(1, 1), padding=((p, p), (p, p)),
        lhs_dilation=(stride, stride),
        dimension_numbers=("NCHW", "OIHW", "NCHW"))


def _bn_relu(x, bn_params, eps=1e-5):
    gamma, beta, mean, var = bn_params
    inv = gamma / jnp.sqrt(var + eps)
    scale = inv.reshape(1, -1, 1, 1)
    shift = (beta - mean * inv).reshape(1, -1, 1, 1)
    return jnp.maximum(x * scale + shift, 0.0)


def _trunk(x, measurements, params):
    """Everything up to (and including) the six tconv4 branches (pre-Tanh)."""
    n, d, c = x.shape
    mask = measurements[:, :NUM_PATHS]                                 # (n, 6)
    velocity = measurements[:, NUM_PATHS:NUM_PATHS + 1]                # (n, 1)
    vel_map = jnp.broadcast_to(velocity[:, :, None, None], (n, 32, 2, 2))

    h = jnp.transpose(x, (0, 2, 1)).reshape(n, (c * d) // 4, 2, 2)
    h = jnp.concatenate([h, vel_map], axis=1)                          # (n, in_channel, 2, 2)

    h = _bn_relu(_conv_transpose_nchw(h, params["w0"], 2, 1), params["bn0"])  # (n,256,4,4)
    h = _bn_relu(_conv_transpose_nchw(h, params["w1"], 2, 1), params["bn1"])  # (n,256,8,8)
    h = _bn_relu(_conv_transpose_nchw(h, params["w2"], 2, 1), params["bn2"])  # (n,192,16,16)
    h = _bn_relu(_conv_transpose_nchw(h, params["w3"], 2, 1), params["bn3"])  # (n,64,32,32)
    h = jax.image.resize(h, (h.shape[0], h.shape[1], 50, 50), method="bilinear")

    # Fuse the six ConvTranspose2d(64, C_out, 8, 2, 3) branches into one transposed conv
    # with branch-major stacked output channels -> (n, 6*C_out, 100, 100).
    w4 = params["w4"]                                  # (6, 64, C_out, 8, 8)
    cin4, cout = w4.shape[1], w4.shape[2]
    w4_cat = jnp.transpose(w4, (1, 0, 2, 3, 4)).reshape(cin4, NUM_PATHS * cout, 8, 8)
    z = _conv_transpose_nchw(h, w4_cat, 2, 3)          # (n, 6*C_out, 100, 100)
    z5 = z.reshape(n, NUM_PATHS, cout, SS_H, SS_W)     # free reshape (splits non-minor dim)
    return z5, mask


def multipath_generator_forward(x, measurements, params):
    """Equivalent of MultiPath_Generator.forward: returns (N, out_channel, 2) keypoints."""
    z5, mask = _trunk(x, measurements, params)
    return multipath_spatial_softmax_head(z5, mask)


# ---------------------------------------------------------------------------
# Pure-JAX reference for the fused head (correctness check)
# ---------------------------------------------------------------------------
def _head_reference(z5, mask):
    n, paths, C, H, W = z5.shape
    lin_h = jnp.linspace(-1.0, 1.0, SS_H, dtype=jnp.float32)
    lin_w = jnp.linspace(-1.0, 1.0, SS_W, dtype=jnp.float32)
    pos_x, pos_y = jnp.meshgrid(lin_h, lin_w)
    pos_x = pos_x.reshape(-1)
    pos_y = pos_y.reshape(-1)

    xs = jnp.tanh(z5)
    summed = jnp.sum(xs * mask[:, :, None, None, None], axis=1)        # (n, C, H, W)
    flat = summed.reshape(n * C, H * W)
    w = jax.nn.softmax(flat, axis=-1)
    ex = jnp.sum(w * pos_x[None, :], axis=1)
    ey = jnp.sum(w * pos_y[None, :], axis=1)
    kp = jnp.stack([ex * 12.0, (ey - 1.0) * 12.0], axis=-1)
    return kp.reshape(n, C, 2)


# ---------------------------------------------------------------------------
# Parameters
# ---------------------------------------------------------------------------
def make_params(key, in_channel, out_channel):
    ks = jax.random.split(key, 9)

    def conv_t_w(k, cin, cout, ksz):
        fan_in = cin * ksz * ksz
        return jax.random.normal(k, (cin, cout, ksz, ksz), jnp.float32) / (fan_in ** 0.5)

    def bn(k, ch):
        k1, k2, k3, k4 = jax.random.split(k, 4)
        gamma = 1.0 + 0.1 * jax.random.normal(k1, (ch,), jnp.float32)
        beta = 0.1 * jax.random.normal(k2, (ch,), jnp.float32)
        mean = 0.1 * jax.random.normal(k3, (ch,), jnp.float32)
        var = 1.0 + 0.1 * jax.random.uniform(k4, (ch,), dtype=jnp.float32)
        return (gamma, beta, mean, var)

    return {
        "w0": conv_t_w(ks[0], in_channel, 256, 4), "bn0": bn(ks[1], 256),
        "w1": conv_t_w(ks[2], 256, 256, 4),        "bn1": bn(ks[3], 256),
        "w2": conv_t_w(ks[4], 256, 192, 4),        "bn2": bn(ks[5], 192),
        "w3": conv_t_w(ks[6], 192, 64, 4),         "bn3": bn(ks[7], 64),
        # six ConvTranspose2d(64, out_channel, 8, 2, 3, bias=False) branch weights
        "w4": jax.random.normal(ks[8], (NUM_PATHS, 64, out_channel, 8, 8),
                                jnp.float32) / ((64 * 64) ** 0.5),
    }


if __name__ == "__main__":
    key = jax.random.PRNGKey(0)
    kx, km, kparam = jax.random.split(key, 3)

    B, d, c = 2, 4, 32                 # x: (B, d, c) -> reshaped to (B, c*d//4, 2, 2)
    out_channel = 8
    in_channel = (c * d) // 4 + 32     # +32 velocity channels after concatenation

    x = jax.random.normal(kx, (B, d, c), jnp.float32)
    measurements = jax.random.uniform(km, (B, 7), dtype=jnp.float32)  # [:6]=mask, [6]=velocity
    params = make_params(kparam, in_channel, out_channel)

    fwd = jax.jit(multipath_generator_forward)
    out = fwd(x, measurements, params)
    jax.block_until_ready(out)
    assert out.shape == (B, out_channel, 2)

    # Correctness check: plain-JAX head on the trunk output vs. the fused Pallas head.
    z5, mask = jax.jit(_trunk)(x, measurements, params)
    ref = _head_reference(z5, mask)
    err = float(jnp.max(jnp.abs(out - ref)))
    assert jnp.allclose(out, ref, atol=2e-3, rtol=2e-3), f"max abs err {err}"

    print("KERNEL_OK")
</pallas_src>

<mosaic_0001>
module attributes {stable_mosaic.version = 11 : i64} {
  func.func @_multipath_head_kernel(%arg0: i32, %arg1: i32, %arg2: memref<1x6x1x1xf32, #tpu.memory_space<vmem>>, %arg3: memref<1x6x8x100x100xf32, #tpu.memory_space<vmem>>, %arg4: memref<100x100xf32, #tpu.memory_space<vmem>>, %arg5: memref<100x100xf32, #tpu.memory_space<vmem>>, %arg6: memref<1x8x2xf32, #tpu.memory_space<vmem>>) attributes {dimension_semantics = [#tpu.dimension_semantics<parallel>, #tpu.dimension_semantics<parallel>], iteration_bounds = array<i64: 2, 1>, scalar_prefetch = 0 : i64, scratch_operands = 0 : i64, tpu.core_type = #tpu.core_type<tc>, window_params = [{transform_indices = @transform_0, window_bounds = array<i64: 1, 6, 1, 1>}, {transform_indices = @transform_1, window_bounds = array<i64: 1, 6, 8, 100, 100>}, {pipeline_mode = #tpu.pipeline_mode<synchronous>, transform_indices = @transform_2, window_bounds = array<i64: 100, 100>}, {pipeline_mode = #tpu.pipeline_mode<synchronous>, transform_indices = @transform_3, window_bounds = array<i64: 100, 100>}, {transform_indices = @transform_4, window_bounds = array<i64: 1, 8, 2>}]} {
    %c0 = arith.constant 0 : index
    %c0_0 = arith.constant 0 : index
    %c0_1 = arith.constant 0 : index
    %c0_2 = arith.constant 0 : index
    %c0_3 = arith.constant 0 : index
    %0 = vector.load %arg3[%c0, %c0_0, %c0_1, %c0_2, %c0_3] : memref<1x6x8x100x100xf32, #tpu.memory_space<vmem>>, vector<1x1x8x100x100xf32>
    %1 = vector.shape_cast %0 : vector<1x1x8x100x100xf32> to vector<8x100x100xf32>
    %2 = math.tanh %1 : vector<8x100x100xf32>
    %c0_4 = arith.constant 0 : index
    %c0_5 = arith.constant 0 : index
    %c0_6 = arith.constant 0 : index
    %c0_7 = arith.constant 0 : index
    %3 = vector.load %arg2[%c0_4, %c0_5, %c0_6, %c0_7] : memref<1x6x1x1xf32, #tpu.memory_space<vmem>>, vector<1x1x1x1xf32>
    %4 = vector.shape_cast %3 : vector<1x1x1x1xf32> to vector<1x1xf32>
    %5 = vector.shape_cast %4 : vector<1x1xf32> to vector<1x1x1xf32>
    %6 = vector.broadcast %5 : vector<1x1x1xf32> to vector<8x100x100xf32>
    %7 = arith.mulf %2, %6 : vector<8x100x100xf32>
    %c0_8 = arith.constant 0 : index
    %c1 = arith.constant 1 : index
    %c0_9 = arith.constant 0 : index
    %c0_10 = arith.constant 0 : index
    %c0_11 = arith.constant 0 : index
    %8 = vector.load %arg3[%c0_8, %c1, %c0_9, %c0_10, %c0_11] : memref<1x6x8x100x100xf32, #tpu.memory_space<vmem>>, vector<1x1x8x100x100xf32>
    %9 = vector.shape_cast %8 : vector<1x1x8x100x100xf32> to vector<8x100x100xf32>
    %10 = math.tanh %9 : vector<8x100x100xf32>
    %c0_12 = arith.constant 0 : index
    %c1_13 = arith.constant 1 : index
    %c0_14 = arith.constant 0 : index
    %c0_15 = arith.constant 0 : index
    %11 = vector.load %arg2[%c0_12, %c1_13, %c0_14, %c0_15] : memref<1x6x1x1xf32, #tpu.memory_space<vmem>>, vector<1x1x1x1xf32>
    %12 = vector.shape_cast %11 : vector<1x1x1x1xf32> to vector<1x1xf32>
    %13 = vector.shape_cast %12 : vector<1x1xf32> to vector<1x1x1xf32>
    %14 = vector.broadcast %13 : vector<1x1x1xf32> to vector<8x100x100xf32>
    %15 = arith.mulf %10, %14 : vector<8x100x100xf32>
    %16 = arith.addf %7, %15 : vector<8x100x100xf32>
    %c0_16 = arith.constant 0 : index
    %c2 = arith.constant 2 : index
    %c0_17 = arith.constant 0 : index
    %c0_18 = arith.constant 0 : index
    %c0_19 = arith.constant 0 : index
    %17 = vector.load %arg3[%c0_16, %c2, %c0_17, %c0_18, %c0_19] : memref<1x6x8x100x100xf32, #tpu.memory_space<vmem>>, vector<1x1x8x100x100xf32>
    %18 = vector.shape_cast %17 : vector<1x1x8x100x100xf32> to vector<8x100x100xf32>
    %19 = math.tanh %18 : vector<8x100x100xf32>
    %c0_20 = arith.constant 0 : index
    %c2_21 = arith.constant 2 : index
    %c0_22 = arith.constant 0 : index
    %c0_23 = arith.constant 0 : index
    %20 = vector.load %arg2[%c0_20, %c2_21, %c0_22, %c0_23] : memref<1x6x1x1xf32, #tpu.memory_space<vmem>>, vector<1x1x1x1xf32>
    %21 = vector.shape_cast %20 : vector<1x1x1x1xf32> to vector<1x1xf32>
    %22 = vector.shape_cast %21 : vector<1x1xf32> to vector<1x1x1xf32>
    %23 = vector.broadcast %22 : vector<1x1x1xf32> to vector<8x100x100xf32>
    %24 = arith.mulf %19, %23 : vector<8x100x100xf32>
    %25 = arith.addf %16, %24 : vector<8x100x100xf32>
    %c0_24 = arith.constant 0 : index
    %c3 = arith.constant 3 : index
    %c0_25 = arith.constant 0 : index
    %c0_26 = arith.constant 0 : index
    %c0_27 = arith.constant 0 : index
    %26 = vector.load %arg3[%c0_24, %c3, %c0_25, %c0_26, %c0_27] : memref<1x6x8x100x100xf32, #tpu.memory_space<vmem>>, vector<1x1x8x100x100xf32>
    %27 = vector.shape_cast %26 : vector<1x1x8x100x100xf32> to vector<8x100x100xf32>
    %28 = math.tanh %27 : vector<8x100x100xf32>
    %c0_28 = arith.constant 0 : index
    %c3_29 = arith.constant 3 : index
    %c0_30 = arith.constant 0 : index
    %c0_31 = arith.constant 0 : index
    %29 = vector.load %arg2[%c0_28, %c3_29, %c0_30, %c0_31] : memref<1x6x1x1xf32, #tpu.memory_space<vmem>>, vector<1x1x1x1xf32>
    %30 = vector.shape_cast %29 : vector<1x1x1x1xf32> to vector<1x1xf32>
    %31 = vector.shape_cast %30 : vector<1x1xf32> to vector<1x1x1xf32>
    %32 = vector.broadcast %31 : vector<1x1x1xf32> to vector<8x100x100xf32>
    %33 = arith.mulf %28, %32 : vector<8x100x100xf32>
    %34 = arith.addf %25, %33 : vector<8x100x100xf32>
    %c0_32 = arith.constant 0 : index
    %c4 = arith.constant 4 : index
    %c0_33 = arith.constant 0 : index
    %c0_34 = arith.constant 0 : index
    %c0_35 = arith.constant 0 : index
    %35 = vector.load %arg3[%c0_32, %c4, %c0_33, %c0_34, %c0_35] : memref<1x6x8x100x100xf32, #tpu.memory_space<vmem>>, vector<1x1x8x100x100xf32>
    %36 = vector.shape_cast %35 : vector<1x1x8x100x100xf32> to vector<8x100x100xf32>
    %37 = math.tanh %36 : vector<8x100x100xf32>
    %c0_36 = arith.constant 0 : index
    %c4_37 = arith.constant 4 : index
    %c0_38 = arith.constant 0 : index
    %c0_39 = arith.constant 0 : index
    %38 = vector.load %arg2[%c0_36, %c4_37, %c0_38, %c0_39] : memref<1x6x1x1xf32, #tpu.memory_space<vmem>>, vector<1x1x1x1xf32>
    %39 = vector.shape_cast %38 : vector<1x1x1x1xf32> to vector<1x1xf32>
    %40 = vector.shape_cast %39 : vector<1x1xf32> to vector<1x1x1xf32>
    %41 = vector.broadcast %40 : vector<1x1x1xf32> to vector<8x100x100xf32>
    %42 = arith.mulf %37, %41 : vector<8x100x100xf32>
    %43 = arith.addf %34, %42 : vector<8x100x100xf32>
    %c0_40 = arith.constant 0 : index
    %c5 = arith.constant 5 : index
    %c0_41 = arith.constant 0 : index
    %c0_42 = arith.constant 0 : index
    %c0_43 = arith.constant 0 : index
    %44 = vector.load %arg3[%c0_40, %c5, %c0_41, %c0_42, %c0_43] : memref<1x6x8x100x100xf32, #tpu.memory_space<vmem>>, vector<1x1x8x100x100xf32>
    %45 = vector.shape_cast %44 : vector<1x1x8x100x100xf32> to vector<8x100x100xf32>
    %46 = math.tanh %45 : vector<8x100x100xf32>
    %c0_44 = arith.constant 0 : index
    %c5_45 = arith.constant 5 : index
    %c0_46 = arith.constant 0 : index
    %c0_47 = arith.constant 0 : index
    %47 = vector.load %arg2[%c0_44, %c5_45, %c0_46, %c0_47] : memref<1x6x1x1xf32, #tpu.memory_space<vmem>>, vector<1x1x1x1xf32>
    %48 = vector.shape_cast %47 : vector<1x1x1x1xf32> to vector<1x1xf32>
    %49 = vector.shape_cast %48 : vector<1x1xf32> to vector<1x1x1xf32>
    %50 = vector.broadcast %49 : vector<1x1x1xf32> to vector<8x100x100xf32>
    %51 = arith.mulf %46, %50 : vector<8x100x100xf32>
    %52 = arith.addf %43, %51 : vector<8x100x100xf32>
    %cst = arith.constant dense<0xFF800000> : vector<8x100xf32>
    %53 = vector.multi_reduction <maximumf>, %52, %cst [2] : vector<8x100x100xf32> to vector<8x100xf32>
    %54 = vector.shape_cast %53 : vector<8x100xf32> to vector<8x100x1xf32>
    %cst_48 = arith.constant dense<0xFF800000> : vector<8x1xf32>
    %55 = vector.multi_reduction <maximumf>, %54, %cst_48 [1] : vector<8x100x1xf32> to vector<8x1xf32>
    %56 = vector.shape_cast %55 : vector<8x1xf32> to vector<8x1x1xf32>
    %57 = vector.broadcast %56 : vector<8x1x1xf32> to vector<8x100x100xf32>
    %58 = arith.subf %52, %57 : vector<8x100x100xf32>
    %59 = math.exp %58 : vector<8x100x100xf32>
    %cst_49 = arith.constant dense<0.000000e+00> : vector<8x100xf32>
    %60 = vector.multi_reduction <add>, %59, %cst_49 [2] : vector<8x100x100xf32> to vector<8x100xf32>
    %61 = vector.shape_cast %60 : vector<8x100xf32> to vector<8x100x1xf32>
    %cst_50 = arith.constant dense<0.000000e+00> : vector<8x1xf32>
    %62 = vector.multi_reduction <add>, %61, %cst_50 [1] : vector<8x100x1xf32> to vector<8x1xf32>
    %63 = vector.shape_cast %62 : vector<8x1xf32> to vector<8x1x1xf32>
    %c0_51 = arith.constant 0 : index
    %c0_52 = arith.constant 0 : index
    %64 = vector.load %arg4[%c0_51, %c0_52] : memref<100x100xf32, #tpu.memory_space<vmem>>, vector<100x100xf32>
    %65 = vector.shape_cast %64 : vector<100x100xf32> to vector<1x100x100xf32>
    %66 = vector.broadcast %65 : vector<1x100x100xf32> to vector<8x100x100xf32>
    %67 = arith.mulf %59, %66 : vector<8x100x100xf32>
    %cst_53 = arith.constant dense<0.000000e+00> : vector<8x100xf32>
    %68 = vector.multi_reduction <add>, %67, %cst_53 [2] : vector<8x100x100xf32> to vector<8x100xf32>
    %69 = vector.shape_cast %68 : vector<8x100xf32> to vector<8x100x1xf32>
    %cst_54 = arith.constant dense<0.000000e+00> : vector<8x1xf32>
    %70 = vector.multi_reduction <add>, %69, %cst_54 [1] : vector<8x100x1xf32> to vector<8x1xf32>
    %71 = vector.shape_cast %70 : vector<8x1xf32> to vector<8x1x1xf32>
    %c0_55 = arith.constant 0 : index
    %c0_56 = arith.constant 0 : index
    %72 = vector.load %arg5[%c0_55, %c0_56] : memref<100x100xf32, #tpu.memory_space<vmem>>, vector<100x100xf32>
    %73 = vector.shape_cast %72 : vector<100x100xf32> to vector<1x100x100xf32>
    %74 = vector.broadcast %73 : vector<1x100x100xf32> to vector<8x100x100xf32>
    %75 = arith.mulf %59, %74 : vector<8x100x100xf32>
    %cst_57 = arith.constant dense<0.000000e+00> : vector<8x100xf32>
    %76 = vector.multi_reduction <add>, %75, %cst_57 [2] : vector<8x100x100xf32> to vector<8x100xf32>
    %77 = vector.shape_cast %76 : vector<8x100xf32> to vector<8x100x1xf32>
    %cst_58 = arith.constant dense<0.000000e+00> : vector<8x1xf32>
    %78 = vector.multi_reduction <add>, %77, %cst_58 [1] : vector<8x100x1xf32> to vector<8x1xf32>
    %79 = vector.shape_cast %78 : vector<8x1xf32> to vector<8x1x1xf32>
    %cst_59 = arith.constant 1.000000e+00 : f32
    %80 = vector.broadcast %cst_59 : f32 to vector<8x1x1xf32>
    %81 = arith.divf %80, %63 : vector<8x1x1xf32>
    %82 = arith.mulf %71, %81 : vector<8x1x1xf32>
    %cst_60 = arith.constant 1.200000e+01 : f32
    %83 = vector.broadcast %cst_60 : f32 to vector<8x1x1xf32>
    %84 = arith.mulf %82, %83 : vector<8x1x1xf32>
    %85 = arith.mulf %79, %81 : vector<8x1x1xf32>
    %cst_61 = arith.constant 1.000000e+00 : f32
    %86 = vector.broadcast %cst_61 : f32 to vector<8x1x1xf32>
    %87 = arith.subf %85, %86 : vector<8x1x1xf32>
    %cst_62 = arith.constant 1.200000e+01 : f32
    %88 = vector.broadcast %cst_62 : f32 to vector<8x1x1xf32>
    %89 = arith.mulf %87, %88 : vector<8x1x1xf32>
    %90 = vector.shape_cast %84 : vector<8x1x1xf32> to vector<8x1xf32>
    %c0_63 = arith.constant 0 : index
    %c0_64 = arith.constant 0 : index
    %c0_65 = arith.constant 0 : index
    %91 = vector.load %arg6[%c0_63, %c0_64, %c0_65] : memref<1x8x2xf32, #tpu.memory_space<vmem>>, vector<1x8x1xf32>
    %92 = vector.shape_cast %91 : vector<1x8x1xf32> to vector<8x1xf32>
    %93 = vector.shape_cast %90 : vector<8x1xf32> to vector<1x8x1xf32>
    tpu.vector_store %arg6[%c0_63, %c0_64, %c0_65], %93 {strides = array<i32>} : memref<1x8x2xf32, #tpu.memory_space<vmem>>, vector<1x8x1xf32>,
    %94 = vector.shape_cast %89 : vector<8x1x1xf32> to vector<8x1xf32>
    %c0_66 = arith.constant 0 : index
    %c0_67 = arith.constant 0 : index
    %c1_68 = arith.constant 1 : index
    %95 = vector.load %arg6[%c0_66, %c0_67, %c1_68] : memref<1x8x2xf32, #tpu.memory_space<vmem>>, vector<1x8x1xf32>
    %96 = vector.shape_cast %95 : vector<1x8x1xf32> to vector<8x1xf32>
    %97 = vector.shape_cast %94 : vector<8x1xf32> to vector<1x8x1xf32>
    tpu.vector_store %arg6[%c0_66, %c0_67, %c1_68], %97 {strides = array<i32>} : memref<1x8x2xf32, #tpu.memory_space<vmem>>, vector<1x8x1xf32>,
    return
  }
  func.func @transform_0(%arg0: i32, %arg1: i32) -> (i32, i32, i32, i32) {
    %c0_i32 = arith.constant 0 : i32
    %c0_i32_0 = arith.constant 0 : i32
    %c0_i32_1 = arith.constant 0 : i32
    %c0_i32_2 = arith.constant 0 : i32
    return %arg0, %c0_i32, %c0_i32_0, %c0_i32_1 : i32, i32, i32, i32
  }
  func.func @transform_1(%arg0: i32, %arg1: i32) -> (i32, i32, i32, i32, i32) {
    %c0_i32 = arith.constant 0 : i32
    %c0_i32_0 = arith.constant 0 : i32
    %c0_i32_1 = arith.constant 0 : i32
    %c0_i32_2 = arith.constant 0 : i32
    return %arg0, %c0_i32, %arg1, %c0_i32_0, %c0_i32_1 : i32, i32, i32, i32, i32
  }
  func.func @transform_2(%arg0: i32, %arg1: i32) -> (i32, i32) {
    %c0_i32 = arith.constant 0 : i32
    %c0_i32_0 = arith.constant 0 : i32
    %c0_i32_1 = arith.constant 0 : i32
    return %c0_i32, %c0_i32_0 : i32, i32
  }
  func.func @transform_3(%arg0: i32, %arg1: i32) -> (i32, i32) {
    %c0_i32 = arith.constant 0 : i32
    %c0_i32_0 = arith.constant 0 : i32
    %c0_i32_1 = arith.constant 0 : i32
    return %c0_i32, %c0_i32_0 : i32, i32
  }
  func.func @transform_4(%arg0: i32, %arg1: i32) -> (i32, i32, i32) {
    %c0_i32 = arith.constant 0 : i32
    %c0_i32_0 = arith.constant 0 : i32
    return %arg0, %arg1, %c0_i32 : i32, i32, i32
  }
}

</mosaic_0001>

<llo_original>
// kernel: multipath_generator_forward.1
$region0: #{multipath_generator_forward.1}
  #allocation0 [shape = 'u32[]', space=smem, size = 0x4, offset = 0x4, fixed_abs, tag = 'smem constant byte address 0x4 - core index']
  #allocation1 [shape = 'u32[144,128]{1,0:T(1,128)}', space=vmem, size = 0x12000, scoped, tag = 'internal scratch']
  %s0 = inlined_call_operand.vmem [shape: f32[2,6,1,1], index: 0, kind: input, shape index: {}]
  %s1 = inlined_call_operand.vmem [shape: f32[2,6,8,100,100], index: 1, kind: input, shape index: {}]
  %s2 = inlined_call_operand.vmem [shape: f32[100,100], index: 2, kind: input, shape index: {}]
  %s3 = inlined_call_operand.vmem [shape: f32[100,100], index: 3, kind: input, shape index: {}]
  %s4 = inlined_call_operand.vmem [shape: f32[2,8,2], index: 4, kind: output, shape index: {}]
  %s5 = sld [smem:[#allocation0]]
  $region49: #{multipath_generator_forward.1} parent=0
    _
  %s7 = ssub.s32 1, %s5
  %s8 = scalar_select 0, %s7, %s5
  loop: start=0, step=1, limit=4
  $region2: #{multipath_generator_forward.1} parent=0 // loop_pre_header
    _
  $region3: #{multipath_generator_forward.1} parent=0 // loop_header
    %s10 = sphi 0, %s14
    %p11 = scmp.ge.s32.totalorder %s10, 4
    %s17 = sphi 0, %s29
    %s18 = sphi 0, %s25
    %s19 = sphi 0, %s17
    %s20 = sphi 0, %s18
    %s21 = sphi 0, %s19
    %s22 = sphi 0, %s20
    %s32 = sphi 0, %s34
    %s35 = sphi 0, %s32
    %s36 = sphi 0, %s35
    %s52 = sphi 0, %s36
    %s60 = sphi 0, %s62
    %s63 = sphi 0, %s60
    %s64 = sphi 0, %s63
    %s80 = sphi 0, %s64
    %s84 = sphi 0, %s84
    %s86 = sphi 0, %s84
    %s87 = sphi 0, %s86
    %s101 = sphi 0, %s87
    %s105 = sphi 0, %s105
    %s107 = sphi 0, %s105
    %s108 = sphi 0, %s107
    %s122 = sphi 0, %s108
    %s130 = sphi 0, %s132
    %s133 = sphi 0, %s130
    %s134 = sphi 0, %s133
    %s150 = sphi 0, %s134
  $region4: #{multipath_generator_forward.1} parent=0 // loop_header_branch
    %13 = sbr.rel (%p11) target = $region8
  $region5: #{multipath_generator_forward.1} parent=0 // loop_body
    %s15 = ssub.s32 %s10, 1
    %s16 = ssub.s32 %s10, 2
    %s23 = sadd.s32 1, %s18
    %p24 = scmp.ge.s32.totalorder %s23, 1
    %s25 = scalar_select %p24, 0, %s23
    %s26 = sadd.s32 1, %s17
    %s27 = scalar_select %p24, %s26, %s17
    %p28 = scmp.ge.s32.totalorder %s27, 2
    %s29 = scalar_select %p28, 0, %s27
    %s30 = ssub.s32 %s17, %s29
    %p31 = scmp.eq.s32.totalorder %s30, 0
    %s33 = sadd.s32 %s32, 1
    %s34 = scalar_select %p31, %s32, %s33
    %p37 = pneg %p31
    %p38 = scmp.eq.s32.totalorder %s10, 1
    %p39 = por %p37, %p38
    %p40 = scmp.ne.s32.totalorder %s32, %s35
    %p41 = scmp.eq.s32.totalorder %s10, 0
    %p42 = por %p40, %p41
    %p43 = scmp.ne.s32.totalorder %s32, %s35
    %p44 = scmp.eq.s32.totalorder %s15, 1
    %p45 = por %p43, %p44
    %p46 = scmp.ne.s32.totalorder %s35, %s36
    %p47 = scmp.eq.s32.totalorder %s15, 0
    %p48 = por %p46, %p47
    %p49 = scmp.ne.s32.totalorder %s35, %s36
    %p50 = scmp.eq.s32.totalorder %s16, 1
    %p51 = por %p49, %p50
    %p53 = scmp.ne.s32.totalorder %s36, %s52
    %p54 = scmp.eq.s32.totalorder %s16, 0
    %p55 = por %p53, %p54
    %s56 = ssub.s32 %s17, %s29
    %s57 = ssub.s32 %s18, %s25
    %s58 = sor.u32 %s56, %s57
    %p59 = scmp.eq.s32.totalorder %s58, 0
    %s61 = sadd.s32 %s60, 1
    %s62 = scalar_select %p59, %s60, %s61
    %p65 = pneg %p59
    %p66 = scmp.eq.s32.totalorder %s10, 1
    %p67 = por %p65, %p66
    %p68 = scmp.ne.s32.totalorder %s60, %s63
    %p69 = scmp.eq.s32.totalorder %s10, 0
    %p70 = por %p68, %p69
    %p71 = scmp.ne.s32.totalorder %s60, %s63
    %p72 = scmp.eq.s32.totalorder %s15, 1
    %p73 = por %p71, %p72
    %p74 = scmp.ne.s32.totalorder %s63, %s64
    %p75 = scmp.eq.s32.totalorder %s15, 0
    %p76 = por %p74, %p75
    %p77 = scmp.ne.s32.totalorder %s63, %s64
    %p78 = scmp.eq.s32.totalorder %s16, 1
    %p79 = por %p77, %p78
    %p81 = scmp.ne.s32.totalorder %s64, %s80
    %p82 = scmp.eq.s32.totalorder %s16, 0
    %p83 = por %p81, %p82
    %s85 = sadd.s32 %s84, 1
    %p88 = scmp.eq.s32.totalorder %s10, 1
    %p89 = scmp.ne.s32.totalorder %s84, %s86
    %p90 = scmp.eq.s32.totalorder %s10, 0
    %p91 = por %p89, %p90
    %p92 = scmp.ne.s32.totalorder %s84, %s86
    %p93 = scmp.eq.s32.totalorder %s15, 1
    %p94 = por %p92, %p93
    %p95 = scmp.ne.s32.totalorder %s86, %s87
    %p96 = scmp.eq.s32.totalorder %s15, 0
    %p97 = por %p95, %p96
    %p98 = scmp.ne.s32.totalorder %s86, %s87
    %p99 = scmp.eq.s32.totalorder %s16, 1
    %p100 = por %p98, %p99
    %p102 = scmp.ne.s32.totalorder %s87, %s101
    %p103 = scmp.eq.s32.totalorder %s16, 0
    %p104 = por %p102, %p103
    %s106 = sadd.s32 %s105, 1
    %p109 = scmp.eq.s32.totalorder %s10, 1
    %p110 = scmp.ne.s32.totalorder %s105, %s107
    %p111 = scmp.eq.s32.totalorder %s10, 0
    %p112 = por %p110, %p111
    %p113 = scmp.ne.s32.totalorder %s105, %s107
    %p114 = scmp.eq.s32.totalorder %s15, 1
    %p115 = por %p113, %p114
    %p116 = scmp.ne.s32.totalorder %s107, %s108
    %p117 = scmp.eq.s32.totalorder %s15, 0
    %p118 = por %p116, %p117
    %p119 = scmp.ne.s32.totalorder %s107, %s108
    %p120 = scmp.eq.s32.totalorder %s16, 1
    %p121 = por %p119, %p120
    %p123 = scmp.ne.s32.totalorder %s108, %s122
    %p124 = scmp.eq.s32.totalorder %s16, 0
    %p125 = por %p123, %p124
    %s126 = ssub.s32 %s17, %s29
    %s127 = ssub.s32 %s18, %s25
    %s128 = sor.u32 %s126, %s127
    %p129 = scmp.eq.s32.totalorder %s128, 0
    %s131 = sadd.s32 %s130, 1
    %s132 = scalar_select %p129, %s130, %s131
    %p135 = pneg %p129
    %p136 = scmp.eq.s32.totalorder %s10, 1
    %p137 = por %p135, %p136
    %p138 = scmp.ne.s32.totalorder %s130, %s133
    %p139 = scmp.eq.s32.totalorder %s10, 0
    %p140 = por %p138, %p139
    %p141 = scmp.ne.s32.totalorder %s130, %s133
    %p142 = scmp.eq.s32.totalorder %s15, 1
    %p143 = por %p141, %p142
    %p144 = scmp.ne.s32.totalorder %s133, %s134
    %p145 = scmp.eq.s32.totalorder %s15, 0
    %p146 = por %p144, %p145
    %p147 = scmp.ne.s32.totalorder %s133, %s134
    %p148 = scmp.eq.s32.totalorder %s16, 1
    %p149 = por %p147, %p148
    %p151 = scmp.ne.s32.totalorder %s134, %s150
    %p152 = scmp.eq.s32.totalorder %s16, 0
    %p153 = por %p151, %p152
    %p154 = scmp.le.s32.totalorder 1, %s10
    %p155 = scmp.lt.s32.totalorder %s10, 3
    %p156 = pnand %p154, %p155
    %p157 = pneg %p156
    // Predicated region
    $region9: #{multipath_generator_forward.1} parent=5 // pred_check
      _
    $region10: #{multipath_generator_forward.1} parent=5 // pred_check_branch
      %159 = sbr.rel (%p156) target = $region12
    $region11: #{multipath_generator_forward.1} parent=5 // pred_region
      %s160 = ssub.s32 %s10, 1
      // Predicated region
      $region13: #{multipath_generator_forward.1} parent=11 // pred_check
        %p161 = pneg %p97
      $region14: #{multipath_generator_forward.1} parent=11 // pred_check_branch
        %163 = sbr.rel (%p161) target = $region16
      $region15: #{multipath_generator_forward.1} parent=11 // pred_region
        _
      $region16: #{multipath_generator_forward.1} parent=11 // pred_fallthru
        _
      // Predicated region
      $region17: #{multipath_generator_forward.1} parent=11 // pred_check
        %p164 = pneg %p118
      $region18: #{multipath_generator_forward.1} parent=11 // pred_check_branch
        %166 = sbr.rel (%p164) target = $region20
      $region19: #{multipath_generator_forward.1} parent=11 // pred_region
        _
      $region20: #{multipath_generator_forward.1} parent=11 // pred_fallthru
        _
    $region12: #{multipath_generator_forward.1} parent=5 // pred_fallthru
      _
    %p167 = scmp.lt.s32.totalorder %s10, 2
    // Predicated region
    $region21: #{multipath_generator_forward.1} parent=5 // pred_check
      %p168 = pneg %p167
    $region22: #{multipath_generator_forward.1} parent=5 // pred_check_branch
      %170 = sbr.rel (%p168) target = $region24
    $region23: #{multipath_generator_forward.1} parent=5 // pred_region
      // Predicated region
      $region25: #{multipath_generator_forward.1} parent=23 // pred_check
        %p171 = pneg %p42
      $region26: #{multipath_generator_forward.1} parent=23 // pred_check_branch
        %173 = sbr.rel (%p171) target = $region28
      $region27: #{multipath_generator_forward.1} parent=23 // pred_region
        %p174 = scmp.lt.s32.totalorder %s17, 1
        %s175 = scalar_select %p174, %s17, 1
        %s176 = smul.addr %s175, 6
        %s177 = scalar_lea.vmem %s0, %s176
      $region28: #{multipath_generator_forward.1} parent=23 // pred_fallthru
        _
      // Predicated region
      $region29: #{multipath_generator_forward.1} parent=23 // pred_check
        %p178 = pneg %p70
      $region30: #{multipath_generator_forward.1} parent=23 // pred_check_branch
        %180 = sbr.rel (%p178) target = $region32
      $region31: #{multipath_generator_forward.1} parent=23 // pred_region
        %s181 = smul.u32 8, %s18
        %p182 = scmp.lt.s32.totalorder %s17, 1
        %s183 = scalar_select %p182, %s17, 1
        %p184 = scmp.lt.s32.totalorder %s181, 7
        %s185 = scalar_select %p184, %s181, 7
        %s186 = smul.addr %s185, 13
        %s187 = smul.addr %s183, 624
        %s188 = sadd.s32 %s186, %s187
        %s189 = smul.addr %s188, 8
        %s190 = scalar_lea.vmem %s1, %s189
        %s191 = smul.u32 8, %s18
      $region32: #{multipath_generator_forward.1} parent=23 // pred_fallthru
        _
    $region24: #{multipath_generator_forward.1} parent=5 // pred_fallthru
      _
    %p192 = scmp.le.s32.totalorder 1, %s10
    %p193 = scmp.lt.s32.totalorder %s10, 3
    %p194 = pnand %p192, %p193
    %p195 = pneg %p194
    // Predicated region
    $region33: #{multipath_generator_forward.1} parent=5 // pred_check
      _
    $region34: #{multipath_generator_forward.1} parent=5 // pred_check_branch
      %197 = sbr.rel (%p194) target = $region36
    $region35: #{multipath_generator_forward.1} parent=5 // pred_region
      %s198 = ssub.s32 %s10, 1
      %p199 = scmp.lt.s32.totalorder %s19, 1
      %s200 = scalar_select %p199, %s19, 1
      %s201 = smul.addr %s200, 6
      %s202 = scalar_lea.vmem %s0, %s201
      %p203 = pneg %p48
      %p204 = pneg %p45
      %s205 = smul.u32 8, %s20
      %p206 = scmp.lt.s32.totalorder %s19, 1
      %s207 = scalar_select %p206, %s19, 1
      %p208 = scmp.lt.s32.totalorder %s205, 7
      %s209 = scalar_select %p208, %s205, 7
      %s210 = smul.addr %s209, 13
      %s211 = smul.addr %s207, 624
      %s212 = sadd.s32 %s210, %s211
      %s213 = smul.addr %s212, 8
      %s214 = scalar_lea.vmem %s1, %s213
      %p215 = pneg %p76
      %p216 = pneg %p73
      %p217 = pneg %p97
      %p218 = pneg %p94
      %p219 = pneg %p118
      %p220 = pneg %p115
      %p221 = pneg %p146
      %p222 = pneg %p143
      %p223 = scmp.lt.s32.totalorder %s19, 1
      %s224 = scalar_select %p223, %s19, 1
      %p225 = scmp.lt.s32.totalorder %s20, 0
      %s226 = scalar_select %p225, %s20, 0
      %s227 = sadd.s32 %s226, %s224
      %s228 = smul.addr %s227, 8
      %s229 = scalar_lea.vmem %s4, %s228
      %p230 = scmp.lt.s32.totalorder %s19, 1
      %s231 = scalar_select %p230, %s19, 1
      %s232 = smul.addr %s231, 6
      %s233 = scalar_lea.vmem %s0, %s232
      %s234 = smul.u32 8, %s20
      %p235 = scmp.lt.s32.totalorder %s19, 1
      %s236 = scalar_select %p235, %s19, 1
      %p237 = scmp.lt.s32.totalorder %s234, 7
      %s238 = scalar_select %p237, %s234, 7
      %s239 = smul.addr %s238, 13
      %s240 = smul.addr %s236, 624
      %s241 = sadd.s32 %s239, %s240
      %s242 = smul.addr %s241, 8
      %s243 = scalar_lea.vmem %s1, %s242
      %s244 = smul.u32 8, %s20
      %p245 = scmp.lt.s32.totalorder %s19, 1
      %s246 = scalar_select %p245, %s19, 1
      %p247 = scmp.lt.s32.totalorder %s20, 0
      %s248 = scalar_select %p247, %s20, 0
      %s249 = sadd.s32 %s248, %s246
      %s250 = smul.addr %s249, 8
      %s251 = scalar_lea.vmem %s4, %s250
      %v252 = vld [vmem:[%s243] sm:$0xff]
      %v253 = vld [vmem:[%s243 + $0x8] sm:$0xff]
      %v254 = vld [vmem:[%s243 + $0x10] sm:$0xff]
      %v255 = vld [vmem:[%s243 + $0x18] sm:$0xff]
      %v256 = vld [vmem:[%s243 + $0x20] sm:$0xff]
      %v257 = vld [vmem:[%s243 + $0x28] sm:$0xff]
      %v258 = vld [vmem:[%s243 + $0x30] sm:$0xff]
      %v259 = vld [vmem:[%s243 + $0x38] sm:$0xff]
      %v260 = vld [vmem:[%s243 + $0x40] sm:$0xff]
      %v261 = vld [vmem:[%s243 + $0x48] sm:$0xff]
      %v262 = vld [vmem:[%s243 + $0x50] sm:$0xff]
      %v263 = vld [vmem:[%s243 + $0x58] sm:$0xff]
      %v264 = vld [vmem:[%s243 + $0x60] sm:$0xf]
      %v265 = vld [vmem:[%s243 + $0x68] sm:$0xff]
      %v266 = vld [vmem:[%s243 + $0x70] sm:$0xff]
      %v267 = vld [vmem:[%s243 + $0x78] sm:$0xff]
      %v268 = vld [vmem:[%s243 + $0x80] sm:$0xff]
      %v269 = vld [vmem:[%s243 + $0x88] sm:$0xff]
      %v270 = vld [vmem:[%s243 + $0x90] sm:$0xff]
      %v271 = vld [vmem:[%s243 + $0x98] sm:$0xff]
      %v272 = vld [vmem:[%s243 + $0xa0] sm:$0xff]
      %v273 = vld [vmem:[%s243 + $0xa8] sm:$0xff]
      %v274 = vld [vmem:[%s243 + $0xb0] sm:$0xff]
      %v275 = vld [vmem:[%s243 + $0xb8] sm:$0xff]
      %v276 = vld [vmem:[%s243 + $0xc0] sm:$0xff]
      %v277 = vld [vmem:[%s243 + $0xc8] sm:$0xf]
      %v278 = vld [vmem:[%s243 + $0xd0] sm:$0xff]
      %v279 = vld [vmem:[%s243 + $0xd8] sm:$0xff]
      %v280 = vld [vmem:[%s243 + $0xe0] sm:$0xff]
      %v281 = vld [vmem:[%s243 + $0xe8] sm:$0xff]
      %v282 = vld [vmem:[%s243 + $0xf0] sm:$0xff]
      %v283 = vld [vmem:[%s243 + $0xf8] sm:$0xff]
      %v284 = vld [vmem:[%s243 + $0x100] sm:$0xff]
      %v285 = vld [vmem:[%s243 + $0x108] sm:$0xff]
      %v286 = vld [vmem:[%s243 + $0x110] sm:$0xff]
      %v287 = vld [vmem:[%s243 + $0x118] sm:$0xff]
      %v288 = vld [vmem:[%s243 + $0x120] sm:$0xff]
      %v289 = vld [vmem:[%s243 + $0x128] sm:$0xff]
      %v290 = vld [vmem:[%s243 + $0x130] sm:$0xf]
      %v291 = vld [vmem:[%s243 + $0x138] sm:$0xff]
      %v292 = vld [vmem:[%s243 + $0x140] sm:$0xff]
      %v293 = vld [vmem:[%s243 + $0x148] sm:$0xff]
      %v294 = vld [vmem:[%s243 + $0x150] sm:$0xff]
      %v295 = vld [vmem:[%s243 + $0x158] sm:$0xff]
      %v296 = vld [vmem:[%s243 + $0x160] sm:$0xff]
      %v297 = vld [vmem:[%s243 + $0x168] sm:$0xff]
      %v298 = vld [vmem:[%s243 + $0x170] sm:$0xff]
      %v299 = vld [vmem:[%s243 + $0x178] sm:$0xff]
      %v300 = vld [vmem:[%s243 + $0x180] sm:$0xff]
      %v301 = vld [vmem:[%s243 + $0x188] sm:$0xff]
      %v302 = vld [vmem:[%s243 + $0x190] sm:$0xff]
      %v303 = vld [vmem:[%s243 + $0x198] sm:$0xf]
      %v304 = vld [vmem:[%s243 + $0x1a0] sm:$0xff]
      %v305 = vld [vmem:[%s243 + $0x1a8] sm:$0xff]
      %v306 = vld [vmem:[%s243 + $0x1b0] sm:$0xff]
      %v307 = vld [vmem:[%s243 + $0x1b8] sm:$0xff]
      %v308 = vld [vmem:[%s243 + $0x1c0] sm:$0xff]
      %v309 = vld [vmem:[%s243 + $0x1c8] sm:$0xff]
      %v310 = vld [vmem:[%s243 + $0x1d0] sm:$0xff]
      %v311 = vld [vmem:[%s243 + $0x1d8] sm:$0xff]
      %v312 = vld [vmem:[%s243 + $0x1e0] sm:$0xff]
      %v313 = vld [vmem:[%s243 + $0x1e8] sm:$0xff]
      %v314 = vld [vmem:[%s243 + $0x1f0] sm:$0xff]
      %v315 = vld [vmem:[%s243 + $0x1f8] sm:$0xff]
      %v316 = vld [vmem:[%s243 + $0x200] sm:$0xf]
      %v317 = vld [vmem:[%s243 + $0x208] sm:$0xff]
      %v318 = vld [vmem:[%s243 + $0x210] sm:$0xff]
      %v319 = vld [vmem:[%s243 + $0x218] sm:$0xff]
      %v320 = vld [vmem:[%s243 + $0x220] sm:$0xff]
      %v321 = vld [vmem:[%s243 + $0x228] sm:$0xff]
      %v322 = vld [vmem:[%s243 + $0x230] sm:$0xff]
      %v323 = vld [vmem:[%s243 + $0x238] sm:$0xff]
      %v324 = vld [vmem:[%s243 + $0x240] sm:$0xff]
      %v325 = vld [vmem:[%s243 + $0x248] sm:$0xff]
      %v326 = vld [vmem:[%s243 + $0x250] sm:$0xff]
      %v327 = vld [vmem:[%s243 + $0x258] sm:$0xff]
      %v328 = vld [vmem:[%s243 + $0x260] sm:$0xff]
      %v329 = vld [vmem:[%s243 + $0x268] sm:$0xf]
      %v330 = vld [vmem:[%s243 + $0x270] sm:$0xff]
      %v331 = vld [vmem:[%s243 + $0x278] sm:$0xff]
      %v332 = vld [vmem:[%s243 + $0x280] sm:$0xff]
      %v333 = vld [vmem:[%s243 + $0x288] sm:$0xff]
      %v334 = vld [vmem:[%s243 + $0x290] sm:$0xff]
      %v335 = vld [vmem:[%s243 + $0x298] sm:$0xff]
      %v336 = vld [vmem:[%s243 + $0x2a0] sm:$0xff]
      %v337 = vld [vmem:[%s243 + $0x2a8] sm:$0xff]
      %v338 = vld [vmem:[%s243 + $0x2b0] sm:$0xff]
      %v339 = vld [vmem:[%s243 + $0x2b8] sm:$0xff]
      %v340 = vld [vmem:[%s243 + $0x2c0] sm:$0xff]
      %v341 = vld [vmem:[%s243 + $0x2c8] sm:$0xff]
      %v342 = vld [vmem:[%s243 + $0x2d0] sm:$0xf]
      %v343 = vld [vmem:[%s243 + $0x2d8] sm:$0xff]
      %v344 = vld [vmem:[%s243 + $0x2e0] sm:$0xff]
      %v345 = vld [vmem:[%s243 + $0x2e8] sm:$0xff]
      %v346 = vld [vmem:[%s243 + $0x2f0] sm:$0xff]
      %v347 = vld [vmem:[%s243 + $0x2f8] sm:$0xff]
      %v348 = vld [vmem:[%s243 + $0x300] sm:$0xff]
      %v349 = vld [vmem:[%s243 + $0x308] sm:$0xff]
      %v350 = vld [vmem:[%s243 + $0x310] sm:$0xff]
      %v351 = vld [vmem:[%s243 + $0x318] sm:$0xff]
      %v352 = vld [vmem:[%s243 + $0x320] sm:$0xff]
      %v353 = vld [vmem:[%s243 + $0x328] sm:$0xff]
      %v354 = vld [vmem:[%s243 + $0x330] sm:$0xff]
      %v355 = vld [vmem:[%s243 + $0x338] sm:$0xf]
      %v356 = vtanh.pop %v252
      %v357 = vtanh.pop %v253
      %v358 = vtanh.pop %v254
      %v359 = vtanh.pop %v255
      %v360 = vtanh.pop %v256
      %v361 = vtanh.pop %v257
      %v362 = vtanh.pop %v258
      %v363 = vtanh.pop %v259
      %v364 = vtanh.pop %v260
      %v365 = vtanh.pop %v261
      %v366 = vtanh.pop %v262
      %v367 = vtanh.pop %v263
      %v368 = vtanh.pop %v264
      %v369 = vtanh.pop %v265
      %v370 = vtanh.pop %v266
      %v371 = vtanh.pop %v267
      %v372 = vtanh.pop %v268
      %v373 = vtanh.pop %v269
      %v374 = vtanh.pop %v270
      %v375 = vtanh.pop %v271
      %v376 = vtanh.pop %v272
      %v377 = vtanh.pop %v273
      %v378 = vtanh.pop %v274
      %v379 = vtanh.pop %v275
      %v380 = vtanh.pop %v276
      %v381 = vtanh.pop %v277
      %v382 = vtanh.pop %v278
      %v383 = vtanh.pop %v279
      %v384 = vtanh.pop %v280
      %v385 = vtanh.pop %v281
      %v386 = vtanh.pop %v282
      %v387 = vtanh.pop %v283
      %v388 = vtanh.pop %v284
      %v389 = vtanh.pop %v285
      %v390 = vtanh.pop %v286
      %v391 = vtanh.pop %v287
      %v392 = vtanh.pop %v288
      %v393 = vtanh.pop %v289
      %v394 = vtanh.pop %v290
      %v395 = vtanh.pop %v291
      %v396 = vtanh.pop %v292
      %v397 = vtanh.pop %v293
      %v398 = vtanh.pop %v294
      %v399 = vtanh.pop %v295
      %v400 = vtanh.pop %v296
      %v401 = vtanh.pop %v297
      %v402 = vtanh.pop %v298
      %v403 = vtanh.pop %v299
      %v404 = vtanh.pop %v300
      %v405 = vtanh.pop %v301
      %v406 = vtanh.pop %v302
      %v407 = vtanh.pop %v303
      %v408 = vtanh.pop %v304
      %v409 = vtanh.pop %v305
      %v410 = vtanh.pop %v306
      %v411 = vtanh.pop %v307
      %v412 = vtanh.pop %v308
      %v413 = vtanh.pop %v309
      %v414 = vtanh.pop %v310
      %v415 = vtanh.pop %v311
      %v416 = vtanh.pop %v312
      %v417 = vtanh.pop %v313
      %v418 = vtanh.pop %v314
      %v419 = vtanh.pop %v315
      %v420 = vtanh.pop %v316
      %v421 = vtanh.pop %v317
      %v422 = vtanh.pop %v318
      %v423 = vtanh.pop %v319
      %v424 = vtanh.pop %v320
      %v425 = vtanh.pop %v321
      %v426 = vtanh.pop %v322
      %v427 = vtanh.pop %v323
      %v428 = vtanh.pop %v324
      %v429 = vtanh.pop %v325
      %v430 = vtanh.pop %v326
      %v431 = vtanh.pop %v327
      %v432 = vtanh.pop %v328
      %v433 = vtanh.pop %v329
      %v434 = vtanh.pop %v330
      %v435 = vtanh.pop %v331
      %v436 = vtanh.pop %v332
      %v437 = vtanh.pop %v333
      %v438 = vtanh.pop %v334
      %v439 = vtanh.pop %v335
      %v440 = vtanh.pop %v336
      %v441 = vtanh.pop %v337
      %v442 = vtanh.pop %v338
      %v443 = vtanh.pop %v339
      %v444 = vtanh.pop %v340
      %v445 = vtanh.pop %v341
      %v446 = vtanh.pop %v342
      %v447 = vtanh.pop %v343
      %v448 = vtanh.pop %v344
      %v449 = vtanh.pop %v345
      %v450 = vtanh.pop %v346
      %v451 = vtanh.pop %v347
      %v452 = vtanh.pop %v348
      %v453 = vtanh.pop %v349
      %v454 = vtanh.pop %v350
      %v455 = vtanh.pop %v351
      %v456 = vtanh.pop %v352
      %v457 = vtanh.pop %v353
      %v458 = vtanh.pop %v354
      %v459 = vtanh.pop %v355
      %v460 = vld [vmem:[%s233] sm:$0x1]
      %v462 = vlaneseq
      %v463 = vshrl.u32 %v462, 7
      %v464 = vsub.s32 0, %v463
      %v465 = vrot.slane %v460, %v464
      %466 = vset.pattern.permute.xlu0 0
      %467 = vperm.xlu0 %466, %v465
      %v468 = vpop.permute.xlu0 %467
      %v470 = vmul.f32 %v356, %v468
      %v471 = vmul.f32 %v357, %v468
      %v472 = vmul.f32 %v358, %v468
      %v473 = vmul.f32 %v359, %v468
      %v474 = vmul.f32 %v360, %v468
      %v475 = vmul.f32 %v361, %v468
      %v476 = vmul.f32 %v362, %v468
      %v477 = vmul.f32 %v363, %v468
      %v478 = vmul.f32 %v364, %v468
      %v479 = vmul.f32 %v365, %v468
      %v480 = vmul.f32 %v366, %v468
      %v481 = vmul.f32 %v367, %v468
      %v482 = vmul.f32 %v368, %v468
      %v483 = vmul.f32 %v369, %v468
      %v484 = vmul.f32 %v370, %v468
      %v485 = vmul.f32 %v371, %v468
      %v486 = vmul.f32 %v372, %v468
      %v487 = vmul.f32 %v373, %v468
      %v488 = vmul.f32 %v374, %v468
      %v489 = vmul.f32 %v375, %v468
      %v490 = vmul.f32 %v376, %v468
      %v491 = vmul.f32 %v377, %v468
      %v492 = vmul.f32 %v378, %v468
      %v493 = vmul.f32 %v379, %v468
      %v494 = vmul.f32 %v380, %v468
      %v495 = vmul.f32 %v381, %v468
      %v496 = vmul.f32 %v382, %v468
      %v497 = vmul.f32 %v383, %v468
      %v498 = vmul.f32 %v384, %v468
      %v499 = vmul.f32 %v385, %v468
      %v500 = vmul.f32 %v386, %v468
      %v501 = vmul.f32 %v387, %v468
      %v502 = vmul.f32 %v388, %v468
      %v503 = vmul.f32 %v389, %v468
      %v504 = vmul.f32 %v390, %v468
      %v505 = vmul.f32 %v391, %v468
      %v506 = vmul.f32 %v392, %v468
      %v507 = vmul.f32 %v393, %v468
      %v508 = vmul.f32 %v394, %v468
      %v509 = vmul.f32 %v395, %v468
      %v510 = vmul.f32 %v396, %v468
      %v511 = vmul.f32 %v397, %v468
      %v512 = vmul.f32 %v398, %v468
      %v513 = vmul.f32 %v399, %v468
      %v514 = vmul.f32 %v400, %v468
      %v515 = vmul.f32 %v401, %v468
      %v516 = vmul.f32 %v402, %v468
      %v517 = vmul.f32 %v403, %v468
      %v518 = vmul.f32 %v404, %v468
      %v519 = vmul.f32 %v405, %v468
      %v520 = vmul.f32 %v406, %v468
      %v521 = vmul.f32 %v407, %v468
      %v522 = vmul.f32 %v408, %v468
      %v523 = vmul.f32 %v409, %v468
      %v524 = vmul.f32 %v410, %v468
      %v525 = vmul.f32 %v411, %v468
      %v526 = vmul.f32 %v412, %v468
      %v527 = vmul.f32 %v413, %v468
      %v528 = vmul.f32 %v414, %v468
      %v529 = vmul.f32 %v415, %v468
      %v530 = vmul.f32 %v416, %v468
      %v531 = vmul.f32 %v417, %v468
      %v532 = vmul.f32 %v418, %v468
      %v533 = vmul.f32 %v419, %v468
      %v534 = vmul.f32 %v420, %v468
      %v535 = vmul.f32 %v421, %v468
      %v536 = vmul.f32 %v422, %v468
      %v537 = vmul.f32 %v423, %v468
      %v538 = vmul.f32 %v424, %v468
      %v539 = vmul.f32 %v425, %v468
      %v540 = vmul.f32 %v426, %v468
      %v541 = vmul.f32 %v427, %v468
      %v542 = vmul.f32 %v428, %v468
      %v543 = vmul.f32 %v429, %v468
      %v544 = vmul.f32 %v430, %v468
      %v545 = vmul.f32 %v431, %v468
      %v546 = vmul.f32 %v432, %v468
      %v547 = vmul.f32 %v433, %v468
      %v548 = vmul.f32 %v434, %v468
      %v549 = vmul.f32 %v435, %v468
      %v550 = vmul.f32 %v436, %v468
      %v551 = vmul.f32 %v437, %v468
      %v552 = vmul.f32 %v438, %v468
      %v553 = vmul.f32 %v439, %v468
      %v554 = vmul.f32 %v440, %v468
      %v555 = vmul.f32 %v441, %v468
      %v556 = vmul.f32 %v442, %v468
      %v557 = vmul.f32 %v443, %v468
      %v558 = vmul.f32 %v444, %v468
      %v559 = vmul.f32 %v445, %v468
      %v560 = vmul.f32 %v446, %v468
      %v561 = vmul.f32 %v447, %v468
      %v562 = vmul.f32 %v448, %v468
      %v563 = vmul.f32 %v449, %v468
      %v564 = vmul.f32 %v450, %v468
      %v565 = vmul.f32 %v451, %v468
      %v566 = vmul.f32 %v452, %v468
      %v567 = vmul.f32 %v453, %v468
      %v568 = vmul.f32 %v454, %v468
      %v569 = vmul.f32 %v455, %v468
      %v570 = vmul.f32 %v456, %v468
      %v571 = vmul.f32 %v457, %v468
      %v572 = vmul.f32 %v458, %v468
      %v573 = vmul.f32 %v459, %v468
      %s574 = scalar_lea.vmem %s243, 832
      %v575 = vld [vmem:[%s574] sm:$0xff]
      %v576 = vld [vmem:[%s574 + $0x8] sm:$0xff]
      %v577 = vld [vmem:[%s574 + $0x10] sm:$0xff]
      %v578 = vld [vmem:[%s574 + $0x18] sm:$0xff]
      %v579 = vld [vmem:[%s574 + $0x20] sm:$0xff]
      %v580 = vld [vmem:[%s574 + $0x28] sm:$0xff]
      %v581 = vld [vmem:[%s574 + $0x30] sm:$0xff]
      %v582 = vld [vmem:[%s574 + $0x38] sm:$0xff]
      %v583 = vld [vmem:[%s574 + $0x40] sm:$0xff]
      %v584 = vld [vmem:[%s574 + $0x48] sm:$0xff]
      %v585 = vld [vmem:[%s574 + $0x50] sm:$0xff]
      %v586 = vld [vmem:[%s574 + $0x58] sm:$0xff]
      %v587 = vld [vmem:[%s574 + $0x60] sm:$0xf]
      %v588 = vld [vmem:[%s574 + $0x68] sm:$0xff]
      %v589 = vld [vmem:[%s574 + $0x70] sm:$0xff]
      %v590 = vld [vmem:[%s574 + $0x78] sm:$0xff]
      %v591 = vld [vmem:[%s574 + $0x80] sm:$0xff]
      %v592 = vld [vmem:[%s574 + $0x88] sm:$0xff]
      %v593 = vld [vmem:[%s574 + $0x90] sm:$0xff]
      %v594 = vld [vmem:[%s574 + $0x98] sm:$0xff]
      %v595 = vld [vmem:[%s574 + $0xa0] sm:$0xff]
      %v596 = vld [vmem:[%s574 + $0xa8] sm:$0xff]
      %v597 = vld [vmem:[%s574 + $0xb0] sm:$0xff]
      %v598 = vld [vmem:[%s574 + $0xb8] sm:$0xff]
      %v599 = vld [vmem:[%s574 + $0xc0] sm:$0xff]
      %v600 = vld [vmem:[%s574 + $0xc8] sm:$0xf]
      %v601 = vld [vmem:[%s574 + $0xd0] sm:$0xff]
      %v602 = vld [vmem:[%s574 + $0xd8] sm:$0xff]
      %v603 = vld [vmem:[%s574 + $0xe0] sm:$0xff]
      %v604 = vld [vmem:[%s574 + $0xe8] sm:$0xff]
      %v605 = vld [vmem:[%s574 + $0xf0] sm:$0xff]
      %v606 = vld [vmem:[%s574 + $0xf8] sm:$0xff]
      %v607 = vld [vmem:[%s574 + $0x100] sm:$0xff]
      %v608 = vld [vmem:[%s574 + $0x108] sm:$0xff]
      %v609 = vld [vmem:[%s574 + $0x110] sm:$0xff]
      %v610 = vld [vmem:[%s574 + $0x118] sm:$0xff]
      %v611 = vld [vmem:[%s574 + $0x120] sm:$0xff]
      %v612 = vld [vmem:[%s574 + $0x128] sm:$0xff]
      %v613 = vld [vmem:[%s574 + $0x130] sm:$0xf]
      %v614 = vld [vmem:[%s574 + $0x138] sm:$0xff]
      %v615 = vld [vmem:[%s574 + $0x140] sm:$0xff]
      %v616 = vld [vmem:[%s574 + $0x148] sm:$0xff]
      %v617 = vld [vmem:[%s574 + $0x150] sm:$0xff]
      %v618 = vld [vmem:[%s574 + $0x158] sm:$0xff]
      %v619 = vld [vmem:[%s574 + $0x160] sm:$0xff]
      %v620 = vld [vmem:[%s574 + $0x168] sm:$0xff]
      %v621 = vld [vmem:[%s574 + $0x170] sm:$0xff]
      %v622 = vld [vmem:[%s574 + $0x178] sm:$0xff]
      %v623 = vld [vmem:[%s574 + $0x180] sm:$0xff]
      %v624 = vld [vmem:[%s574 + $0x188] sm:$0xff]
      %v625 = vld [vmem:[%s574 + $0x190] sm:$0xff]
      %v626 = vld [vmem:[%s574 + $0x198] sm:$0xf]
      %v627 = vld [vmem:[%s574 + $0x1a0] sm:$0xff]
      %v628 = vld [vmem:[%s574 + $0x1a8] sm:$0xff]
      %v629 = vld [vmem:[%s574 + $0x1b0] sm:$0xff]
      %v630 = vld [vmem:[%s574 + $0x1b8] sm:$0xff]
      %v631 = vld [vmem:[%s574 + $0x1c0] sm:$0xff]
      %v632 = vld [vmem:[%s574 + $0x1c8] sm:$0xff]
      %v633 = vld [vmem:[%s574 + $0x1d0] sm:$0xff]
      %v634 = vld [vmem:[%s574 + $0x1d8] sm:$0xff]
      %v635 = vld [vmem:[%s574 + $0x1e0] sm:$0xff]
      %v636 = vld [vmem:[%s574 + $0x1e8] sm:$0xff]
      %v637 = vld [vmem:[%s574 + $0x1f0] sm:$0xff]
      %v638 = vld [vmem:[%s574 + $0x1f8] sm:$0xff]
      %v639 = vld [vmem:[%s574 + $0x200] sm:$0xf]
      %v640 = vld [vmem:[%s574 + $0x208] sm:$0xff]
      %v641 = vld [vmem:[%s574 + $0x210] sm:$0xff]
      %v642 = vld [vmem:[%s574 + $0x218] sm:$0xff]
      %v643 = vld [vmem:[%s574 + $0x220] sm:$0xff]
      %v644 = vld [vmem:[%s574 + $0x228] sm:$0xff]
      %v645 = vld [vmem:[%s574 + $0x230] sm:$0xff]
      %v646 = vld [vmem:[%s574 + $0x238] sm:$0xff]
      %v647 = vld [vmem:[%s574 + $0x240] sm:$0xff]
      %v648 = vld [vmem:[%s574 + $0x248] sm:$0xff]
      %v649 = vld [vmem:[%s574 + $0x250] sm:$0xff]
      %v650 = vld [vmem:[%s574 + $0x258] sm:$0xff]
      %v651 = vld [vmem:[%s574 + $0x260] sm:$0xff]
      %v652 = vld [vmem:[%s574 + $0x268] sm:$0xf]
      %v653 = vld [vmem:[%s574 + $0x270] sm:$0xff]
      %v654 = vld [vmem:[%s574 + $0x278] sm:$0xff]
      %v655 = vld [vmem:[%s574 + $0x280] sm:$0xff]
      %v656 = vld [vmem:[%s574 + $0x288] sm:$0xff]
      %v657 = vld [vmem:[%s574 + $0x290] sm:$0xff]
      %v658 = vld [vmem:[%s574 + $0x298] sm:$0xff]
      %v659 = vld [vmem:[%s574 + $0x2a0] sm:$0xff]
      %v660 = vld [vmem:[%s574 + $0x2a8] sm:$0xff]
      %v661 = vld [vmem:[%s574 + $0x2b0] sm:$0xff]
      %v662 = vld [vmem:[%s574 + $0x2b8] sm:$0xff]
      %v663 = vld [vmem:[%s574 + $0x2c0] sm:$0xff]
      %v664 = vld [vmem:[%s574 + $0x2c8] sm:$0xff]
      %v665 = vld [vmem:[%s574 + $0x2d0] sm:$0xf]
      %v666 = vld [vmem:[%s574 + $0x2d8] sm:$0xff]
      %v667 = vld [vmem:[%s574 + $0x2e0] sm:$0xff]
      %v668 = vld [vmem:[%s574 + $0x2e8] sm:$0xff]
      %v669 = vld [vmem:[%s574 + $0x2f0] sm:$0xff]
      %v670 = vld [vmem:[%s574 + $0x2f8] sm:$0xff]
      %v671 = vld [vmem:[%s574 + $0x300] sm:$0xff]
      %v672 = vld [vmem:[%s574 + $0x308] sm:$0xff]
      %v673 = vld [vmem:[%s574 + $0x310] sm:$0xff]
      %v674 = vld [vmem:[%s574 + $0x318] sm:$0xff]
      %v675 = vld [vmem:[%s574 + $0x320] sm:$0xff]
      %v676 = vld [vmem:[%s574 + $0x328] sm:$0xff]
      %v677 = vld [vmem:[%s574 + $0x330] sm:$0xff]
      %v678 = vld [vmem:[%s574 + $0x338] sm:$0xf]
      %v679 = vtanh.pop %v575
      %v680 = vtanh.pop %v576
      %v681 = vtanh.pop %v577
      %v682 = vtanh.pop %v578
      %v683 = vtanh.pop %v579
      %v684 = vtanh.pop %v580
      %v685 = vtanh.pop %v581
      %v686 = vtanh.pop %v582
      %v687 = vtanh.pop %v583
      %v688 = vtanh.pop %v584
      %v689 = vtanh.pop %v585
      %v690 = vtanh.pop %v586
      %v691 = vtanh.pop %v587
      %v692 = vtanh.pop %v588
      %v693 = vtanh.pop %v589
      %v694 = vtanh.pop %v590
      %v695 = vtanh.pop %v591
      %v696 = vtanh.pop %v592
      %v697 = vtanh.pop %v593
      %v698 = vtanh.pop %v594
      %v699 = vtanh.pop %v595
      %v700 = vtanh.pop %v596
      %v701 = vtanh.pop %v597
      %v702 = vtanh.pop %v598
      %v703 = vtanh.pop %v599
      %v704 = vtanh.pop %v600
      %v705 = vtanh.pop %v601
      %v706 = vtanh.pop %v602
      %v707 = vtanh.pop %v603
      %v708 = vtanh.pop %v604
      %v709 = vtanh.pop %v605
      %v710 = vtanh.pop %v606
      %v711 = vtanh.pop %v607
      %v712 = vtanh.pop %v608
      %v713 = vtanh.pop %v609
      %v714 = vtanh.pop %v610
      %v715 = vtanh.pop %v611
      %v716 = vtanh.pop %v612
      %v717 = vtanh.pop %v613
      %v718 = vtanh.pop %v614
      %v719 = vtanh.pop %v615
      %v720 = vtanh.pop %v616
      %v721 = vtanh.pop %v617
      %v722 = vtanh.pop %v618
      %v723 = vtanh.pop %v619
      %v724 = vtanh.pop %v620
      %v725 = vtanh.pop %v621
      %v726 = vtanh.pop %v622
      %v727 = vtanh.pop %v623
      %v728 = vtanh.pop %v624
      %v729 = vtanh.pop %v625
      %v730 = vtanh.pop %v626
      %v731 = vtanh.pop %v627
      %v732 = vtanh.pop %v628
      %v733 = vtanh.pop %v629
      %v734 = vtanh.pop %v630
      %v735 = vtanh.pop %v631
      %v736 = vtanh.pop %v632
      %v737 = vtanh.pop %v633
      %v738 = vtanh.pop %v634
      %v739 = vtanh.pop %v635
      %v740 = vtanh.pop %v636
      %v741 = vtanh.pop %v637
      %v742 = vtanh.pop %v638
      %v743 = vtanh.pop %v639
      %v744 = vtanh.pop %v640
      %v745 = vtanh.pop %v641
      %v746 = vtanh.pop %v642
      %v747 = vtanh.pop %v643
      %v748 = vtanh.pop %v644
      %v749 = vtanh.pop %v645
      %v750 = vtanh.pop %v646
      %v751 = vtanh.pop %v647
      %v752 = vtanh.pop %v648
      %v753 = vtanh.pop %v649
      %v754 = vtanh.pop %v650
      %v755 = vtanh.pop %v651
      %v756 = vtanh.pop %v652
      %v757 = vtanh.pop %v653
      %v758 = vtanh.pop %v654
      %v759 = vtanh.pop %v655
      %v760 = vtanh.pop %v656
      %v761 = vtanh.pop %v657
      %v762 = vtanh.pop %v658
      %v763 = vtanh.pop %v659
      %v764 = vtanh.pop %v660
      %v765 = vtanh.pop %v661
      %v766 = vtanh.pop %v662
      %v767 = vtanh.pop %v663
      %v768 = vtanh.pop %v664
      %v769 = vtanh.pop %v665
      %v770 = vtanh.pop %v666
      %v771 = vtanh.pop %v667
      %v772 = vtanh.pop %v668
      %v773 = vtanh.pop %v669
      %v774 = vtanh.pop %v670
      %v775 = vtanh.pop %v671
      %v776 = vtanh.pop %v672
      %v777 = vtanh.pop %v673
      %v778 = vtanh.pop %v674
      %v779 = vtanh.pop %v675
      %v780 = vtanh.pop %v676
      %v781 = vtanh.pop %v677
      %v782 = vtanh.pop %v678
      %s783 = scalar_lea.vmem %s233, 1
      %v784 = vld [vmem:[%s783] sm:$0x1]
      %v786 = vlaneseq
      %v787 = vshrl.u32 %v786, 7
      %v788 = vsub.s32 0, %v787
      %v789 = vrot.slane %v784, %v788
      %790 = vset.pattern.permute.xlu0 0
      %791 = vperm.xlu0 %790, %v789
      %v792 = vpop.permute.xlu0 %791
      %v794 = vmul.f32 %v679, %v792
      %v795 = vmul.f32 %v680, %v792
      %v796 = vmul.f32 %v681, %v792
      %v797 = vmul.f32 %v682, %v792
      %v798 = vmul.f32 %v683, %v792
      %v799 = vmul.f32 %v684, %v792
      %v800 = vmul.f32 %v685, %v792
      %v801 = vmul.f32 %v686, %v792
      %v802 = vmul.f32 %v687, %v792
      %v803 = vmul.f32 %v688, %v792
      %v804 = vmul.f32 %v689, %v792
      %v805 = vmul.f32 %v690, %v792
      %v806 = vmul.f32 %v691, %v792
      %v807 = vmul.f32 %v692, %v792
      %v808 = vmul.f32 %v693, %v792
      %v809 = vmul.f32 %v694, %v792
      %v810 = vmul.f32 %v695, %v792
      %v811 = vmul.f32 %v696, %v792
      %v812 = vmul.f32 %v697, %v792
      %v813 = vmul.f32 %v698, %v792
      %v814 = vmul.f32 %v699, %v792
      %v815 = vmul.f32 %v700, %v792
      %v816 = vmul.f32 %v701, %v792
      %v817 = vmul.f32 %v702, %v792
      %v818 = vmul.f32 %v703, %v792
      %v819 = vmul.f32 %v704, %v792
      %v820 = vmul.f32 %v705, %v792
      %v821 = vmul.f32 %v706, %v792
      %v822 = vmul.f32 %v707, %v792
      %v823 = vmul.f32 %v708, %v792
      %v824 = vmul.f32 %v709, %v792
      %v825 = vmul.f32 %v710, %v792
      %v826 = vmul.f32 %v711, %v792
      %v827 = vmul.f32 %v712, %v792
      %v828 = vmul.f32 %v713, %v792
      %v829 = vmul.f32 %v714, %v792
      %v830 = vmul.f32 %v715, %v792
      %v831 = vmul.f32 %v716, %v792
      %v832 = vmul.f32 %v717, %v792
      %v833 = vmul.f32 %v718, %v792
      %v834 = vmul.f32 %v719, %v792
      %v835 = vmul.f32 %v720, %v792
      %v836 = vmul.f32 %v721, %v792
      %v837 = vmul.f32 %v722, %v792
      %v838 = vmul.f32 %v723, %v792
      %v839 = vmul.f32 %v724, %v792
      %v840 = vmul.f32 %v725, %v792
      %v841 = vmul.f32 %v726, %v792
      %v842 = vmul.f32 %v727, %v792
      %v843 = vmul.f32 %v728, %v792
      %v844 = vmul.f32 %v729, %v792
      %v845 = vmul.f32 %v730, %v792
      %v846 = vmul.f32 %v731, %v792
      %v847 = vmul.f32 %v732, %v792
      %v848 = vmul.f32 %v733, %v792
      %v849 = vmul.f32 %v734, %v792
      %v850 = vmul.f32 %v735, %v792
      %v851 = vmul.f32 %v736, %v792
      %v852 = vmul.f32 %v737, %v792
      %v853 = vmul.f32 %v738, %v792
      %v854 = vmul.f32 %v739, %v792
      %v855 = vmul.f32 %v740, %v792
      %v856 = vmul.f32 %v741, %v792
      %v857 = vmul.f32 %v742, %v792
      %v858 = vmul.f32 %v743, %v792
      %v859 = vmul.f32 %v744, %v792
      %v860 = vmul.f32 %v745, %v792
      %v861 = vmul.f32 %v746, %v792
      %v862 = vmul.f32 %v747, %v792
      %v863 = vmul.f32 %v748, %v792
      %v864 = vmul.f32 %v749, %v792
      %v865 = vmul.f32 %v750, %v792
      %v866 = vmul.f32 %v751, %v792
      %v867 = vmul.f32 %v752, %v792
      %v868 = vmul.f32 %v753, %v792
      %v869 = vmul.f32 %v754, %v792
      %v870 = vmul.f32 %v755, %v792
      %v871 = vmul.f32 %v756, %v792
      %v872 = vmul.f32 %v757, %v792
      %v873 = vmul.f32 %v758, %v792
      %v874 = vmul.f32 %v759, %v792
      %v875 = vmul.f32 %v760, %v792
      %v876 = vmul.f32 %v761, %v792
      %v877 = vmul.f32 %v762, %v792
      %v878 = vmul.f32 %v763, %v792
      %v879 = vmul.f32 %v764, %v792
      %v880 = vmul.f32 %v765, %v792
      %v881 = vmul.f32 %v766, %v792
      %v882 = vmul.f32 %v767, %v792
      %v883 = vmul.f32 %v768, %v792
      %v884 = vmul.f32 %v769, %v792
      %v885 = vmul.f32 %v770, %v792
      %v886 = vmul.f32 %v771, %v792
      %v887 = vmul.f32 %v772, %v792
      %v888 = vmul.f32 %v773, %v792
      %v889 = vmul.f32 %v774, %v792
      %v890 = vmul.f32 %v775, %v792
      %v891 = vmul.f32 %v776, %v792
      %v892 = vmul.f32 %v777, %v792
      %v893 = vmul.f32 %v778, %v792
      %v894 = vmul.f32 %v779, %v792
      %v895 = vmul.f32 %v780, %v792
      %v896 = vmul.f32 %v781, %v792
      %v897 = vmul.f32 %v782, %v792
      %v898 = vadd.f32 %v470, %v794
      %v899 = vadd.f32 %v471, %v795
      %v900 = vadd.f32 %v472, %v796
      %v901 = vadd.f32 %v473, %v797
      %v902 = vadd.f32 %v474, %v798
      %v903 = vadd.f32 %v475, %v799
      %v904 = vadd.f32 %v476, %v800
      %v905 = vadd.f32 %v477, %v801
      %v906 = vadd.f32 %v478, %v802
      %v907 = vadd.f32 %v479, %v803
      %v908 = vadd.f32 %v480, %v804
      %v909 = vadd.f32 %v481, %v805
      %v910 = vadd.f32 %v482, %v806
      %v911 = vadd.f32 %v483, %v807
      %v912 = vadd.f32 %v484, %v808
      %v913 = vadd.f32 %v485, %v809
      %v914 = vadd.f32 %v486, %v810
      %v915 = vadd.f32 %v487, %v811
      %v916 = vadd.f32 %v488, %v812
      %v917 = vadd.f32 %v489, %v813
      %v918 = vadd.f32 %v490, %v814
      %v919 = vadd.f32 %v491, %v815
      %v920 = vadd.f32 %v492, %v816
      %v921 = vadd.f32 %v493, %v817
      %v922 = vadd.f32 %v494, %v818
      %v923 = vadd.f32 %v495, %v819
      %v924 = vadd.f32 %v496, %v820
      %v925 = vadd.f32 %v497, %v821
      %v926 = vadd.f32 %v498, %v822
      %v927 = vadd.f32 %v499, %v823
      %v928 = vadd.f32 %v500, %v824
      %v929 = vadd.f32 %v501, %v825
      %v930 = vadd.f32 %v502, %v826
      %v931 = vadd.f32 %v503, %v827
      %v932 = vadd.f32 %v504, %v828
      %v933 = vadd.f32 %v505, %v829
      %v934 = vadd.f32 %v506, %v830
      %v935 = vadd.f32 %v507, %v831
      %v936 = vadd.f32 %v508, %v832
      %v937 = vadd.f32 %v509, %v833
      %v938 = vadd.f32 %v510, %v834
      %v939 = vadd.f32 %v511, %v835
      %v940 = vadd.f32 %v512, %v836
      %v941 = vadd.f32 %v513, %v837
      %v942 = vadd.f32 %v514, %v838
      %v943 = vadd.f32 %v515, %v839
      %v944 = vadd.f32 %v516, %v840
      %v945 = vadd.f32 %v517, %v841
      %v946 = vadd.f32 %v518, %v842
      %v947 = vadd.f32 %v519, %v843
      %v948 = vadd.f32 %v520, %v844
      %v949 = vadd.f32 %v521, %v845
      %v950 = vadd.f32 %v522, %v846
      %v951 = vadd.f32 %v523, %v847
      %v952 = vadd.f32 %v524, %v848
      %v953 = vadd.f32 %v525, %v849
      %v954 = vadd.f32 %v526, %v850
      %v955 = vadd.f32 %v527, %v851
      %v956 = vadd.f32 %v528, %v852
      %v957 = vadd.f32 %v529, %v853
      %v958 = vadd.f32 %v530, %v854
      %v959 = vadd.f32 %v531, %v855
      %v960 = vadd.f32 %v532, %v856
      %v961 = vadd.f32 %v533, %v857
      %v962 = vadd.f32 %v534, %v858
      %v963 = vadd.f32 %v535, %v859
      %v964 = vadd.f32 %v536, %v860
      %v965 = vadd.f32 %v537, %v861
      %v966 = vadd.f32 %v538, %v862
      %v967 = vadd.f32 %v539, %v863
      %v968 = vadd.f32 %v540, %v864
      %v969 = vadd.f32 %v541, %v865
      %v970 = vadd.f32 %v542, %v866
      %v971 = vadd.f32 %v543, %v867
      %v972 = vadd.f32 %v544, %v868
      %v973 = vadd.f32 %v545, %v869
      %v974 = vadd.f32 %v546, %v870
      %v975 = vadd.f32 %v547, %v871
      %v976 = vadd.f32 %v548, %v872
      %v977 = vadd.f32 %v549, %v873
      %v978 = vadd.f32 %v550, %v874
      %v979 = vadd.f32 %v551, %v875
      %v980 = vadd.f32 %v552, %v876
      %v981 = vadd.f32 %v553, %v877
      %v982 = vadd.f32 %v554, %v878
      %v983 = vadd.f32 %v555, %v879
      %v984 = vadd.f32 %v556, %v880
      %v985 = vadd.f32 %v557, %v881
      %v986 = vadd.f32 %v558, %v882
      %v987 = vadd.f32 %v559, %v883
      %v988 = vadd.f32 %v560, %v884
      %v989 = vadd.f32 %v561, %v885
      %v990 = vadd.f32 %v562, %v886
      %v991 = vadd.f32 %v563, %v887
      %v992 = vadd.f32 %v564, %v888
      %v993 = vadd.f32 %v565, %v889
      %v994 = vadd.f32 %v566, %v890
      %v995 = vadd.f32 %v567, %v891
      %v996 = vadd.f32 %v568, %v892
      %v997 = vadd.f32 %v569, %v893
      %v998 = vadd.f32 %v570, %v894
      %v999 = vadd.f32 %v571, %v895
      %v1000 = vadd.f32 %v572, %v896
      %v1001 = vadd.f32 %v573, %v897
      %s1002 = scalar_lea.vmem %s243, 1664
      %v1003 = vld [vmem:[%s1002] sm:$0xff]
      %v1004 = vld [vmem:[%s1002 + $0x8] sm:$0xff]
      %v1005 = vld [vmem:[%s1002 + $0x10] sm:$0xff]
      %v1006 = vld [vmem:[%s1002 + $0x18] sm:$0xff]
      %v1007 = vld [vmem:[%s1002 + $0x20] sm:$0xff]
      %v1008 = vld [vmem:[%s1002 + $0x28] sm:$0xff]
      %v1009 = vld [vmem:[%s1002 + $0x30] sm:$0xff]
      %v1010 = vld [vmem:[%s1002 + $0x38] sm:$0xff]
      %v1011 = vld [vmem:[%s1002 + $0x40] sm:$0xff]
      %v1012 = vld [vmem:[%s1002 + $0x48] sm:$0xff]
      %v1013 = vld [vmem:[%s1002 + $0x50] sm:$0xff]
      %v1014 = vld [vmem:[%s1002 + $0x58] sm:$0xff]
      %v1015 = vld [vmem:[%s1002 + $0x60] sm:$0xf]
      %v1016 = vld [vmem:[%s1002 + $0x68] sm:$0xff]
      %v1017 = vld [vmem:[%s1002 + $0x70] sm:$0xff]
      %v1018 = vld [vmem:[%s1002 + $0x78] sm:$0xff]
      %v1019 = vld [vmem:[%s1002 + $0x80] sm:$0xff]
      %v1020 = vld [vmem:[%s1002 + $0x88] sm:$0xff]
      %v1021 = vld [vmem:[%s1002 + $0x90] sm:$0xff]
      %v1022 = vld [vmem:[%s1002 + $0x98] sm:$0xff]
      %v1023 = vld [vmem:[%s1002 + $0xa0] sm:$0xff]
      %v1024 = vld [vmem:[%s1002 + $0xa8] sm:$0xff]
      %v1025 = vld [vmem:[%s1002 + $0xb0] sm:$0xff]
      %v1026 = vld [vmem:[%s1002 + $0xb8] sm:$0xff]
      %v1027 = vld [vmem:[%s1002 + $0xc0] sm:$0xff]
      %v1028 = vld [vmem:[%s1002 + $0xc8] sm:$0xf]
      %v1029 = vld [vmem:[%s1002 + $0xd0] sm:$0xff]
      %v1030 = vld [vmem:[%s1002 + $0xd8] sm:$0xff]
      %v1031 = vld [vmem:[%s1002 + $0xe0] sm:$0xff]
      %v1032 = vld [vmem:[%s1002 + $0xe8] sm:$0xff]
      %v1033 = vld [vmem:[%s1002 + $0xf0] sm:$0xff]
      %v1034 = vld [vmem:[%s1002 + $0xf8] sm:$0xff]
      %v1035 = vld [vmem:[%s1002 + $0x100] sm:$0xff]
      %v1036 = vld [vmem:[%s1002 + $0x108] sm:$0xff]
      %v1037 = vld [vmem:[%s1002 + $0x110] sm:$0xff]
      %v1038 = vld [vmem:[%s1002 + $0x118] sm:$0xff]
      %v1039 = vld [vmem:[%s1002 + $0x120] sm:$0xff]
      %v1040 = vld [vmem:[%s1002 + $0x128] sm:$0xff]
      %v1041 = vld [vmem:[%s1002 + $0x130] sm:$0xf]
      %v1042 = vld [vmem:[%s1002 + $0x138] sm:$0xff]
      %v1043 = vld [vmem:[%s1002 + $0x140] sm:$0xff]
      %v1044 = vld [vmem:[%s1002 + $0x148] sm:$0xff]
      %v1045 = vld [vmem:[%s1002 + $0x150] sm:$0xff]
      %v1046 = vld [vmem:[%s1002 + $0x158] sm:$0xff]
      %v1047 = vld [vmem:[%s1002 + $0x160] sm:$0xff]
      %v1048 = vld [vmem:[%s1002 + $0x168] sm:$0xff]
      %v1049 = vld [vmem:[%s1002 + $0x170] sm:$0xff]
      %v1050 = vld [vmem:[%s1002 + $0x178] sm:$0xff]
      %v1051 = vld [vmem:[%s1002 + $0x180] sm:$0xff]
      %v1052 = vld [vmem:[%s1002 + $0x188] sm:$0xff]
      %v1053 = vld [vmem:[%s1002 + $0x190] sm:$0xff]
      %v1054 = vld [vmem:[%s1002 + $0x198] sm:$0xf]
      %v1055 = vld [vmem:[%s1002 + $0x1a0] sm:$0xff]
      %v1056 = vld [vmem:[%s1002 + $0x1a8] sm:$0xff]
      %v1057 = vld [vmem:[%s1002 + $0x1b0] sm:$0xff]
      %v1058 = vld [vmem:[%s1002 + $0x1b8] sm:$0xff]
      %v1059 = vld [vmem:[%s1002 + $0x1c0] sm:$0xff]
      %v1060 = vld [vmem:[%s1002 + $0x1c8] sm:$0xff]
      %v1061 = vld [vmem:[%s1002 + $0x1d0] sm:$0xff]
      %v1062 = vld [vmem:[%s1002 + $0x1d8] sm:$0xff]
      %v1063 = vld [vmem:[%s1002 + $0x1e0] sm:$0xff]
      %v1064 = vld [vmem:[%s1002 + $0x1e8] sm:$0xff]
      %v1065 = vld [vmem:[%s1002 + $0x1f0] sm:$0xff]
      %v1066 = vld [vmem:[%s1002 + $0x1f8] sm:$0xff]
      %v1067 = vld [vmem:[%s1002 + $0x200] sm:$0xf]
      %v1068 = vld [vmem:[%s1002 + $0x208] sm:$0xff]
      %v1069 = vld [vmem:[%s1002 + $0x210] sm:$0xff]
      %v1070 = vld [vmem:[%s1002 + $0x218] sm:$0xff]
      %v1071 = vld [vmem:[%s1002 + $0x220] sm:$0xff]
      %v1072 = vld [vmem:[%s1002 + $0x228] sm:$0xff]
      %v1073 = vld [vmem:[%s1002 + $0x230] sm:$0xff]
      %v1074 = vld [vmem:[%s1002 + $0x238] sm:$0xff]
      %v1075 = vld [vmem:[%s1002 + $0x240] sm:$0xff]
      %v1076 = vld [vmem:[%s1002 + $0x248] sm:$0xff]
      %v1077 = vld [vmem:[%s1002 + $0x250] sm:$0xff]
      %v1078 = vld [vmem:[%s1002 + $0x258] sm:$0xff]
      %v1079 = vld [vmem:[%s1002 + $0x260] sm:$0xff]
      %v1080 = vld [vmem:[%s1002 + $0x268] sm:$0xf]
      %v1081 = vld [vmem:[%s1002 + $0x270] sm:$0xff]
      %v1082 = vld [vmem:[%s1002 + $0x278] sm:$0xff]
      %v1083 = vld [vmem:[%s1002 + $0x280] sm:$0xff]
      %v1084 = vld [vmem:[%s1002 + $0x288] sm:$0xff]
      %v1085 = vld [vmem:[%s1002 + $0x290] sm:$0xff]
      %v1086 = vld [vmem:[%s1002 + $0x298] sm:$0xff]
      %v1087 = vld [vmem:[%s1002 + $0x2a0] sm:$0xff]
      %v1088 = vld [vmem:[%s1002 + $0x2a8] sm:$0xff]
      %v1089 = vld [vmem:[%s1002 + $0x2b0] sm:$0xff]
      %v1090 = vld [vmem:[%s1002 + $0x2b8] sm:$0xff]
      %v1091 = vld [vmem:[%s1002 + $0x2c0] sm:$0xff]
      %v1092 = vld [vmem:[%s1002 + $0x2c8] sm:$0xff]
      %v1093 = vld [vmem:[%s1002 + $0x2d0] sm:$0xf]
      %v1094 = vld [vmem:[%s1002 + $0x2d8] sm:$0xff]
      %v1095 = vld [vmem:[%s1002 + $0x2e0] sm:$0xff]
      %v1096 = vld [vmem:[%s1002 + $0x2e8] sm:$0xff]
      %v1097 = vld [vmem:[%s1002 + $0x2f0] sm:$0xff]
      %v1098 = vld [vmem:[%s1002 + $0x2f8] sm:$0xff]
      %v1099 = vld [vmem:[%s1002 + $0x300] sm:$0xff]
      %v1100 = vld [vmem:[%s1002 + $0x308] sm:$0xff]
      %v1101 = vld [vmem:[%s1002 + $0x310] sm:$0xff]
      %v1102 = vld [vmem:[%s1002 + $0x318] sm:$0xff]
      %v1103 = vld [vmem:[%s1002 + $0x320] sm:$0xff]
      %v1104 = vld [vmem:[%s1002 + $0x328] sm:$0xff]
      %v1105 = vld [vmem:[%s1002 + $0x330] sm:$0xff]
      %v1106 = vld [vmem:[%s1002 + $0x338] sm:$0xf]
      %v1107 = vtanh.pop %v1003
      %v1108 = vtanh.pop %v1004
      %v1109 = vtanh.pop %v1005
      %v1110 = vtanh.pop %v1006
      %v1111 = vtanh.pop %v1007
      %v1112 = vtanh.pop %v1008
      %v1113 = vtanh.pop %v1009
      %v1114 = vtanh.pop %v1010
      %v1115 = vtanh.pop %v1011
      %v1116 = vtanh.pop %v1012
      %v1117 = vtanh.pop %v1013
      %v1118 = vtanh.pop %v1014
      %v1119 = vtanh.pop %v1015
      %v1120 = vtanh.pop %v1016
      %v1121 = vtanh.pop %v1017
      %v1122 = vtanh.pop %v1018
      %v1123 = vtanh.pop %v1019
      %v1124 = vtanh.pop %v1020
      %v1125 = vtanh.pop %v1021
      %v1126 = vtanh.pop %v1022
      %v1127 = vtanh.pop %v1023
      %v1128 = vtanh.pop %v1024
      %v1129 = vtanh.pop %v1025
      %v1130 = vtanh.pop %v1026
      %v1131 = vtanh.pop %v1027
      %v1132 = vtanh.pop %v1028
      %v1133 = vtanh.pop %v1029
      %v1134 = vtanh.pop %v1030
      %v1135 = vtanh.pop %v1031
      %v1136 = vtanh.pop %v1032
      %v1137 = vtanh.pop %v1033
      %v1138 = vtanh.pop %v1034
      %v1139 = vtanh.pop %v1035
      %v1140 = vtanh.pop %v1036
      %v1141 = vtanh.pop %v1037
      %v1142 = vtanh.pop %v1038
      %v1143 = vtanh.pop %v1039
      %v1144 = vtanh.pop %v1040
      %v1145 = vtanh.pop %v1041
      %v1146 = vtanh.pop %v1042
      %v1147 = vtanh.pop %v1043
      %v1148 = vtanh.pop %v1044
      %v1149 = vtanh.pop %v1045
      %v1150 = vtanh.pop %v1046
      %v1151 = vtanh.pop %v1047
      %v1152 = vtanh.pop %v1048
      %v1153 = vtanh.pop %v1049
      %v1154 = vtanh.pop %v1050
      %v1155 = vtanh.pop %v1051
      %v1156 = vtanh.pop %v1052
      %v1157 = vtanh.pop %v1053
      %v1158 = vtanh.pop %v1054
      %v1159 = vtanh.pop %v1055
      %v1160 = vtanh.pop %v1056
      %v1161 = vtanh.pop %v1057
      %v1162 = vtanh.pop %v1058
      %v1163 = vtanh.pop %v1059
      %v1164 = vtanh.pop %v1060
      %v1165 = vtanh.pop %v1061
      %v1166 = vtanh.pop %v1062
      %v1167 = vtanh.pop %v1063
      %v1168 = vtanh.pop %v1064
      %v1169 = vtanh.pop %v1065
      %v1170 = vtanh.pop %v1066
      %v1171 = vtanh.pop %v1067
      %v1172 = vtanh.pop %v1068
      %v1173 = vtanh.pop %v1069
      %v1174 = vtanh.pop %v1070
      %v1175 = vtanh.pop %v1071
      %v1176 = vtanh.pop %v1072
      %v1177 = vtanh.pop %v1073
      %v1178 = vtanh.pop %v1074
      %v1179 = vtanh.pop %v1075
      %v1180 = vtanh.pop %v1076
      %v1181 = vtanh.pop %v1077
      %v1182 = vtanh.pop %v1078
      %v1183 = vtanh.pop %v1079
      %v1184 = vtanh.pop %v1080
      %v1185 = vtanh.pop %v1081
      %v1186 = vtanh.pop %v1082
      %v1187 = vtanh.pop %v1083
      %v1188 = vtanh.pop %v1084
      %v1189 = vtanh.pop %v1085
      %v1190 = vtanh.pop %v1086
      %v1191 = vtanh.pop %v1087
      %v1192 = vtanh.pop %v1088
      %v1193 = vtanh.pop %v1089
      %v1194 = vtanh.pop %v1090
      %v1195 = vtanh.pop %v1091
      %v1196 = vtanh.pop %v1092
      %v1197 = vtanh.pop %v1093
      %v1198 = vtanh.pop %v1094
      %v1199 = vtanh.pop %v1095
      %v1200 = vtanh.pop %v1096
      %v1201 = vtanh.pop %v1097
      %v1202 = vtanh.pop %v1098
      %v1203 = vtanh.pop %v1099
      %v1204 = vtanh.pop %v1100
      %v1205 = vtanh.pop %v1101
      %v1206 = vtanh.pop %v1102
      %v1207 = vtanh.pop %v1103
      %v1208 = vtanh.pop %v1104
      %v1209 = vtanh.pop %v1105
      %v1210 = vtanh.pop %v1106
      %s1211 = scalar_lea.vmem %s233, 2
      %v1212 = vld [vmem:[%s1211] sm:$0x1]
      %v1214 = vlaneseq
      %v1215 = vshrl.u32 %v1214, 7
      %v1216 = vsub.s32 0, %v1215
      %v1217 = vrot.slane %v1212, %v1216
      %1218 = vset.pattern.permute.xlu0 0
      %1219 = vperm.xlu0 %1218, %v1217
      %v1220 = vpop.permute.xlu0 %1219
      %v1222 = vmul.f32 %v1107, %v1220
      %v1223 = vmul.f32 %v1108, %v1220
      %v1224 = vmul.f32 %v1109, %v1220
      %v1225 = vmul.f32 %v1110, %v1220
      %v1226 = vmul.f32 %v1111, %v1220
      %v1227 = vmul.f32 %v1112, %v1220
      %v1228 = vmul.f32 %v1113, %v1220
      %v1229 = vmul.f32 %v1114, %v1220
      %v1230 = vmul.f32 %v1115, %v1220
      %v1231 = vmul.f32 %v1116, %v1220
      %v1232 = vmul.f32 %v1117, %v1220
      %v1233 = vmul.f32 %v1118, %v1220
      %v1234 = vmul.f32 %v1119, %v1220
      %v1235 = vmul.f32 %v1120, %v1220
      %v1236 = vmul.f32 %v1121, %v1220
      %v1237 = vmul.f32 %v1122, %v1220
      %v1238 = vmul.f32 %v1123, %v1220
      %v1239 = vmul.f32 %v1124, %v1220
      %v1240 = vmul.f32 %v1125, %v1220
      %v1241 = vmul.f32 %v1126, %v1220
      %v1242 = vmul.f32 %v1127, %v1220
      %v1243 = vmul.f32 %v1128, %v1220
      %v1244 = vmul.f32 %v1129, %v1220
      %v1245 = vmul.f32 %v1130, %v1220
      %v1246 = vmul.f32 %v1131, %v1220
      %v1247 = vmul.f32 %v1132, %v1220
      %v1248 = vmul.f32 %v1133, %v1220
      %v1249 = vmul.f32 %v1134, %v1220
      %v1250 = vmul.f32 %v1135, %v1220
      %v1251 = vmul.f32 %v1136, %v1220
      %v1252 = vmul.f32 %v1137, %v1220
      %v1253 = vmul.f32 %v1138, %v1220
      %v1254 = vmul.f32 %v1139, %v1220
      %v1255 = vmul.f32 %v1140, %v1220
      %v1256 = vmul.f32 %v1141, %v1220
      %v1257 = vmul.f32 %v1142, %v1220
      %v1258 = vmul.f32 %v1143, %v1220
      %v1259 = vmul.f32 %v1144, %v1220
      %v1260 = vmul.f32 %v1145, %v1220
      %v1261 = vmul.f32 %v1146, %v1220
      %v1262 = vmul.f32 %v1147, %v1220
      %v1263 = vmul.f32 %v1148, %v1220
      %v1264 = vmul.f32 %v1149, %v1220
      %v1265 = vmul.f32 %v1150, %v1220
      %v1266 = vmul.f32 %v1151, %v1220
      %v1267 = vmul.f32 %v1152, %v1220
      %v1268 = vmul.f32 %v1153, %v1220
      %v1269 = vmul.f32 %v1154, %v1220
      %v1270 = vmul.f32 %v1155, %v1220
      %v1271 = vmul.f32 %v1156, %v1220
      %v1272 = vmul.f32 %v1157, %v1220
      %v1273 = vmul.f32 %v1158, %v1220
      %v1274 = vmul.f32 %v1159, %v1220
      %v1275 = vmul.f32 %v1160, %v1220
      %v1276 = vmul.f32 %v1161, %v1220
      %v1277 = vmul.f32 %v1162, %v1220
      %v1278 = vmul.f32 %v1163, %v1220
      %v1279 = vmul.f32 %v1164, %v1220
      %v1280 = vmul.f32 %v1165, %v1220
      %v1281 = vmul.f32 %v1166, %v1220
      %v1282 = vmul.f32 %v1167, %v1220
      %v1283 = vmul.f32 %v1168, %v1220
      %v1284 = vmul.f32 %v1169, %v1220
      %v1285 = vmul.f32 %v1170, %v1220
      %v1286 = vmul.f32 %v1171, %v1220
      %v1287 = vmul.f32 %v1172, %v1220
      %v1288 = vmul.f32 %v1173, %v1220
      %v1289 = vmul.f32 %v1174, %v1220
      %v1290 = vmul.f32 %v1175, %v1220
      %v1291 = vmul.f32 %v1176, %v1220
      %v1292 = vmul.f32 %v1177, %v1220
      %v1293 = vmul.f32 %v1178, %v1220
      %v1294 = vmul.f32 %v1179, %v1220
      %v1295 = vmul.f32 %v1180, %v1220
      %v1296 = vmul.f32 %v1181, %v1220
      %v1297 = vmul.f32 %v1182, %v1220
      %v1298 = vmul.f32 %v1183, %v1220
      %v1299 = vmul.f32 %v1184, %v1220
      %v1300 = vmul.f32 %v1185, %v1220
      %v1301 = vmul.f32 %v1186, %v1220
      %v1302 = vmul.f32 %v1187, %v1220
      %v1303 = vmul.f32 %v1188, %v1220
      %v1304 = vmul.f32 %v1189, %v1220
      %v1305 = vmul.f32 %v1190, %v1220
      %v1306 = vmul.f32 %v1191, %v1220
      %v1307 = vmul.f32 %v1192, %v1220
      %v1308 = vmul.f32 %v1193, %v1220
      %v1309 = vmul.f32 %v1194, %v1220
      %v1310 = vmul.f32 %v1195, %v1220
      %v1311 = vmul.f32 %v1196, %v1220
      %v1312 = vmul.f32 %v1197, %v1220
      %v1313 = vmul.f32 %v1198, %v1220
      %v1314 = vmul.f32 %v1199, %v1220
      %v1315 = vmul.f32 %v1200, %v1220
      %v1316 = vmul.f32 %v1201, %v1220
      %v1317 = vmul.f32 %v1202, %v1220
      %v1318 = vmul.f32 %v1203, %v1220
      %v1319 = vmul.f32 %v1204, %v1220
      %v1320 = vmul.f32 %v1205, %v1220
      %v1321 = vmul.f32 %v1206, %v1220
      %v1322 = vmul.f32 %v1207, %v1220
      %v1323 = vmul.f32 %v1208, %v1220
      %v1324 = vmul.f32 %v1209, %v1220
      %v1325 = vmul.f32 %v1210, %v1220
      %v1326 = vadd.f32 %v898, %v1222
      %v1327 = vadd.f32 %v899, %v1223
      %v1328 = vadd.f32 %v900, %v1224
      %v1329 = vadd.f32 %v901, %v1225
      %v1330 = vadd.f32 %v902, %v1226
      %v1331 = vadd.f32 %v903, %v1227
      %v1332 = vadd.f32 %v904, %v1228
      %v1333 = vadd.f32 %v905, %v1229
      %v1334 = vadd.f32 %v906, %v1230
      %v1335 = vadd.f32 %v907, %v1231
      %v1336 = vadd.f32 %v908, %v1232
      %v1337 = vadd.f32 %v909, %v1233
      %v1338 = vadd.f32 %v910, %v1234
      %v1339 = vadd.f32 %v911, %v1235
      %v1340 = vadd.f32 %v912, %v1236
      %v1341 = vadd.f32 %v913, %v1237
      %v1342 = vadd.f32 %v914, %v1238
      %v1343 = vadd.f32 %v915, %v1239
      %v1344 = vadd.f32 %v916, %v1240
      %v1345 = vadd.f32 %v917, %v1241
      %v1346 = vadd.f32 %v918, %v1242
      %v1347 = vadd.f32 %v919, %v1243
      %v1348 = vadd.f32 %v920, %v1244
      %v1349 = vadd.f32 %v921, %v1245
      %v1350 = vadd.f32 %v922, %v1246
      %v1351 = vadd.f32 %v923, %v1247
      %v1352 = vadd.f32 %v924, %v1248
      %v1353 = vadd.f32 %v925, %v1249
      %v1354 = vadd.f32 %v926, %v1250
      %v1355 = vadd.f32 %v927, %v1251
      %v1356 = vadd.f32 %v928, %v1252
      %v1357 = vadd.f32 %v929, %v1253
      %v1358 = vadd.f32 %v930, %v1254
      %v1359 = vadd.f32 %v931, %v1255
      %v1360 = vadd.f32 %v932, %v1256
      %v1361 = vadd.f32 %v933, %v1257
      %v1362 = vadd.f32 %v934, %v1258
      %v1363 = vadd.f32 %v935, %v1259
      %v1364 = vadd.f32 %v936, %v1260
      %v1365 = vadd.f32 %v937, %v1261
      %v1366 = vadd.f32 %v938, %v1262
      %v1367 = vadd.f32 %v939, %v1263
      %v1368 = vadd.f32 %v940, %v1264
      %v1369 = vadd.f32 %v941, %v1265
      %v1370 = vadd.f32 %v942, %v1266
      %v1371 = vadd.f32 %v943, %v1267
      %v1372 = vadd.f32 %v944, %v1268
      %v1373 = vadd.f32 %v945, %v1269
      %v1374 = vadd.f32 %v946, %v1270
      %v1375 = vadd.f32 %v947, %v1271
      %v1376 = vadd.f32 %v948, %v1272
      %v1377 = vadd.f32 %v949, %v1273
      %v1378 = vadd.f32 %v950, %v1274
      %v1379 = vadd.f32 %v951, %v1275
      %v1380 = vadd.f32 %v952, %v1276
      %v1381 = vadd.f32 %v953, %v1277
      %v1382 = vadd.f32 %v954, %v1278
      %v1383 = vadd.f32 %v955, %v1279
      %v1384 = vadd.f32 %v956, %v1280
      %v1385 = vadd.f32 %v957, %v1281
      %v1386 = vadd.f32 %v958, %v1282
      %v1387 = vadd.f32 %v959, %v1283
      %v1388 = vadd.f32 %v960, %v1284
      %v1389 = vadd.f32 %v961, %v1285
      %v1390 = vadd.f32 %v962, %v1286
      %v1391 = vadd.f32 %v963, %v1287
      %v1392 = vadd.f32 %v964, %v1288
      %v1393 = vadd.f32 %v965, %v1289
      %v1394 = vadd.f32 %v966, %v1290
      %v1395 = vadd.f32 %v967, %v1291
      %v1396 = vadd.f32 %v968, %v1292
      %v1397 = vadd.f32 %v969, %v1293
      %v1398 = vadd.f32 %v970, %v1294
      %v1399 = vadd.f32 %v971, %v1295
      %v1400 = vadd.f32 %v972, %v1296
      %v1401 = vadd.f32 %v973, %v1297
      %v1402 = vadd.f32 %v974, %v1298
      %v1403 = vadd.f32 %v975, %v1299
      %v1404 = vadd.f32 %v976, %v1300
      %v1405 = vadd.f32 %v977, %v1301
      %v1406 = vadd.f32 %v978, %v1302
      %v1407 = vadd.f32 %v979, %v1303
      %v1408 = vadd.f32 %v980, %v1304
      %v1409 = vadd.f32 %v981, %v1305
      %v1410 = vadd.f32 %v982, %v1306
      %v1411 = vadd.f32 %v983, %v1307
      %v1412 = vadd.f32 %v984, %v1308
      %v1413 = vadd.f32 %v985, %v1309
      %v1414 = vadd.f32 %v986, %v1310
      %v1415 = vadd.f32 %v987, %v1311
      %v1416 = vadd.f32 %v988, %v1312
      %v1417 = vadd.f32 %v989, %v1313
      %v1418 = vadd.f32 %v990, %v1314
      %v1419 = vadd.f32 %v991, %v1315
      %v1420 = vadd.f32 %v992, %v1316
      %v1421 = vadd.f32 %v993, %v1317
      %v1422 = vadd.f32 %v994, %v1318
      %v1423 = vadd.f32 %v995, %v1319
      %v1424 = vadd.f32 %v996, %v1320
      %v1425 = vadd.f32 %v997, %v1321
      %v1426 = vadd.f32 %v998, %v1322
      %v1427 = vadd.f32 %v999, %v1323
      %v1428 = vadd.f32 %v1000, %v1324
      %v1429 = vadd.f32 %v1001, %v1325
      %s1430 = scalar_lea.vmem %s243, 2496
      %v1431 = vld [vmem:[%s1430] sm:$0xff]
      %v1432 = vld [vmem:[%s1430 + $0x8] sm:$0xff]
      %v1433 = vld [vmem:[%s1430 + $0x10] sm:$0xff]
      %v1434 = vld [vmem:[%s1430 + $0x18] sm:$0xff]
      %v1435 = vld [vmem:[%s1430 + $0x20] sm:$0xff]
      %v1436 = vld [vmem:[%s1430 + $0x28] sm:$0xff]
      %v1437 = vld [vmem:[%s1430 + $0x30] sm:$0xff]
      %v1438 = vld [vmem:[%s1430 + $0x38] sm:$0xff]
      %v1439 = vld [vmem:[%s1430 + $0x40] sm:$0xff]
      %v1440 = vld [vmem:[%s1430 + $0x48] sm:$0xff]
      %v1441 = vld [vmem:[%s1430 + $0x50] sm:$0xff]
      %v1442 = vld [vmem:[%s1430 + $0x58] sm:$0xff]
      %v1443 = vld [vmem:[%s1430 + $0x60] sm:$0xf]
      %v1444 = vld [vmem:[%s1430 + $0x68] sm:$0xff]
      %v1445 = vld [vmem:[%s1430 + $0x70] sm:$0xff]
      %v1446 = vld [vmem:[%s1430 + $0x78] sm:$0xff]
      %v1447 = vld [vmem:[%s1430 + $0x80] sm:$0xff]
      %v1448 = vld [vmem:[%s1430 + $0x88] sm:$0xff]
      %v1449 = vld [vmem:[%s1430 + $0x90] sm:$0xff]
      %v1450 = vld [vmem:[%s1430 + $0x98] sm:$0xff]
      %v1451 = vld [vmem:[%s1430 + $0xa0] sm:$0xff]
      %v1452 = vld [vmem:[%s1430 + $0xa8] sm:$0xff]
      %v1453 = vld [vmem:[%s1430 + $0xb0] sm:$0xff]
      %v1454 = vld [vmem:[%s1430 + $0xb8] sm:$0xff]
      %v1455 = vld [vmem:[%s1430 + $0xc0] sm:$0xff]
      %v1456 = vld [vmem:[%s1430 + $0xc8] sm:$0xf]
      %v1457 = vld [vmem:[%s1430 + $0xd0] sm:$0xff]
      %v1458 = vld [vmem:[%s1430 + $0xd8] sm:$0xff]
      %v1459 = vld [vmem:[%s1430 + $0xe0] sm:$0xff]
      %v1460 = vld [vmem:[%s1430 + $0xe8] sm:$0xff]
      %v1461 = vld [vmem:[%s1430 + $0xf0] sm:$0xff]
      %v1462 = vld [vmem:[%s1430 + $0xf8] sm:$0xff]
      %v1463 = vld [vmem:[%s1430 + $0x100] sm:$0xff]
      %v1464 = vld [vmem:[%s1430 + $0x108] sm:$0xff]
      %v1465 = vld [vmem:[%s1430 + $0x110] sm:$0xff]
      %v1466 = vld [vmem:[%s1430 + $0x118] sm:$0xff]
      %v1467 = vld [vmem:[%s1430 + $0x120] sm:$0xff]
      %v1468 = vld [vmem:[%s1430 + $0x128] sm:$0xff]
      %v1469 = vld [vmem:[%s1430 + $0x130] sm:$0xf]
      %v1470 = vld [vmem:[%s1430 + $0x138] sm:$0xff]
      %v1471 = vld [vmem:[%s1430 + $0x140] sm:$0xff]
      %v1472 = vld [vmem:[%s1430 + $0x148] sm:$0xff]
      %v1473 = vld [vmem:[%s1430 + $0x150] sm:$0xff]
      %v1474 = vld [vmem:[%s1430 + $0x158] sm:$0xff]
      %v1475 = vld [vmem:[%s1430 + $0x160] sm:$0xff]
      %v1476 = vld [vmem:[%s1430 + $0x168] sm:$0xff]
      %v1477 = vld [vmem:[%s1430 + $0x170] sm:$0xff]
      %v1478 = vld [vmem:[%s1430 + $0x178] sm:$0xff]
      %v1479 = vld [vmem:[%s1430 + $0x180] sm:$0xff]
      %v1480 = vld [vmem:[%s1430 + $0x188] sm:$0xff]
      %v1481 = vld [vmem:[%s1430 + $0x190] sm:$0xff]
      %v1482 = vld [vmem:[%s1430 + $0x198] sm:$0xf]
      %v1483 = vld [vmem:[%s1430 + $0x1a0] sm:$0xff]
      %v1484 = vld [vmem:[%s1430 + $0x1a8] sm:$0xff]
      %v1485 = vld [vmem:[%s1430 + $0x1b0] sm:$0xff]
      %v1486 = vld [vmem:[%s1430 + $0x1b8] sm:$0xff]
      %v1487 = vld [vmem:[%s1430 + $0x1c0] sm:$0xff]
      %v1488 = vld [vmem:[%s1430 + $0x1c8] sm:$0xff]
      %v1489 = vld [vmem:[%s1430 + $0x1d0] sm:$0xff]
      %v1490 = vld [vmem:[%s1430 + $0x1d8] sm:$0xff]
      %v1491 = vld [vmem:[%s1430 + $0x1e0] sm:$0xff]
      %v1492 = vld [vmem:[%s1430 + $0x1e8] sm:$0xff]
      %v1493 = vld [vmem:[%s1430 + $0x1f0] sm:$0xff]
      %v1494 = vld [vmem:[%s1430 + $0x1f8] sm:$0xff]
      %v1495 = vld [vmem:[%s1430 + $0x200] sm:$0xf]
      %v1496 = vld [vmem:[%s1430 + $0x208] sm:$0xff]
      %v1497 = vld [vmem:[%s1430 + $0x210] sm:$0xff]
      %v1498 = vld [vmem:[%s1430 + $0x218] sm:$0xff]
      %v1499 = vld [vmem:[%s1430 + $0x220] sm:$0xff]
      %v1500 = vld [vmem:[%s1430 + $0x228] sm:$0xff]
      %v1501 = vld [vmem:[%s1430 + $0x230] sm:$0xff]
      %v1502 = vld [vmem:[%s1430 + $0x238] sm:$0xff]
      %v1503 = vld [vmem:[%s1430 + $0x240] sm:$0xff]
      %v1504 = vld [vmem:[%s1430 + $0x248] sm:$0xff]
      %v1505 = vld [vmem:[%s1430 + $0x250] sm:$0xff]
      %v1506 = vld [vmem:[%s1430 + $0x258] sm:$0xff]
      %v1507 = vld [vmem:[%s1430 + $0x260] sm:$0xff]
      %v1508 = vld [vmem:[%s1430 + $0x268] sm:$0xf]
      %v1509 = vld [vmem:[%s1430 + $0x270] sm:$0xff]
      %v1510 = vld [vmem:[%s1430 + $0x278] sm:$0xff]
      %v1511 = vld [vmem:[%s1430 + $0x280] sm:$0xff]
      %v1512 = vld [vmem:[%s1430 + $0x288] sm:$0xff]
      %v1513 = vld [vmem:[%s1430 + $0x290] sm:$0xff]
      %v1514 = vld [vmem:[%s1430 + $0x298] sm:$0xff]
      %v1515 = vld [vmem:[%s1430 + $0x2a0] sm:$0xff]
      %v1516 = vld [vmem:[%s1430 + $0x2a8] sm:$0xff]
      %v1517 = vld [vmem:[%s1430 + $0x2b0] sm:$0xff]
      %v1518 = vld [vmem:[%s1430 + $0x2b8] sm:$0xff]
      %v1519 = vld [vmem:[%s1430 + $0x2c0] sm:$0xff]
      %v1520 = vld [vmem:[%s1430 + $0x2c8] sm:$0xff]
      %v1521 = vld [vmem:[%s1430 + $0x2d0] sm:$0xf]
      %v1522 = vld [vmem:[%s1430 + $0x2d8] sm:$0xff]
      %v1523 = vld [vmem:[%s1430 + $0x2e0] sm:$0xff]
      %v1524 = vld [vmem:[%s1430 + $0x2e8] sm:$0xff]
      %v1525 = vld [vmem:[%s1430 + $0x2f0] sm:$0xff]
      %v1526 = vld [vmem:[%s1430 + $0x2f8] sm:$0xff]
      %v1527 = vld [vmem:[%s1430 + $0x300] sm:$0xff]
      %v1528 = vld [vmem:[%s1430 + $0x308] sm:$0xff]
      %v1529 = vld [vmem:[%s1430 + $0x310] sm:$0xff]
      %v1530 = vld [vmem:[%s1430 + $0x318] sm:$0xff]
      %v1531 = vld [vmem:[%s1430 + $0x320] sm:$0xff]
      %v1532 = vld [vmem:[%s1430 + $0x328] sm:$0xff]
      %v1533 = vld [vmem:[%s1430 + $0x330] sm:$0xff]
      %v1534 = vld [vmem:[%s1430 + $0x338] sm:$0xf]
      %v1535 = vtanh.pop %v1431
      %v1536 = vtanh.pop %v1432
      %v1537 = vtanh.pop %v1433
      %v1538 = vtanh.pop %v1434
      %v1539 = vtanh.pop %v1435
      %v1540 = vtanh.pop %v1436
      %v1541 = vtanh.pop %v1437
      %v1542 = vtanh.pop %v1438
      %v1543 = vtanh.pop %v1439
      %v1544 = vtanh.pop %v1440
      %v1545 = vtanh.pop %v1441
      %v1546 = vtanh.pop %v1442
      %v1547 = vtanh.pop %v1443
      %v1548 = vtanh.pop %v1444
      %v1549 = vtanh.pop %v1445
      %v1550 = vtanh.pop %v1446
      %v1551 = vtanh.pop %v1447
      %v1552 = vtanh.pop %v1448
      %v1553 = vtanh.pop %v1449
      %v1554 = vtanh.pop %v1450
      %v1555 = vtanh.pop %v1451
      %v1556 = vtanh.pop %v1452
      %v1557 = vtanh.pop %v1453
      %v1558 = vtanh.pop %v1454
      %v1559 = vtanh.pop %v1455
      %v1560 = vtanh.pop %v1456
      %v1561 = vtanh.pop %v1457
      %v1562 = vtanh.pop %v1458
      %v1563 = vtanh.pop %v1459
      %v1564 = vtanh.pop %v1460
      %v1565 = vtanh.pop %v1461
      %v1566 = vtanh.pop %v1462
      %v1567 = vtanh.pop %v1463
      %v1568 = vtanh.pop %v1464
      %v1569 = vtanh.pop %v1465
      %v1570 = vtanh.pop %v1466
      %v1571 = vtanh.pop %v1467
      %v1572 = vtanh.pop %v1468
      %v1573 = vtanh.pop %v1469
      %v1574 = vtanh.pop %v1470
      %v1575 = vtanh.pop %v1471
      %v1576 = vtanh.pop %v1472
      %v1577 = vtanh.pop %v1473
      %v1578 = vtanh.pop %v1474
      %v1579 = vtanh.pop %v1475
      %v1580 = vtanh.pop %v1476
      %v1581 = vtanh.pop %v1477
      %v1582 = vtanh.pop %v1478
      %v1583 = vtanh.pop %v1479
      %v1584 = vtanh.pop %v1480
      %v1585 = vtanh.pop %v1481
      %v1586 = vtanh.pop %v1482
      %v1587 = vtanh.pop %v1483
      %v1588 = vtanh.pop %v1484
      %v1589 = vtanh.pop %v1485
      %v1590 = vtanh.pop %v1486
      %v1591 = vtanh.pop %v1487
      %v1592 = vtanh.pop %v1488
      %v1593 = vtanh.pop %v1489
      %v1594 = vtanh.pop %v1490
      %v1595 = vtanh.pop %v1491
      %v1596 = vtanh.pop %v1492
      %v1597 = vtanh.pop %v1493
      %v1598 = vtanh.pop %v1494
      %v1599 = vtanh.pop %v1495
      %v1600 = vtanh.pop %v1496
      %v1601 = vtanh.pop %v1497
      %v1602 = vtanh.pop %v1498
      %v1603 = vtanh.pop %v1499
      %v1604 = vtanh.pop %v1500
      %v1605 = vtanh.pop %v1501
      %v1606 = vtanh.pop %v1502
      %v1607 = vtanh.pop %v1503
      %v1608 = vtanh.pop %v1504
      %v1609 = vtanh.pop %v1505
      %v1610 = vtanh.pop %v1506
      %v1611 = vtanh.pop %v1507
      %v1612 = vtanh.pop %v1508
      %v1613 = vtanh.pop %v1509
      %v1614 = vtanh.pop %v1510
      %v1615 = vtanh.pop %v1511
      %v1616 = vtanh.pop %v1512
      %v1617 = vtanh.pop %v1513
      %v1618 = vtanh.pop %v1514
      %v1619 = vtanh.pop %v1515
      %v1620 = vtanh.pop %v1516
      %v1621 = vtanh.pop %v1517
      %v1622 = vtanh.pop %v1518
      %v1623 = vtanh.pop %v1519
      %v1624 = vtanh.pop %v1520
      %v1625 = vtanh.pop %v1521
      %v1626 = vtanh.pop %v1522
      %v1627 = vtanh.pop %v1523
      %v1628 = vtanh.pop %v1524
      %v1629 = vtanh.pop %v1525
      %v1630 = vtanh.pop %v1526
      %v1631 = vtanh.pop %v1527
      %v1632 = vtanh.pop %v1528
      %v1633 = vtanh.pop %v1529
      %v1634 = vtanh.pop %v1530
      %v1635 = vtanh.pop %v1531
      %v1636 = vtanh.pop %v1532
      %v1637 = vtanh.pop %v1533
      %v1638 = vtanh.pop %v1534
      %s1639 = scalar_lea.vmem %s233, 3
      %v1640 = vld [vmem:[%s1639] sm:$0x1]
      %v1642 = vlaneseq
      %v1643 = vshrl.u32 %v1642, 7
      %v1644 = vsub.s32 0, %v1643
      %v1645 = vrot.slane %v1640, %v1644
      %1646 = vset.pattern.permute.xlu0 0
      %1647 = vperm.xlu0 %1646, %v1645
      %v1648 = vpop.permute.xlu0 %1647
      %v1650 = vmul.f32 %v1535, %v1648
      %v1651 = vmul.f32 %v1536, %v1648
      %v1652 = vmul.f32 %v1537, %v1648
      %v1653 = vmul.f32 %v1538, %v1648
      %v1654 = vmul.f32 %v1539, %v1648
      %v1655 = vmul.f32 %v1540, %v1648
      %v1656 = vmul.f32 %v1541, %v1648
      %v1657 = vmul.f32 %v1542, %v1648
      %v1658 = vmul.f32 %v1543, %v1648
      %v1659 = vmul.f32 %v1544, %v1648
      %v1660 = vmul.f32 %v1545, %v1648
      %v1661 = vmul.f32 %v1546, %v1648
      %v1662 = vmul.f32 %v1547, %v1648
      %v1663 = vmul.f32 %v1548, %v1648
      %v1664 = vmul.f32 %v1549, %v1648
      %v1665 = vmul.f32 %v1550, %v1648
      %v1666 = vmul.f32 %v1551, %v1648
      %v1667 = vmul.f32 %v1552, %v1648
      %v1668 = vmul.f32 %v1553, %v1648
      %v1669 = vmul.f32 %v1554, %v1648
      %v1670 = vmul.f32 %v1555, %v1648
      %v1671 = vmul.f32 %v1556, %v1648
      %v1672 = vmul.f32 %v1557, %v1648
      %v1673 = vmul.f32 %v1558, %v1648
      %v1674 = vmul.f32 %v1559, %v1648
      %v1675 = vmul.f32 %v1560, %v1648
      %v1676 = vmul.f32 %v1561, %v1648
      %v1677 = vmul.f32 %v1562, %v1648
      %v1678 = vmul.f32 %v1563, %v1648
      %v1679 = vmul.f32 %v1564, %v1648
      %v1680 = vmul.f32 %v1565, %v1648
      %v1681 = vmul.f32 %v1566, %v1648
      %v1682 = vmul.f32 %v1567, %v1648
      %v1683 = vmul.f32 %v1568, %v1648
      %v1684 = vmul.f32 %v1569, %v1648
      %v1685 = vmul.f32 %v1570, %v1648
      %v1686 = vmul.f32 %v1571, %v1648
      %v1687 = vmul.f32 %v1572, %v1648
      %v1688 = vmul.f32 %v1573, %v1648
      %v1689 = vmul.f32 %v1574, %v1648
      %v1690 = vmul.f32 %v1575, %v1648
      %v1691 = vmul.f32 %v1576, %v1648
      %v1692 = vmul.f32 %v1577, %v1648
      %v1693 = vmul.f32 %v1578, %v1648
      %v1694 = vmul.f32 %v1579, %v1648
      %v1695 = vmul.f32 %v1580, %v1648
      %v1696 = vmul.f32 %v1581, %v1648
      %v1697 = vmul.f32 %v1582, %v1648
      %v1698 = vmul.f32 %v1583, %v1648
      %v1699 = vmul.f32 %v1584, %v1648
      %v1700 = vmul.f32 %v1585, %v1648
      %v1701 = vmul.f32 %v1586, %v1648
      %v1702 = vmul.f32 %v1587, %v1648
      %v1703 = vmul.f32 %v1588, %v1648
      %v1704 = vmul.f32 %v1589, %v1648
      %v1705 = vmul.f32 %v1590, %v1648
      %v1706 = vmul.f32 %v1591, %v1648
      %v1707 = vmul.f32 %v1592, %v1648
      %v1708 = vmul.f32 %v1593, %v1648
      %v1709 = vmul.f32 %v1594, %v1648
      %v1710 = vmul.f32 %v1595, %v1648
      %v1711 = vmul.f32 %v1596, %v1648
      %v1712 = vmul.f32 %v1597, %v1648
      %v1713 = vmul.f32 %v1598, %v1648
      %v1714 = vmul.f32 %v1599, %v1648
      %v1715 = vmul.f32 %v1600, %v1648
      %v1716 = vmul.f32 %v1601, %v1648
      %v1717 = vmul.f32 %v1602, %v1648
      %v1718 = vmul.f32 %v1603, %v1648
      %v1719 = vmul.f32 %v1604, %v1648
      %v1720 = vmul.f32 %v1605, %v1648
      %v1721 = vmul.f32 %v1606, %v1648
      %v1722 = vmul.f32 %v1607, %v1648
      %v1723 = vmul.f32 %v1608, %v1648
      %v1724 = vmul.f32 %v1609, %v1648
      %v1725 = vmul.f32 %v1610, %v1648
      %v1726 = vmul.f32 %v1611, %v1648
      %v1727 = vmul.f32 %v1612, %v1648
      %v1728 = vmul.f32 %v1613, %v1648
      %v1729 = vmul.f32 %v1614, %v1648
      %v1730 = vmul.f32 %v1615, %v1648
      %v1731 = vmul.f32 %v1616, %v1648
      %v1732 = vmul.f32 %v1617, %v1648
      %v1733 = vmul.f32 %v1618, %v1648
      %v1734 = vmul.f32 %v1619, %v1648
      %v1735 = vmul.f32 %v1620, %v1648
      %v1736 = vmul.f32 %v1621, %v1648
      %v1737 = vmul.f32 %v1622, %v1648
      %v1738 = vmul.f32 %v1623, %v1648
      %v1739 = vmul.f32 %v1624, %v1648
      %v1740 = vmul.f32 %v1625, %v1648
      %v1741 = vmul.f32 %v1626, %v1648
      %v1742 = vmul.f32 %v1627, %v1648
      %v1743 = vmul.f32 %v1628, %v1648
      %v1744 = vmul.f32 %v1629, %v1648
      %v1745 = vmul.f32 %v1630, %v1648
      %v1746 = vmul.f32 %v1631, %v1648
      %v1747 = vmul.f32 %v1632, %v1648
      %v1748 = vmul.f32 %v1633, %v1648
      %v1749 = vmul.f32 %v1634, %v1648
      %v1750 = vmul.f32 %v1635, %v1648
      %v1751 = vmul.f32 %v1636, %v1648
      %v1752 = vmul.f32 %v1637, %v1648
      %v1753 = vmul.f32 %v1638, %v1648
      %v1754 = vadd.f32 %v1326, %v1650
      %v1755 = vadd.f32 %v1327, %v1651
      %v1756 = vadd.f32 %v1328, %v1652
      %v1757 = vadd.f32 %v1329, %v1653
      %v1758 = vadd.f32 %v1330, %v1654
      %v1759 = vadd.f32 %v1331, %v1655
      %v1760 = vadd.f32 %v1332, %v1656
      %v1761 = vadd.f32 %v1333, %v1657
      %v1762 = vadd.f32 %v1334, %v1658
      %v1763 = vadd.f32 %v1335, %v1659
      %v1764 = vadd.f32 %v1336, %v1660
      %v1765 = vadd.f32 %v1337, %v1661
      %v1766 = vadd.f32 %v1338, %v1662
      %v1767 = vadd.f32 %v1339, %v1663
      %v1768 = vadd.f32 %v1340, %v1664
      %v1769 = vadd.f32 %v1341, %v1665
      %v1770 = vadd.f32 %v1342, %v1666
      %v1771 = vadd.f32 %v1343, %v1667
      %v1772 = vadd.f32 %v1344, %v1668
      %v1773 = vadd.f32 %v1345, %v1669
      %v1774 = vadd.f32 %v1346, %v1670
      %v1775 = vadd.f32 %v1347, %v1671
      %v1776 = vadd.f32 %v1348, %v1672
      %v1777 = vadd.f32 %v1349, %v1673
      %v1778 = vadd.f32 %v1350, %v1674
      %v1779 = vadd.f32 %v1351, %v1675
      %v1780 = vadd.f32 %v1352, %v1676
      %v1781 = vadd.f32 %v1353, %v1677
      %v1782 = vadd.f32 %v1354, %v1678
      %v1783 = vadd.f32 %v1355, %v1679
      %v1784 = vadd.f32 %v1356, %v1680
      %v1785 = vadd.f32 %v1357, %v1681
      %v1786 = vadd.f32 %v1358, %v1682
      %v1787 = vadd.f32 %v1359, %v1683
      %v1788 = vadd.f32 %v1360, %v1684
      %v1789 = vadd.f32 %v1361, %v1685
      %v1790 = vadd.f32 %v1362, %v1686
      %v1791 = vadd.f32 %v1363, %v1687
      %v1792 = vadd.f32 %v1364, %v1688
      %v1793 = vadd.f32 %v1365, %v1689
      %v1794 = vadd.f32 %v1366, %v1690
      %v1795 = vadd.f32 %v1367, %v1691
      %v1796 = vadd.f32 %v1368, %v1692
      %v1797 = vadd.f32 %v1369, %v1693
      %v1798 = vadd.f32 %v1370, %v1694
      %v1799 = vadd.f32 %v1371, %v1695
      %v1800 = vadd.f32 %v1372, %v1696
      %v1801 = vadd.f32 %v1373, %v1697
      %v1802 = vadd.f32 %v1374, %v1698
      %v1803 = vadd.f32 %v1375, %v1699
      %v1804 = vadd.f32 %v1376, %v1700
      %v1805 = vadd.f32 %v1377, %v1701
      %v1806 = vadd.f32 %v1378, %v1702
      %v1807 = vadd.f32 %v1379, %v1703
      %v1808 = vadd.f32 %v1380, %v1704
      %v1809 = vadd.f32 %v1381, %v1705
      %v1810 = vadd.f32 %v1382, %v1706
      %v1811 = vadd.f32 %v1383, %v1707
      %v1812 = vadd.f32 %v1384, %v1708
      %v1813 = vadd.f32 %v1385, %v1709
      %v1814 = vadd.f32 %v1386, %v1710
      %v1815 = vadd.f32 %v1387, %v1711
      %v1816 = vadd.f32 %v1388, %v1712
      %v1817 = vadd.f32 %v1389, %v1713
      %v1818 = vadd.f32 %v1390, %v1714
      %v1819 = vadd.f32 %v1391, %v1715
      %v1820 = vadd.f32 %v1392, %v1716
      %v1821 = vadd.f32 %v1393, %v1717
      %v1822 = vadd.f32 %v1394, %v1718
      %v1823 = vadd.f32 %v1395, %v1719
      %v1824 = vadd.f32 %v1396, %v1720
      %v1825 = vadd.f32 %v1397, %v1721
      %v1826 = vadd.f32 %v1398, %v1722
      %v1827 = vadd.f32 %v1399, %v1723
      %v1828 = vadd.f32 %v1400, %v1724
      %v1829 = vadd.f32 %v1401, %v1725
      %v1830 = vadd.f32 %v1402, %v1726
      %v1831 = vadd.f32 %v1403, %v1727
      %v1832 = vadd.f32 %v1404, %v1728
      %v1833 = vadd.f32 %v1405, %v1729
      %v1834 = vadd.f32 %v1406, %v1730
      %v1835 = vadd.f32 %v1407, %v1731
      %v1836 = vadd.f32 %v1408, %v1732
      %v1837 = vadd.f32 %v1409, %v1733
      %v1838 = vadd.f32 %v1410, %v1734
      %v1839 = vadd.f32 %v1411, %v1735
      %v1840 = vadd.f32 %v1412, %v1736
      %v1841 = vadd.f32 %v1413, %v1737
      %v1842 = vadd.f32 %v1414, %v1738
      %v1843 = vadd.f32 %v1415, %v1739
      %v1844 = vadd.f32 %v1416, %v1740
      %v1845 = vadd.f32 %v1417, %v1741
      %v1846 = vadd.f32 %v1418, %v1742
      %v1847 = vadd.f32 %v1419, %v1743
      %v1848 = vadd.f32 %v1420, %v1744
      %v1849 = vadd.f32 %v1421, %v1745
      %v1850 = vadd.f32 %v1422, %v1746
      %v1851 = vadd.f32 %v1423, %v1747
      %v1852 = vadd.f32 %v1424, %v1748
      %v1853 = vadd.f32 %v1425, %v1749
      %v1854 = vadd.f32 %v1426, %v1750
      %v1855 = vadd.f32 %v1427, %v1751
      %v1856 = vadd.f32 %v1428, %v1752
      %v1857 = vadd.f32 %v1429, %v1753
      %s1858 = scalar_lea.vmem %s243, 3328
      %v1859 = vld [vmem:[%s1858] sm:$0xff]
      %v1860 = vld [vmem:[%s1858 + $0x8] sm:$0xff]
      %v1861 = vld [vmem:[%s1858 + $0x10] sm:$0xff]
      %v1862 = vld [vmem:[%s1858 + $0x18] sm:$0xff]
      %v1863 = vld [vmem:[%s1858 + $0x20] sm:$0xff]
      %v1864 = vld [vmem:[%s1858 + $0x28] sm:$0xff]
      %v1865 = vld [vmem:[%s1858 + $0x30] sm:$0xff]
      %v1866 = vld [vmem:[%s1858 + $0x38] sm:$0xff]
      %v1867 = vld [vmem:[%s1858 + $0x40] sm:$0xff]
      %v1868 = vld [vmem:[%s1858 + $0x48] sm:$0xff]
      %v1869 = vld [vmem:[%s1858 + $0x50] sm:$0xff]
      %v1870 = vld [vmem:[%s1858 + $0x58] sm:$0xff]
      %v1871 = vld [vmem:[%s1858 + $0x60] sm:$0xf]
      %v1872 = vld [vmem:[%s1858 + $0x68] sm:$0xff]
      %v1873 = vld [vmem:[%s1858 + $0x70] sm:$0xff]
      %v1874 = vld [vmem:[%s1858 + $0x78] sm:$0xff]
      %v1875 = vld [vmem:[%s1858 + $0x80] sm:$0xff]
      %v1876 = vld [vmem:[%s1858 + $0x88] sm:$0xff]
      %v1877 = vld [vmem:[%s1858 + $0x90] sm:$0xff]
      %v1878 = vld [vmem:[%s1858 + $0x98] sm:$0xff]
      %v1879 = vld [vmem:[%s1858 + $0xa0] sm:$0xff]
      %v1880 = vld [vmem:[%s1858 + $0xa8] sm:$0xff]
      %v1881 = vld [vmem:[%s1858 + $0xb0] sm:$0xff]
      %v1882 = vld [vmem:[%s1858 + $0xb8] sm:$0xff]
      %v1883 = vld [vmem:[%s1858 + $0xc0] sm:$0xff]
      %v1884 = vld [vmem:[%s1858 + $0xc8] sm:$0xf]
      %v1885 = vld [vmem:[%s1858 + $0xd0] sm:$0xff]
      %v1886 = vld [vmem:[%s1858 + $0xd8] sm:$0xff]
      %v1887 = vld [vmem:[%s1858 + $0xe0] sm:$0xff]
      %v1888 = vld [vmem:[%s1858 + $0xe8] sm:$0xff]
      %v1889 = vld [vmem:[%s1858 + $0xf0] sm:$0xff]
      %v1890 = vld [vmem:[%s1858 + $0xf8] sm:$0xff]
      %v1891 = vld [vmem:[%s1858 + $0x100] sm:$0xff]
      %v1892 = vld [vmem:[%s1858 + $0x108] sm:$0xff]
      %v1893 = vld [vmem:[%s1858 + $0x110] sm:$0xff]
      %v1894 = vld [vmem:[%s1858 + $0x118] sm:$0xff]
      %v1895 = vld [vmem:[%s1858 + $0x120] sm:$0xff]
      %v1896 = vld [vmem:[%s1858 + $0x128] sm:$0xff]
      %v1897 = vld [vmem:[%s1858 + $0x130] sm:$0xf]
      %v1898 = vld [vmem:[%s1858 + $0x138] sm:$0xff]
      %v1899 = vld [vmem:[%s1858 + $0x140] sm:$0xff]
      %v1900 = vld [vmem:[%s1858 + $0x148] sm:$0xff]
      %v1901 = vld [vmem:[%s1858 + $0x150] sm:$0xff]
      %v1902 = vld [vmem:[%s1858 + $0x158] sm:$0xff]
      %v1903 = vld [vmem:[%s1858 + $0x160] sm:$0xff]
      %v1904 = vld [vmem:[%s1858 + $0x168] sm:$0xff]
      %v1905 = vld [vmem:[%s1858 + $0x170] sm:$0xff]
      %v1906 = vld [vmem:[%s1858 + $0x178] sm:$0xff]
      %v1907 = vld [vmem:[%s1858 + $0x180] sm:$0xff]
      %v1908 = vld [vmem:[%s1858 + $0x188] sm:$0xff]
      %v1909 = vld [vmem:[%s1858 + $0x190] sm:$0xff]
      %v1910 = vld [vmem:[%s1858 + $0x198] sm:$0xf]
      %v1911 = vld [vmem:[%s1858 + $0x1a0] sm:$0xff]
      %v1912 = vld [vmem:[%s1858 + $0x1a8] sm:$0xff]
      %v1913 = vld [vmem:[%s1858 + $0x1b0] sm:$0xff]
      %v1914 = vld [vmem:[%s1858 + $0x1b8] sm:$0xff]
      %v1915 = vld [vmem:[%s1858 + $0x1c0] sm:$0xff]
      %v1916 = vld [vmem:[%s1858 + $0x1c8] sm:$0xff]
      %v1917 = vld [vmem:[%s1858 + $0x1d0] sm:$0xff]
      %v1918 = vld [vmem:[%s1858 + $0x1d8] sm:$0xff]
      %v1919 = vld [vmem:[%s1858 + $0x1e0] sm:$0xff]
      %v1920 = vld [vmem:[%s1858 + $0x1e8] sm:$0xff]
      %v1921 = vld [vmem:[%s1858 + $0x1f0] sm:$0xff]
      %v1922 = vld [vmem:[%s1858 + $0x1f8] sm:$0xff]
      %v1923 = vld [vmem:[%s1858 + $0x200] sm:$0xf]
      %v1924 = vld [vmem:[%s1858 + $0x208] sm:$0xff]
      %v1925 = vld [vmem:[%s1858 + $0x210] sm:$0xff]
      %v1926 = vld [vmem:[%s1858 + $0x218] sm:$0xff]
      %v1927 = vld [vmem:[%s1858 + $0x220] sm:$0xff]
      %v1928 = vld [vmem:[%s1858 + $0x228] sm:$0xff]
      %v1929 = vld [vmem:[%s1858 + $0x230] sm:$0xff]
      %v1930 = vld [vmem:[%s1858 + $0x238] sm:$0xff]
      %v1931 = vld [vmem:[%s1858 + $0x240] sm:$0xff]
      %v1932 = vld [vmem:[%s1858 + $0x248] sm:$0xff]
      %v1933 = vld [vmem:[%s1858 + $0x250] sm:$0xff]
      %v1934 = vld [vmem:[%s1858 + $0x258] sm:$0xff]
      %v1935 = vld [vmem:[%s1858 + $0x260] sm:$0xff]
      %v1936 = vld [vmem:[%s1858 + $0x268] sm:$0xf]
      %v1937 = vld [vmem:[%s1858 + $0x270] sm:$0xff]
      %v1938 = vld [vmem:[%s1858 + $0x278] sm:$0xff]
      %v1939 = vld [vmem:[%s1858 + $0x280] sm:$0xff]
      %v1940 = vld [vmem:[%s1858 + $0x288] sm:$0xff]
      %v1941 = vld [vmem:[%s1858 + $0x290] sm:$0xff]
      %v1942 = vld [vmem:[%s1858 + $0x298] sm:$0xff]
      %v1943 = vld [vmem:[%s1858 + $0x2a0] sm:$0xff]
      %v1944 = vld [vmem:[%s1858 + $0x2a8] sm:$0xff]
      %v1945 = vld [vmem:[%s1858 + $0x2b0] sm:$0xff]
      %v1946 = vld [vmem:[%s1858 + $0x2b8] sm:$0xff]
      %v1947 = vld [vmem:[%s1858 + $0x2c0] sm:$0xff]
      %v1948 = vld [vmem:[%s1858 + $0x2c8] sm:$0xff]
      %v1949 = vld [vmem:[%s1858 + $0x2d0] sm:$0xf]
      %v1950 = vld [vmem:[%s1858 + $0x2d8] sm:$0xff]
      %v1951 = vld [vmem:[%s1858 + $0x2e0] sm:$0xff]
      %v1952 = vld [vmem:[%s1858 + $0x2e8] sm:$0xff]
      %v1953 = vld [vmem:[%s1858 + $0x2f0] sm:$0xff]
      %v1954 = vld [vmem:[%s1858 + $0x2f8] sm:$0xff]
      %v1955 = vld [vmem:[%s1858 + $0x300] sm:$0xff]
      %v1956 = vld [vmem:[%s1858 + $0x308] sm:$0xff]
      %v1957 = vld [vmem:[%s1858 + $0x310] sm:$0xff]
      %v1958 = vld [vmem:[%s1858 + $0x318] sm:$0xff]
      %v1959 = vld [vmem:[%s1858 + $0x320] sm:$0xff]
      %v1960 = vld [vmem:[%s1858 + $0x328] sm:$0xff]
      %v1961 = vld [vmem:[%s1858 + $0x330] sm:$0xff]
      %v1962 = vld [vmem:[%s1858 + $0x338] sm:$0xf]
      %v1963 = vtanh.pop %v1859
      %v1964 = vtanh.pop %v1860
      %v1965 = vtanh.pop %v1861
      %v1966 = vtanh.pop %v1862
      %v1967 = vtanh.pop %v1863
      %v1968 = vtanh.pop %v1864
      %v1969 = vtanh.pop %v1865
      %v1970 = vtanh.pop %v1866
      %v1971 = vtanh.pop %v1867
      %v1972 = vtanh.pop %v1868
      %v1973 = vtanh.pop %v1869
      %v1974 = vtanh.pop %v1870
      %v1975 = vtanh.pop %v1871
      %v1976 = vtanh.pop %v1872
      %v1977 = vtanh.pop %v1873
      %v1978 = vtanh.pop %v1874
      %v1979 = vtanh.pop %v1875
      %v1980 = vtanh.pop %v1876
      %v1981 = vtanh.pop %v1877
      %v1982 = vtanh.pop %v1878
      %v1983 = vtanh.pop %v1879
      %v1984 = vtanh.pop %v1880
      %v1985 = vtanh.pop %v1881
      %v1986 = vtanh.pop %v1882
      %v1987 = vtanh.pop %v1883
      %v1988 = vtanh.pop %v1884
      %v1989 = vtanh.pop %v1885
      %v1990 = vtanh.pop %v1886
      %v1991 = vtanh.pop %v1887
      %v1992 = vtanh.pop %v1888
      %v1993 = vtanh.pop %v1889
      %v1994 = vtanh.pop %v1890
      %v1995 = vtanh.pop %v1891
      %v1996 = vtanh.pop %v1892
      %v1997 = vtanh.pop %v1893
      %v1998 = vtanh.pop %v1894
      %v1999 = vtanh.pop %v1895
      %v2000 = vtanh.pop %v1896
      %v2001 = vtanh.pop %v1897
      %v2002 = vtanh.pop %v1898
      %v2003 = vtanh.pop %v1899
      %v2004 = vtanh.pop %v1900
      %v2005 = vtanh.pop %v1901
      %v2006 = vtanh.pop %v1902
      %v2007 = vtanh.pop %v1903
      %v2008 = vtanh.pop %v1904
      %v2009 = vtanh.pop %v1905
      %v2010 = vtanh.pop %v1906
      %v2011 = vtanh.pop %v1907
      %v2012 = vtanh.pop %v1908
      %v2013 = vtanh.pop %v1909
      %v2014 = vtanh.pop %v1910
      %v2015 = vtanh.pop %v1911
      %v2016 = vtanh.pop %v1912
      %v2017 = vtanh.pop %v1913
      %v2018 = vtanh.pop %v1914
      %v2019 = vtanh.pop %v1915
      %v2020 = vtanh.pop %v1916
      %v2021 = vtanh.pop %v1917
      %v2022 = vtanh.pop %v1918
      %v2023 = vtanh.pop %v1919
      %v2024 = vtanh.pop %v1920
      %v2025 = vtanh.pop %v1921
      %v2026 = vtanh.pop %v1922
      %v2027 = vtanh.pop %v1923
      %v2028 = vtanh.pop %v1924
      %v2029 = vtanh.pop %v1925
      %v2030 = vtanh.pop %v1926
      %v2031 = vtanh.pop %v1927
      %v2032 = vtanh.pop %v1928
      %v2033 = vtanh.pop %v1929
      %v2034 = vtanh.pop %v1930
      %v2035 = vtanh.pop %v1931
      %v2036 = vtanh.pop %v1932
      %v2037 = vtanh.pop %v1933
      %v2038 = vtanh.pop %v1934
      %v2039 = vtanh.pop %v1935
      %v2040 = vtanh.pop %v1936
      %v2041 = vtanh.pop %v1937
      %v2042 = vtanh.pop %v1938
      %v2043 = vtanh.pop %v1939
      %v2044 = vtanh.pop %v1940
      %v2045 = vtanh.pop %v1941
      %v2046 = vtanh.pop %v1942
      %v2047 = vtanh.pop %v1943
      %v2048 = vtanh.pop %v1944
      %v2049 = vtanh.pop %v1945
      %v2050 = vtanh.pop %v1946
      %v2051 = vtanh.pop %v1947
      %v2052 = vtanh.pop %v1948
      %v2053 = vtanh.pop %v1949
      %v2054 = vtanh.pop %v1950
      %v2055 = vtanh.pop %v1951
      %v2056 = vtanh.pop %v1952
      %v2057 = vtanh.pop %v1953
      %v2058 = vtanh.pop %v1954
      %v2059 = vtanh.pop %v1955
      %v2060 = vtanh.pop %v1956
      %v2061 = vtanh.pop %v1957
      %v2062 = vtanh.pop %v1958
      %v2063 = vtanh.pop %v1959
      %v2064 = vtanh.pop %v1960
      %v2065 = vtanh.pop %v1961
      %v2066 = vtanh.pop %v1962
      %s2067 = scalar_lea.vmem %s233, 4
      %v2068 = vld [vmem:[%s2067] sm:$0x1]
      %v2070 = vlaneseq
      %v2071 = vshrl.u32 %v2070, 7
      %v2072 = vsub.s32 0, %v2071
      %v2073 = vrot.slane %v2068, %v2072
      %2074 = vset.pattern.permute.xlu0 0
      %2075 = vperm.xlu0 %2074, %v2073
      %v2076 = vpop.permute.xlu0 %2075
      %v2078 = vmul.f32 %v1963, %v2076
      %v2079 = vmul.f32 %v1964, %v2076
      %v2080 = vmul.f32 %v1965, %v2076
      %v2081 = vmul.f32 %v1966, %v2076
      %v2082 = vmul.f32 %v1967, %v2076
      %v2083 = vmul.f32 %v1968, %v2076
      %v2084 = vmul.f32 %v1969, %v2076
      %v2085 = vmul.f32 %v1970, %v2076
      %v2086 = vmul.f32 %v1971, %v2076
      %v2087 = vmul.f32 %v1972, %v2076
      %v2088 = vmul.f32 %v1973, %v2076
      %v2089 = vmul.f32 %v1974, %v2076
      %v2090 = vmul.f32 %v1975, %v2076
      %v2091 = vmul.f32 %v1976, %v2076
      %v2092 = vmul.f32 %v1977, %v2076
      %v2093 = vmul.f32 %v1978, %v2076
      %v2094 = vmul.f32 %v1979, %v2076
      %v2095 = vmul.f32 %v1980, %v2076
      %v2096 = vmul.f32 %v1981, %v2076
      %v2097 = vmul.f32 %v1982, %v2076
      %v2098 = vmul.f32 %v1983, %v2076
      %v2099 = vmul.f32 %v1984, %v2076
      %v2100 = vmul.f32 %v1985, %v2076
      %v2101 = vmul.f32 %v1986, %v2076
      %v2102 = vmul.f32 %v1987, %v2076
      %v2103 = vmul.f32 %v1988, %v2076
      %v2104 = vmul.f32 %v1989, %v2076
      %v2105 = vmul.f32 %v1990, %v2076
      %v2106 = vmul.f32 %v1991, %v2076
      %v2107 = vmul.f32 %v1992, %v2076
      %v2108 = vmul.f32 %v1993, %v2076
      %v2109 = vmul.f32 %v1994, %v2076
      %v2110 = vmul.f32 %v1995, %v2076
      %v2111 = vmul.f32 %v1996, %v2076
      %v2112 = vmul.f32 %v1997, %v2076
      %v2113 = vmul.f32 %v1998, %v2076
      %v2114 = vmul.f32 %v1999, %v2076
      %v2115 = vmul.f32 %v2000, %v2076
      %v2116 = vmul.f32 %v2001, %v2076
      %v2117 = vmul.f32 %v2002, %v2076
      %v2118 = vmul.f32 %v2003, %v2076
      %v2119 = vmul.f32 %v2004, %v2076
      %v2120 = vmul.f32 %v2005, %v2076
      %v2121 = vmul.f32 %v2006, %v2076
      %v2122 = vmul.f32 %v2007, %v2076
      %v2123 = vmul.f32 %v2008, %v2076
      %v2124 = vmul.f32 %v2009, %v2076
      %v2125 = vmul.f32 %v2010, %v2076
      %v2126 = vmul.f32 %v2011, %v2076
      %v2127 = vmul.f32 %v2012, %v2076
      %v2128 = vmul.f32 %v2013, %v2076
      %v2129 = vmul.f32 %v2014, %v2076
      %v2130 = vmul.f32 %v2015, %v2076
      %v2131 = vmul.f32 %v2016, %v2076
      %v2132 = vmul.f32 %v2017, %v2076
      %v2133 = vmul.f32 %v2018, %v2076
      %v2134 = vmul.f32 %v2019, %v2076
      %v2135 = vmul.f32 %v2020, %v2076
      %v2136 = vmul.f32 %v2021, %v2076
      %v2137 = vmul.f32 %v2022, %v2076
      %v2138 = vmul.f32 %v2023, %v2076
      %v2139 = vmul.f32 %v2024, %v2076
      %v2140 = vmul.f32 %v2025, %v2076
      %v2141 = vmul.f32 %v2026, %v2076
      %v2142 = vmul.f32 %v2027, %v2076
      %v2143 = vmul.f32 %v2028, %v2076
      %v2144 = vmul.f32 %v2029, %v2076
      %v2145 = vmul.f32 %v2030, %v2076
      %v2146 = vmul.f32 %v2031, %v2076
      %v2147 = vmul.f32 %v2032, %v2076
      %v2148 = vmul.f32 %v2033, %v2076
      %v2149 = vmul.f32 %v2034, %v2076
      %v2150 = vmul.f32 %v2035, %v2076
      %v2151 = vmul.f32 %v2036, %v2076
      %v2152 = vmul.f32 %v2037, %v2076
      %v2153 = vmul.f32 %v2038, %v2076
      %v2154 = vmul.f32 %v2039, %v2076
      %v2155 = vmul.f32 %v2040, %v2076
      %v2156 = vmul.f32 %v2041, %v2076
      %v2157 = vmul.f32 %v2042, %v2076
      %v2158 = vmul.f32 %v2043, %v2076
      %v2159 = vmul.f32 %v2044, %v2076
      %v2160 = vmul.f32 %v2045, %v2076
      %v2161 = vmul.f32 %v2046, %v2076
      %v2162 = vmul.f32 %v2047, %v2076
      %v2163 = vmul.f32 %v2048, %v2076
      %v2164 = vmul.f32 %v2049, %v2076
      %v2165 = vmul.f32 %v2050, %v2076
      %v2166 = vmul.f32 %v2051, %v2076
      %v2167 = vmul.f32 %v2052, %v2076
      %v2168 = vmul.f32 %v2053, %v2076
      %v2169 = vmul.f32 %v2054, %v2076
      %v2170 = vmul.f32 %v2055, %v2076
      %v2171 = vmul.f32 %v2056, %v2076
      %v2172 = vmul.f32 %v2057, %v2076
      %v2173 = vmul.f32 %v2058, %v2076
      %v2174 = vmul.f32 %v2059, %v2076
      %v2175 = vmul.f32 %v2060, %v2076
      %v2176 = vmul.f32 %v2061, %v2076
      %v2177 = vmul.f32 %v2062, %v2076
      %v2178 = vmul.f32 %v2063, %v2076
      %v2179 = vmul.f32 %v2064, %v2076
      %v2180 = vmul.f32 %v2065, %v2076
      %v2181 = vmul.f32 %v2066, %v2076
      %v2182 = vadd.f32 %v1754, %v2078
      %v2183 = vadd.f32 %v1755, %v2079
      %v2184 = vadd.f32 %v1756, %v2080
      %v2185 = vadd.f32 %v1757, %v2081
      %v2186 = vadd.f32 %v1758, %v2082
      %v2187 = vadd.f32 %v1759, %v2083
      %v2188 = vadd.f32 %v1760, %v2084
      %v2189 = vadd.f32 %v1761, %v2085
      %v2190 = vadd.f32 %v1762, %v2086
      %v2191 = vadd.f32 %v1763, %v2087
      %v2192 = vadd.f32 %v1764, %v2088
      %v2193 = vadd.f32 %v1765, %v2089
      %v2194 = vadd.f32 %v1766, %v2090
      %v2195 = vadd.f32 %v1767, %v2091
      %v2196 = vadd.f32 %v1768, %v2092
      %v2197 = vadd.f32 %v1769, %v2093
      %v2198 = vadd.f32 %v1770, %v2094
      %v2199 = vadd.f32 %v1771, %v2095
      %v2200 = vadd.f32 %v1772, %v2096
      %v2201 = vadd.f32 %v1773, %v2097
      %v2202 = vadd.f32 %v1774, %v2098
      %v2203 = vadd.f32 %v1775, %v2099
      %v2204 = vadd.f32 %v1776, %v2100
      %v2205 = vadd.f32 %v1777, %v2101
      %v2206 = vadd.f32 %v1778, %v2102
      %v2207 = vadd.f32 %v1779, %v2103
      %v2208 = vadd.f32 %v1780, %v2104
      %v2209 = vadd.f32 %v1781, %v2105
      %v2210 = vadd.f32 %v1782, %v2106
      %v2211 = vadd.f32 %v1783, %v2107
      %v2212 = vadd.f32 %v1784, %v2108
      %v2213 = vadd.f32 %v1785, %v2109
      %v2214 = vadd.f32 %v1786, %v2110
      %v2215 = vadd.f32 %v1787, %v2111
      %v2216 = vadd.f32 %v1788, %v2112
      %v2217 = vadd.f32 %v1789, %v2113
      %v2218 = vadd.f32 %v1790, %v2114
      %v2219 = vadd.f32 %v1791, %v2115
      %v2220 = vadd.f32 %v1792, %v2116
      %v2221 = vadd.f32 %v1793, %v2117
      %v2222 = vadd.f32 %v1794, %v2118
      %v2223 = vadd.f32 %v1795, %v2119
      %v2224 = vadd.f32 %v1796, %v2120
      %v2225 = vadd.f32 %v1797, %v2121
      %v2226 = vadd.f32 %v1798, %v2122
      %v2227 = vadd.f32 %v1799, %v2123
      %v2228 = vadd.f32 %v1800, %v2124
      %v2229 = vadd.f32 %v1801, %v2125
      %v2230 = vadd.f32 %v1802, %v2126
      %v2231 = vadd.f32 %v1803, %v2127
      %v2232 = vadd.f32 %v1804, %v2128
      %v2233 = vadd.f32 %v1805, %v2129
      %v2234 = vadd.f32 %v1806, %v2130
      %v2235 = vadd.f32 %v1807, %v2131
      %v2236 = vadd.f32 %v1808, %v2132
      %v2237 = vadd.f32 %v1809, %v2133
      %v2238 = vadd.f32 %v1810, %v2134
      %v2239 = vadd.f32 %v1811, %v2135
      %v2240 = vadd.f32 %v1812, %v2136
      %v2241 = vadd.f32 %v1813, %v2137
      %v2242 = vadd.f32 %v1814, %v2138
      %v2243 = vadd.f32 %v1815, %v2139
      %v2244 = vadd.f32 %v1816, %v2140
      %v2245 = vadd.f32 %v1817, %v2141
      %v2246 = vadd.f32 %v1818, %v2142
      %v2247 = vadd.f32 %v1819, %v2143
      %v2248 = vadd.f32 %v1820, %v2144
      %v2249 = vadd.f32 %v1821, %v2145
      %v2250 = vadd.f32 %v1822, %v2146
      %v2251 = vadd.f32 %v1823, %v2147
      %v2252 = vadd.f32 %v1824, %v2148
      %v2253 = vadd.f32 %v1825, %v2149
      %v2254 = vadd.f32 %v1826, %v2150
      %v2255 = vadd.f32 %v1827, %v2151
      %v2256 = vadd.f32 %v1828, %v2152
      %v2257 = vadd.f32 %v1829, %v2153
      %v2258 = vadd.f32 %v1830, %v2154
      %v2259 = vadd.f32 %v1831, %v2155
      %v2260 = vadd.f32 %v1832, %v2156
      %v2261 = vadd.f32 %v1833, %v2157
      %v2262 = vadd.f32 %v1834, %v2158
      %v2263 = vadd.f32 %v1835, %v2159
      %v2264 = vadd.f32 %v1836, %v2160
      %v2265 = vadd.f32 %v1837, %v2161
      %v2266 = vadd.f32 %v1838, %v2162
      %v2267 = vadd.f32 %v1839, %v2163
      %v2268 = vadd.f32 %v1840, %v2164
      %v2269 = vadd.f32 %v1841, %v2165
      %v2270 = vadd.f32 %v1842, %v2166
      %v2271 = vadd.f32 %v1843, %v2167
      %v2272 = vadd.f32 %v1844, %v2168
      %v2273 = vadd.f32 %v1845, %v2169
      %v2274 = vadd.f32 %v1846, %v2170
      %v2275 = vadd.f32 %v1847, %v2171
      %v2276 = vadd.f32 %v1848, %v2172
      %v2277 = vadd.f32 %v1849, %v2173
      %v2278 = vadd.f32 %v1850, %v2174
      %v2279 = vadd.f32 %v1851, %v2175
      %v2280 = vadd.f32 %v1852, %v2176
      %v2281 = vadd.f32 %v1853, %v2177
      %v2282 = vadd.f32 %v1854, %v2178
      %v2283 = vadd.f32 %v1855, %v2179
      %v2284 = vadd.f32 %v1856, %v2180
      %v2285 = vadd.f32 %v1857, %v2181
      %s2286 = scalar_lea.vmem %s243, 4160
      %v2287 = vld [vmem:[%s2286] sm:$0xff]
      %v2288 = vld [vmem:[%s2286 + $0x8] sm:$0xff]
      %v2289 = vld [vmem:[%s2286 + $0x10] sm:$0xff]
      %v2290 = vld [vmem:[%s2286 + $0x18] sm:$0xff]
      %v2291 = vld [vmem:[%s2286 + $0x20] sm:$0xff]
      %v2292 = vld [vmem:[%s2286 + $0x28] sm:$0xff]
      %v2293 = vld [vmem:[%s2286 + $0x30] sm:$0xff]
      %v2294 = vld [vmem:[%s2286 + $0x38] sm:$0xff]
      %v2295 = vld [vmem:[%s2286 + $0x40] sm:$0xff]
      %v2296 = vld [vmem:[%s2286 + $0x48] sm:$0xff]
      %v2297 = vld [vmem:[%s2286 + $0x50] sm:$0xff]
      %v2298 = vld [vmem:[%s2286 + $0x58] sm:$0xff]
      %v2299 = vld [vmem:[%s2286 + $0x60] sm:$0xf]
      %v2300 = vld [vmem:[%s2286 + $0x68] sm:$0xff]
      %v2301 = vld [vmem:[%s2286 + $0x70] sm:$0xff]
      %v2302 = vld [vmem:[%s2286 + $0x78] sm:$0xff]
      %v2303 = vld [vmem:[%s2286 + $0x80] sm:$0xff]
      %v2304 = vld [vmem:[%s2286 + $0x88] sm:$0xff]
      %v2305 = vld [vmem:[%s2286 + $0x90] sm:$0xff]
      %v2306 = vld [vmem:[%s2286 + $0x98] sm:$0xff]
      %v2307 = vld [vmem:[%s2286 + $0xa0] sm:$0xff]
      %v2308 = vld [vmem:[%s2286 + $0xa8] sm:$0xff]
      %v2309 = vld [vmem:[%s2286 + $0xb0] sm:$0xff]
      %v2310 = vld [vmem:[%s2286 + $0xb8] sm:$0xff]
      %v2311 = vld [vmem:[%s2286 + $0xc0] sm:$0xff]
      %v2312 = vld [vmem:[%s2286 + $0xc8] sm:$0xf]
      %v2313 = vld [vmem:[%s2286 + $0xd0] sm:$0xff]
      %v2314 = vld [vmem:[%s2286 + $0xd8] sm:$0xff]
      %v2315 = vld [vmem:[%s2286 + $0xe0] sm:$0xff]
      %v2316 = vld [vmem:[%s2286 + $0xe8] sm:$0xff]
      %v2317 = vld [vmem:[%s2286 + $0xf0] sm:$0xff]
      %v2318 = vld [vmem:[%s2286 + $0xf8] sm:$0xff]
      %v2319 = vld [vmem:[%s2286 + $0x100] sm:$0xff]
      %v2320 = vld [vmem:[%s2286 + $0x108] sm:$0xff]
      %v2321 = vld [vmem:[%s2286 + $0x110] sm:$0xff]
      %v2322 = vld [vmem:[%s2286 + $0x118] sm:$0xff]
      %v2323 = vld [vmem:[%s2286 + $0x120] sm:$0xff]
      %v2324 = vld [vmem:[%s2286 + $0x128] sm:$0xff]
      %v2325 = vld [vmem:[%s2286 + $0x130] sm:$0xf]
      %v2326 = vld [vmem:[%s2286 + $0x138] sm:$0xff]
      %v2327 = vld [vmem:[%s2286 + $0x140] sm:$0xff]
      %v2328 = vld [vmem:[%s2286 + $0x148] sm:$0xff]
      %v2329 = vld [vmem:[%s2286 + $0x150] sm:$0xff]
      %v2330 = vld [vmem:[%s2286 + $0x158] sm:$0xff]
      %v2331 = vld [vmem:[%s2286 + $0x160] sm:$0xff]
      %v2332 = vld [vmem:[%s2286 + $0x168] sm:$0xff]
      %v2333 = vld [vmem:[%s2286 + $0x170] sm:$0xff]
      %v2334 = vld [vmem:[%s2286 + $0x178] sm:$0xff]
      %v2335 = vld [vmem:[%s2286 + $0x180] sm:$0xff]
      %v2336 = vld [vmem:[%s2286 + $0x188] sm:$0xff]
      %v2337 = vld [vmem:[%s2286 + $0x190] sm:$0xff]
      %v2338 = vld [vmem:[%s2286 + $0x198] sm:$0xf]
      %v2339 = vld [vmem:[%s2286 + $0x1a0] sm:$0xff]
      %v2340 = vld [vmem:[%s2286 + $0x1a8] sm:$0xff]
      %v2341 = vld [vmem:[%s2286 + $0x1b0] sm:$0xff]
      %v2342 = vld [vmem:[%s2286 + $0x1b8] sm:$0xff]
      %v2343 = vld [vmem:[%s2286 + $0x1c0] sm:$0xff]
      %v2344 = vld [vmem:[%s2286 + $0x1c8] sm:$0xff]
      %v2345 = vld [vmem:[%s2286 + $0x1d0] sm:$0xff]
      %v2346 = vld [vmem:[%s2286 + $0x1d8] sm:$0xff]
      %v2347 = vld [vmem:[%s2286 + $0x1e0] sm:$0xff]
      %v2348 = vld [vmem:[%s2286 + $0x1e8] sm:$0xff]
      %v2349 = vld [vmem:[%s2286 + $0x1f0] sm:$0xff]
      %v2350 = vld [vmem:[%s2286 + $0x1f8] sm:$0xff]
      %v2351 = vld [vmem:[%s2286 + $0x200] sm:$0xf]
      %v2352 = vld [vmem:[%s2286 + $0x208] sm:$0xff]
      %v2353 = vld [vmem:[%s2286 + $0x210] sm:$0xff]
      %v2354 = vld [vmem:[%s2286 + $0x218] sm:$0xff]
      %v2355 = vld [vmem:[%s2286 + $0x220] sm:$0xff]
      %v2356 = vld [vmem:[%s2286 + $0x228] sm:$0xff]
      %v2357 = vld [vmem:[%s2286 + $0x230] sm:$0xff]
      %v2358 = vld [vmem:[%s2286 + $0x238] sm:$0xff]
      %v2359 = vld [vmem:[%s2286 + $0x240] sm:$0xff]
      %v2360 = vld [vmem:[%s2286 + $0x248] sm:$0xff]
      %v2361 = vld [vmem:[%s2286 + $0x250] sm:$0xff]
      %v2362 = vld [vmem:[%s2286 + $0x258] sm:$0xff]
      %v2363 = vld [vmem:[%s2286 + $0x260] sm:$0xff]
      %v2364 = vld [vmem:[%s2286 + $0x268] sm:$0xf]
      %v2365 = vld [vmem:[%s2286 + $0x270] sm:$0xff]
      %v2366 = vld [vmem:[%s2286 + $0x278] sm:$0xff]
      %v2367 = vld [vmem:[%s2286 + $0x280] sm:$0xff]
      %v2368 = vld [vmem:[%s2286 + $0x288] sm:$0xff]
      %v2369 = vld [vmem:[%s2286 + $0x290] sm:$0xff]
      %v2370 = vld [vmem:[%s2286 + $0x298] sm:$0xff]
      %v2371 = vld [vmem:[%s2286 + $0x2a0] sm:$0xff]
      %v2372 = vld [vmem:[%s2286 + $0x2a8] sm:$0xff]
      %v2373 = vld [vmem:[%s2286 + $0x2b0] sm:$0xff]
      %v2374 = vld [vmem:[%s2286 + $0x2b8] sm:$0xff]
      %v2375 = vld [vmem:[%s2286 + $0x2c0] sm:$0xff]
      %v2376 = vld [vmem:[%s2286 + $0x2c8] sm:$0xff]
      %v2377 = vld [vmem:[%s2286 + $0x2d0] sm:$0xf]
      %v2378 = vld [vmem:[%s2286 + $0x2d8] sm:$0xff]
      %v2379 = vld [vmem:[%s2286 + $0x2e0] sm:$0xff]
      %v2380 = vld [vmem:[%s2286 + $0x2e8] sm:$0xff]
      %v2381 = vld [vmem:[%s2286 + $0x2f0] sm:$0xff]
      %v2382 = vld [vmem:[%s2286 + $0x2f8] sm:$0xff]
      %v2383 = vld [vmem:[%s2286 + $0x300] sm:$0xff]
      %v2384 = vld [vmem:[%s2286 + $0x308] sm:$0xff]
      %v2385 = vld [vmem:[%s2286 + $0x310] sm:$0xff]
      %v2386 = vld [vmem:[%s2286 + $0x318] sm:$0xff]
      %v2387 = vld [vmem:[%s2286 + $0x320] sm:$0xff]
      %v2388 = vld [vmem:[%s2286 + $0x328] sm:$0xff]
      %v2389 = vld [vmem:[%s2286 + $0x330] sm:$0xff]
      %v2390 = vld [vmem:[%s2286 + $0x338] sm:$0xf]
      %v2391 = vtanh.pop %v2287
      %v2392 = vtanh.pop %v2288
      %v2393 = vtanh.pop %v2289
      %v2394 = vtanh.pop %v2290
      %v2395 = vtanh.pop %v2291
      %v2396 = vtanh.pop %v2292
      %v2397 = vtanh.pop %v2293
      %v2398 = vtanh.pop %v2294
      %v2399 = vtanh.pop %v2295
      %v2400 = vtanh.pop %v2296
      %v2401 = vtanh.pop %v2297
      %v2402 = vtanh.pop %v2298
      %v2403 = vtanh.pop %v2299
      %v2404 = vtanh.pop %v2300
      %v2405 = vtanh.pop %v2301
      %v2406 = vtanh.pop %v2302
      %v2407 = vtanh.pop %v2303
      %v2408 = vtanh.pop %v2304
      %v2409 = vtanh.pop %v2305
      %v2410 = vtanh.pop %v2306
      %v2411 = vtanh.pop %v2307
      %v2412 = vtanh.pop %v2308
      %v2413 = vtanh.pop %v2309
      %v2414 = vtanh.pop %v2310
      %v2415 = vtanh.pop %v2311
      %v2416 = vtanh.pop %v2312
      %v2417 = vtanh.pop %v2313
      %v2418 = vtanh.pop %v2314
      %v2419 = vtanh.pop %v2315
      %v2420 = vtanh.pop %v2316
      %v2421 = vtanh.pop %v2317
      %v2422 = vtanh.pop %v2318
      %v2423 = vtanh.pop %v2319
      %v2424 = vtanh.pop %v2320
      %v2425 = vtanh.pop %v2321
      %v2426 = vtanh.pop %v2322
      %v2427 = vtanh.pop %v2323
      %v2428 = vtanh.pop %v2324
      %v2429 = vtanh.pop %v2325
      %v2430 = vtanh.pop %v2326
      %v2431 = vtanh.pop %v2327
      %v2432 = vtanh.pop %v2328
      %v2433 = vtanh.pop %v2329
      %v2434 = vtanh.pop %v2330
      %v2435 = vtanh.pop %v2331
      %v2436 = vtanh.pop %v2332
      %v2437 = vtanh.pop %v2333
      %v2438 = vtanh.pop %v2334
      %v2439 = vtanh.pop %v2335
      %v2440 = vtanh.pop %v2336
      %v2441 = vtanh.pop %v2337
      %v2442 = vtanh.pop %v2338
      %v2443 = vtanh.pop %v2339
      %v2444 = vtanh.pop %v2340
      %v2445 = vtanh.pop %v2341
      %v2446 = vtanh.pop %v2342
      %v2447 = vtanh.pop %v2343
      %v2448 = vtanh.pop %v2344
      %v2449 = vtanh.pop %v2345
      %v2450 = vtanh.pop %v2346
      %v2451 = vtanh.pop %v2347
      %v2452 = vtanh.pop %v2348
      %v2453 = vtanh.pop %v2349
      %v2454 = vtanh.pop %v2350
      %v2455 = vtanh.pop %v2351
      %v2456 = vtanh.pop %v2352
      %v2457 = vtanh.pop %v2353
      %v2458 = vtanh.pop %v2354
      %v2459 = vtanh.pop %v2355
      %v2460 = vtanh.pop %v2356
      %v2461 = vtanh.pop %v2357
      %v2462 = vtanh.pop %v2358
      %v2463 = vtanh.pop %v2359
      %v2464 = vtanh.pop %v2360
      %v2465 = vtanh.pop %v2361
      %v2466 = vtanh.pop %v2362
      %v2467 = vtanh.pop %v2363
      %v2468 = vtanh.pop %v2364
      %v2469 = vtanh.pop %v2365
      %v2470 = vtanh.pop %v2366
      %v2471 = vtanh.pop %v2367
      %v2472 = vtanh.pop %v2368
      %v2473 = vtanh.pop %v2369
      %v2474 = vtanh.pop %v2370
      %v2475 = vtanh.pop %v2371
      %v2476 = vtanh.pop %v2372
      %v2477 = vtanh.pop %v2373
      %v2478 = vtanh.pop %v2374
      %v2479 = vtanh.pop %v2375
      %v2480 = vtanh.pop %v2376
      %v2481 = vtanh.pop %v2377
      %v2482 = vtanh.pop %v2378
      %v2483 = vtanh.pop %v2379
      %v2484 = vtanh.pop %v2380
      %v2485 = vtanh.pop %v2381
      %v2486 = vtanh.pop %v2382
      %v2487 = vtanh.pop %v2383
      %v2488 = vtanh.pop %v2384
      %v2489 = vtanh.pop %v2385
      %v2490 = vtanh.pop %v2386
      %v2491 = vtanh.pop %v2387
      %v2492 = vtanh.pop %v2388
      %v2493 = vtanh.pop %v2389
      %v2494 = vtanh.pop %v2390
      %s2495 = scalar_lea.vmem %s233, 5
      %v2496 = vld [vmem:[%s2495] sm:$0x1]
      %v2498 = vlaneseq
      %v2499 = vshrl.u32 %v2498, 7
      %v2500 = vsub.s32 0, %v2499
      %v2501 = vrot.slane %v2496, %v2500
      %2502 = vset.pattern.permute.xlu0 0
      %2503 = vperm.xlu0 %2502, %v2501
      %v2504 = vpop.permute.xlu0 %2503
      %v2506 = vmul.f32 %v2391, %v2504
      %v2507 = vmul.f32 %v2392, %v2504
      %v2508 = vmul.f32 %v2393, %v2504
      %v2509 = vmul.f32 %v2394, %v2504
      %v2510 = vmul.f32 %v2395, %v2504
      %v2511 = vmul.f32 %v2396, %v2504
      %v2512 = vmul.f32 %v2397, %v2504
      %v2513 = vmul.f32 %v2398, %v2504
      %v2514 = vmul.f32 %v2399, %v2504
      %v2515 = vmul.f32 %v2400, %v2504
      %v2516 = vmul.f32 %v2401, %v2504
      %v2517 = vmul.f32 %v2402, %v2504
      %v2518 = vmul.f32 %v2403, %v2504
      %v2519 = vmul.f32 %v2404, %v2504
      %v2520 = vmul.f32 %v2405, %v2504
      %v2521 = vmul.f32 %v2406, %v2504
      %v2522 = vmul.f32 %v2407, %v2504
      %v2523 = vmul.f32 %v2408, %v2504
      %v2524 = vmul.f32 %v2409, %v2504
      %v2525 = vmul.f32 %v2410, %v2504
      %v2526 = vmul.f32 %v2411, %v2504
      %v2527 = vmul.f32 %v2412, %v2504
      %v2528 = vmul.f32 %v2413, %v2504
      %v2529 = vmul.f32 %v2414, %v2504
      %v2530 = vmul.f32 %v2415, %v2504
      %v2531 = vmul.f32 %v2416, %v2504
      %v2532 = vmul.f32 %v2417, %v2504
      %v2533 = vmul.f32 %v2418, %v2504
      %v2534 = vmul.f32 %v2419, %v2504
      %v2535 = vmul.f32 %v2420, %v2504
      %v2536 = vmul.f32 %v2421, %v2504
      %v2537 = vmul.f32 %v2422, %v2504
      %v2538 = vmul.f32 %v2423, %v2504
      %v2539 = vmul.f32 %v2424, %v2504
      %v2540 = vmul.f32 %v2425, %v2504
      %v2541 = vmul.f32 %v2426, %v2504
      %v2542 = vmul.f32 %v2427, %v2504
      %v2543 = vmul.f32 %v2428, %v2504
      %v2544 = vmul.f32 %v2429, %v2504
      %v2545 = vmul.f32 %v2430, %v2504
      %v2546 = vmul.f32 %v2431, %v2504
      %v2547 = vmul.f32 %v2432, %v2504
      %v2548 = vmul.f32 %v2433, %v2504
      %v2549 = vmul.f32 %v2434, %v2504
      %v2550 = vmul.f32 %v2435, %v2504
      %v2551 = vmul.f32 %v2436, %v2504
      %v2552 = vmul.f32 %v2437, %v2504
      %v2553 = vmul.f32 %v2438, %v2504
      %v2554 = vmul.f32 %v2439, %v2504
      %v2555 = vmul.f32 %v2440, %v2504
      %v2556 = vmul.f32 %v2441, %v2504
      %v2557 = vmul.f32 %v2442, %v2504
      %v2558 = vmul.f32 %v2443, %v2504
      %v2559 = vmul.f32 %v2444, %v2504
      %v2560 = vmul.f32 %v2445, %v2504
      %v2561 = vmul.f32 %v2446, %v2504
      %v2562 = vmul.f32 %v2447, %v2504
      %v2563 = vmul.f32 %v2448, %v2504
      %v2564 = vmul.f32 %v2449, %v2504
      %v2565 = vmul.f32 %v2450, %v2504
      %v2566 = vmul.f32 %v2451, %v2504
      %v2567 = vmul.f32 %v2452, %v2504
      %v2568 = vmul.f32 %v2453, %v2504
      %v2569 = vmul.f32 %v2454, %v2504
      %v2570 = vmul.f32 %v2455, %v2504
      %v2571 = vmul.f32 %v2456, %v2504
      %v2572 = vmul.f32 %v2457, %v2504
      %v2573 = vmul.f32 %v2458, %v2504
      %v2574 = vmul.f32 %v2459, %v2504
      %v2575 = vmul.f32 %v2460, %v2504
      %v2576 = vmul.f32 %v2461, %v2504
      %v2577 = vmul.f32 %v2462, %v2504
      %v2578 = vmul.f32 %v2463, %v2504
      %v2579 = vmul.f32 %v2464, %v2504
      %v2580 = vmul.f32 %v2465, %v2504
      %v2581 = vmul.f32 %v2466, %v2504
      %v2582 = vmul.f32 %v2467, %v2504
      %v2583 = vmul.f32 %v2468, %v2504
      %v2584 = vmul.f32 %v2469, %v2504
      %v2585 = vmul.f32 %v2470, %v2504
      %v2586 = vmul.f32 %v2471, %v2504
      %v2587 = vmul.f32 %v2472, %v2504
      %v2588 = vmul.f32 %v2473, %v2504
      %v2589 = vmul.f32 %v2474, %v2504
      %v2590 = vmul.f32 %v2475, %v2504
      %v2591 = vmul.f32 %v2476, %v2504
      %v2592 = vmul.f32 %v2477, %v2504
      %v2593 = vmul.f32 %v2478, %v2504
      %v2594 = vmul.f32 %v2479, %v2504
      %v2595 = vmul.f32 %v2480, %v2504
      %v2596 = vmul.f32 %v2481, %v2504
      %v2597 = vmul.f32 %v2482, %v2504
      %v2598 = vmul.f32 %v2483, %v2504
      %v2599 = vmul.f32 %v2484, %v2504
      %v2600 = vmul.f32 %v2485, %v2504
      %v2601 = vmul.f32 %v2486, %v2504
      %v2602 = vmul.f32 %v2487, %v2504
      %v2603 = vmul.f32 %v2488, %v2504
      %v2604 = vmul.f32 %v2489, %v2504
      %v2605 = vmul.f32 %v2490, %v2504
      %v2606 = vmul.f32 %v2491, %v2504
      %v2607 = vmul.f32 %v2492, %v2504
      %v2608 = vmul.f32 %v2493, %v2504
      %v2609 = vmul.f32 %v2494, %v2504
      %v2610 = vadd.f32 %v2182, %v2506
      %v2611 = vadd.f32 %v2183, %v2507
      %v2612 = vadd.f32 %v2184, %v2508
      %v2613 = vadd.f32 %v2185, %v2509
      %v2614 = vadd.f32 %v2186, %v2510
      %v2615 = vadd.f32 %v2187, %v2511
      %v2616 = vadd.f32 %v2188, %v2512
      %v2617 = vadd.f32 %v2189, %v2513
      %v2618 = vadd.f32 %v2190, %v2514
      %v2619 = vadd.f32 %v2191, %v2515
      %v2620 = vadd.f32 %v2192, %v2516
      %v2621 = vadd.f32 %v2193, %v2517
      %v2622 = vadd.f32 %v2194, %v2518
      %v2623 = vadd.f32 %v2195, %v2519
      %v2624 = vadd.f32 %v2196, %v2520
      %v2625 = vadd.f32 %v2197, %v2521
      %v2626 = vadd.f32 %v2198, %v2522
      %v2627 = vadd.f32 %v2199, %v2523
      %v2628 = vadd.f32 %v2200, %v2524
      %v2629 = vadd.f32 %v2201, %v2525
      %v2630 = vadd.f32 %v2202, %v2526
      %v2631 = vadd.f32 %v2203, %v2527
      %v2632 = vadd.f32 %v2204, %v2528
      %v2633 = vadd.f32 %v2205, %v2529
      %v2634 = vadd.f32 %v2206, %v2530
      %v2635 = vadd.f32 %v2207, %v2531
      %v2636 = vadd.f32 %v2208, %v2532
      %v2637 = vadd.f32 %v2209, %v2533
      %v2638 = vadd.f32 %v2210, %v2534
      %v2639 = vadd.f32 %v2211, %v2535
      %v2640 = vadd.f32 %v2212, %v2536
      %v2641 = vadd.f32 %v2213, %v2537
      %v2642 = vadd.f32 %v2214, %v2538
      %v2643 = vadd.f32 %v2215, %v2539
      %v2644 = vadd.f32 %v2216, %v2540
      %v2645 = vadd.f32 %v2217, %v2541
      %v2646 = vadd.f32 %v2218, %v2542
      %v2647 = vadd.f32 %v2219, %v2543
      %v2648 = vadd.f32 %v2220, %v2544
      %v2649 = vadd.f32 %v2221, %v2545
      %v2650 = vadd.f32 %v2222, %v2546
      %v2651 = vadd.f32 %v2223, %v2547
      %v2652 = vadd.f32 %v2224, %v2548
      %v2653 = vadd.f32 %v2225, %v2549
      %v2654 = vadd.f32 %v2226, %v2550
      %v2655 = vadd.f32 %v2227, %v2551
      %v2656 = vadd.f32 %v2228, %v2552
      %v2657 = vadd.f32 %v2229, %v2553
      %v2658 = vadd.f32 %v2230, %v2554
      %v2659 = vadd.f32 %v2231, %v2555
      %v2660 = vadd.f32 %v2232, %v2556
      %v2661 = vadd.f32 %v2233, %v2557
      %v2662 = vadd.f32 %v2234, %v2558
      %v2663 = vadd.f32 %v2235, %v2559
      %v2664 = vadd.f32 %v2236, %v2560
      %v2665 = vadd.f32 %v2237, %v2561
      %v2666 = vadd.f32 %v2238, %v2562
      %v2667 = vadd.f32 %v2239, %v2563
      %v2668 = vadd.f32 %v2240, %v2564
      %v2669 = vadd.f32 %v2241, %v2565
      %v2670 = vadd.f32 %v2242, %v2566
      %v2671 = vadd.f32 %v2243, %v2567
      %v2672 = vadd.f32 %v2244, %v2568
      %v2673 = vadd.f32 %v2245, %v2569
      %v2674 = vadd.f32 %v2246, %v2570
      %v2675 = vadd.f32 %v2247, %v2571
      %v2676 = vadd.f32 %v2248, %v2572
      %v2677 = vadd.f32 %v2249, %v2573
      %v2678 = vadd.f32 %v2250, %v2574
      %v2679 = vadd.f32 %v2251, %v2575
      %v2680 = vadd.f32 %v2252, %v2576
      %v2681 = vadd.f32 %v2253, %v2577
      %v2682 = vadd.f32 %v2254, %v2578
      %v2683 = vadd.f32 %v2255, %v2579
      %v2684 = vadd.f32 %v2256, %v2580
      %v2685 = vadd.f32 %v2257, %v2581
      %v2686 = vadd.f32 %v2258, %v2582
      %v2687 = vadd.f32 %v2259, %v2583
      %v2688 = vadd.f32 %v2260, %v2584
      %v2689 = vadd.f32 %v2261, %v2585
      %v2690 = vadd.f32 %v2262, %v2586
      %v2691 = vadd.f32 %v2263, %v2587
      %v2692 = vadd.f32 %v2264, %v2588
      %v2693 = vadd.f32 %v2265, %v2589
      %v2694 = vadd.f32 %v2266, %v2590
      %v2695 = vadd.f32 %v2267, %v2591
      %v2696 = vadd.f32 %v2268, %v2592
      %v2697 = vadd.f32 %v2269, %v2593
      %v2698 = vadd.f32 %v2270, %v2594
      %v2699 = vadd.f32 %v2271, %v2595
      %v2700 = vadd.f32 %v2272, %v2596
      %v2701 = vadd.f32 %v2273, %v2597
      %v2702 = vadd.f32 %v2274, %v2598
      %v2703 = vadd.f32 %v2275, %v2599
      %v2704 = vadd.f32 %v2276, %v2600
      %v2705 = vadd.f32 %v2277, %v2601
      %v2706 = vadd.f32 %v2278, %v2602
      %v2707 = vadd.f32 %v2279, %v2603
      %v2708 = vadd.f32 %v2280, %v2604
      %v2709 = vadd.f32 %v2281, %v2605
      %v2710 = vadd.f32 %v2282, %v2606
      %v2711 = vadd.f32 %v2283, %v2607
      %v2712 = vadd.f32 %v2284, %v2608
      %v2713 = vadd.f32 %v2285, %v2609
      %vm2714 = vcmask 818176
      %v2715 = vsel %vm2714, %v2610, -inf
      %2716 = vmax.xlane.f32.xlu0 %v2715
      %v2717 = vpop.xlane.xlu0 %2716
      %v2718 = vsel %vm2714, %v2611, -inf
      %2719 = vmax.xlane.f32.xlu0 %v2718
      %v2720 = vpop.xlane.xlu0 %2719
      %v2721 = vsel %vm2714, %v2612, -inf
      %2722 = vmax.xlane.f32.xlu0 %v2721
      %v2723 = vpop.xlane.xlu0 %2722
      %v2724 = vsel %vm2714, %v2613, -inf
      %2725 = vmax.xlane.f32.xlu0 %v2724
      %v2726 = vpop.xlane.xlu0 %2725
      %v2727 = vsel %vm2714, %v2614, -inf
      %2728 = vmax.xlane.f32.xlu0 %v2727
      %v2729 = vpop.xlane.xlu0 %2728
      %v2730 = vsel %vm2714, %v2615, -inf
      %2731 = vmax.xlane.f32.xlu0 %v2730
      %v2732 = vpop.xlane.xlu0 %2731
      %v2733 = vsel %vm2714, %v2616, -inf
      %2734 = vmax.xlane.f32.xlu0 %v2733
      %v2735 = vpop.xlane.xlu0 %2734
      %v2736 = vsel %vm2714, %v2617, -inf
      %2737 = vmax.xlane.f32.xlu0 %v2736
      %v2738 = vpop.xlane.xlu0 %2737
      %v2739 = vsel %vm2714, %v2618, -inf
      %2740 = vmax.xlane.f32.xlu0 %v2739
      %v2741 = vpop.xlane.xlu0 %2740
      %v2742 = vsel %vm2714, %v2619, -inf
      %2743 = vmax.xlane.f32.xlu0 %v2742
      %v2744 = vpop.xlane.xlu0 %2743
      %v2745 = vsel %vm2714, %v2620, -inf
      %2746 = vmax.xlane.f32.xlu0 %v2745
      %v2747 = vpop.xlane.xlu0 %2746
      %v2748 = vsel %vm2714, %v2621, -inf
      %2749 = vmax.xlane.f32.xlu0 %v2748
      %v2750 = vpop.xlane.xlu0 %2749
      %vm2751 = vcmask 814080
      %v2752 = vsel %vm2751, %v2622, -inf
      %2753 = vmax.xlane.f32.xlu0 %v2752
      %v2754 = vpop.xlane.xlu0 %2753
      %v2755 = vsel %vm2714, %v2623, -inf
      %2756 = vmax.xlane.f32.xlu0 %v2755
      %v2757 = vpop.xlane.xlu0 %2756
      %v2758 = vsel %vm2714, %v2624, -inf
      %2759 = vmax.xlane.f32.xlu0 %v2758
      %v2760 = vpop.xlane.xlu0 %2759
      %v2761 = vsel %vm2714, %v2625, -inf
      %2762 = vmax.xlane.f32.xlu0 %v2761
      %v2763 = vpop.xlane.xlu0 %2762
      %v2764 = vsel %vm2714, %v2626, -inf
      %2765 = vmax.xlane.f32.xlu0 %v2764
      %v2766 = vpop.xlane.xlu0 %2765
      %v2767 = vsel %vm2714, %v2627, -inf
      %2768 = vmax.xlane.f32.xlu0 %v2767
      %v2769 = vpop.xlane.xlu0 %2768
      %v2770 = vsel %vm2714, %v2628, -inf
      %2771 = vmax.xlane.f32.xlu0 %v2770
      %v2772 = vpop.xlane.xlu0 %2771
      %v2773 = vsel %vm2714, %v2629, -inf
      %2774 = vmax.xlane.f32.xlu0 %v2773
      %v2775 = vpop.xlane.xlu0 %2774
      %v2776 = vsel %vm2714, %v2630, -inf
      %2777 = vmax.xlane.f32.xlu0 %v2776
      %v2778 = vpop.xlane.xlu0 %2777
      %v2779 = vsel %vm2714, %v2631, -inf
      %2780 = vmax.xlane.f32.xlu0 %v2779
      %v2781 = vpop.xlane.xlu0 %2780
      %v2782 = vsel %vm2714, %v2632, -inf
      %2783 = vmax.xlane.f32.xlu0 %v2782
      %v2784 = vpop.xlane.xlu0 %2783
      %v2785 = vsel %vm2714, %v2633, -inf
      %2786 = vmax.xlane.f32.xlu0 %v2785
      %v2787 = vpop.xlane.xlu0 %2786
      %v2788 = vsel %vm2714, %v2634, -inf
      %2789 = vmax.xlane.f32.xlu0 %v2788
      %v2790 = vpop.xlane.xlu0 %2789
      %v2791 = vsel %vm2751, %v2635, -inf
      %2792 = vmax.xlane.f32.xlu0 %v2791
      %v2793 = vpop.xlane.xlu0 %2792
      %v2794 = vsel %vm2714, %v2636, -inf
      %2795 = vmax.xlane.f32.xlu0 %v2794
      %v2796 = vpop.xlane.xlu0 %2795
      %v2797 = vsel %vm2714, %v2637, -inf
      %2798 = vmax.xlane.f32.xlu0 %v2797
      %v2799 = vpop.xlane.xlu0 %2798
      %v2800 = vsel %vm2714, %v2638, -inf
      %2801 = vmax.xlane.f32.xlu0 %v2800
      %v2802 = vpop.xlane.xlu0 %2801
      %v2803 = vsel %vm2714, %v2639, -inf
      %2804 = vmax.xlane.f32.xlu0 %v2803
      %v2805 = vpop.xlane.xlu0 %2804
      %v2806 = vsel %vm2714, %v2640, -inf
      %2807 = vmax.xlane.f32.xlu0 %v2806
      %v2808 = vpop.xlane.xlu0 %2807
      %v2809 = vsel %vm2714, %v2641, -inf
      %2810 = vmax.xlane.f32.xlu0 %v2809
      %v2811 = vpop.xlane.xlu0 %2810
      %v2812 = vsel %vm2714, %v2642, -inf
      %2813 = vmax.xlane.f32.xlu0 %v2812
      %v2814 = vpop.xlane.xlu0 %2813
      %v2815 = vsel %vm2714, %v2643, -inf
      %2816 = vmax.xlane.f32.xlu0 %v2815
      %v2817 = vpop.xlane.xlu0 %2816
      %v2818 = vsel %vm2714, %v2644, -inf
      %2819 = vmax.xlane.f32.xlu0 %v2818
      %v2820 = vpop.xlane.xlu0 %2819
      %v2821 = vsel %vm2714, %v2645, -inf
      %2822 = vmax.xlane.f32.xlu0 %v2821
      %v2823 = vpop.xlane.xlu0 %2822
      %v2824 = vsel %vm2714, %v2646, -inf
      %2825 = vmax.xlane.f32.xlu0 %v2824
      %v2826 = vpop.xlane.xlu0 %2825
      %v2827 = vsel %vm2714, %v2647, -inf
      %2828 = vmax.xlane.f32.xlu0 %v2827
      %v2829 = vpop.xlane.xlu0 %2828
      %v2830 = vsel %vm2751, %v2648, -inf
      %2831 = vmax.xlane.f32.xlu0 %v2830
      %v2832 = vpop.xlane.xlu0 %2831
      %v2833 = vsel %vm2714, %v2649, -inf
      %2834 = vmax.xlane.f32.xlu0 %v2833
      %v2835 = vpop.xlane.xlu0 %2834
      %v2836 = vsel %vm2714, %v2650, -inf
      %2837 = vmax.xlane.f32.xlu0 %v2836
      %v2838 = vpop.xlane.xlu0 %2837
      %v2839 = vsel %vm2714, %v2651, -inf
      %2840 = vmax.xlane.f32.xlu0 %v2839
      %v2841 = vpop.xlane.xlu0 %2840
      %v2842 = vsel %vm2714, %v2652, -inf
      %2843 = vmax.xlane.f32.xlu0 %v2842
      %v2844 = vpop.xlane.xlu0 %2843
      %v2845 = vsel %vm2714, %v2653, -inf
      %2846 = vmax.xlane.f32.xlu0 %v2845
      %v2847 = vpop.xlane.xlu0 %2846
      %v2848 = vsel %vm2714, %v2654, -inf
      %2849 = vmax.xlane.f32.xlu0 %v2848
      %v2850 = vpop.xlane.xlu0 %2849
      %v2851 = vsel %vm2714, %v2655, -inf
      %2852 = vmax.xlane.f32.xlu0 %v2851
      %v2853 = vpop.xlane.xlu0 %2852
      %v2854 = vsel %vm2714, %v2656, -inf
      %2855 = vmax.xlane.f32.xlu0 %v2854
      %v2856 = vpop.xlane.xlu0 %2855
      %v2857 = vsel %vm2714, %v2657, -inf
      %2858 = vmax.xlane.f32.xlu0 %v2857
      %v2859 = vpop.xlane.xlu0 %2858
      %v2860 = vsel %vm2714, %v2658, -inf
      %2861 = vmax.xlane.f32.xlu0 %v2860
      %v2862 = vpop.xlane.xlu0 %2861
      %v2863 = vsel %vm2714, %v2659, -inf
      %2864 = vmax.xlane.f32.xlu0 %v2863
      %v2865 = vpop.xlane.xlu0 %2864
      %v2866 = vsel %vm2714, %v2660, -inf
      %2867 = vmax.xlane.f32.xlu0 %v2866
      %v2868 = vpop.xlane.xlu0 %2867
      %v2869 = vsel %vm2751, %v2661, -inf
      %2870 = vmax.xlane.f32.xlu0 %v2869
      %v2871 = vpop.xlane.xlu0 %2870
      %v2872 = vsel %vm2714, %v2662, -inf
      %2873 = vmax.xlane.f32.xlu0 %v2872
      %v2874 = vpop.xlane.xlu0 %2873
      %v2875 = vsel %vm2714, %v2663, -inf
      %2876 = vmax.xlane.f32.xlu0 %v2875
      %v2877 = vpop.xlane.xlu0 %2876
      %v2878 = vsel %vm2714, %v2664, -inf
      %2879 = vmax.xlane.f32.xlu0 %v2878
      %v2880 = vpop.xlane.xlu0 %2879
      %v2881 = vsel %vm2714, %v2665, -inf
      %2882 = vmax.xlane.f32.xlu0 %v2881
      %v2883 = vpop.xlane.xlu0 %2882
      %v2884 = vsel %vm2714, %v2666, -inf
      %2885 = vmax.xlane.f32.xlu0 %v2884
      %v2886 = vpop.xlane.xlu0 %2885
      %v2887 = vsel %vm2714, %v2667, -inf
      %2888 = vmax.xlane.f32.xlu0 %v2887
      %v2889 = vpop.xlane.xlu0 %2888
      %v2890 = vsel %vm2714, %v2668, -inf
      %2891 = vmax.xlane.f32.xlu0 %v2890
      %v2892 = vpop.xlane.xlu0 %2891
      %v2893 = vsel %vm2714, %v2669, -inf
      %2894 = vmax.xlane.f32.xlu0 %v2893
      %v2895 = vpop.xlane.xlu0 %2894
      %v2896 = vsel %vm2714, %v2670, -inf
      %2897 = vmax.xlane.f32.xlu0 %v2896
      %v2898 = vpop.xlane.xlu0 %2897
      %v2899 = vsel %vm2714, %v2671, -inf
      %2900 = vmax.xlane.f32.xlu0 %v2899
      %v2901 = vpop.xlane.xlu0 %2900
      %v2902 = vsel %vm2714, %v2672, -inf
      %2903 = vmax.xlane.f32.xlu0 %v2902
      %v2904 = vpop.xlane.xlu0 %2903
      %v2905 = vsel %vm2714, %v2673, -inf
      %2906 = vmax.xlane.f32.xlu0 %v2905
      %v2907 = vpop.xlane.xlu0 %2906
      %v2908 = vsel %vm2751, %v2674, -inf
      %2909 = vmax.xlane.f32.xlu0 %v2908
      %v2910 = vpop.xlane.xlu0 %2909
      %v2911 = vsel %vm2714, %v2675, -inf
      %2912 = vmax.xlane.f32.xlu0 %v2911
      %v2913 = vpop.xlane.xlu0 %2912
      %v2914 = vsel %vm2714, %v2676, -inf
      %2915 = vmax.xlane.f32.xlu0 %v2914
      %v2916 = vpop.xlane.xlu0 %2915
      %v2917 = vsel %vm2714, %v2677, -inf
      %2918 = vmax.xlane.f32.xlu0 %v2917
      %v2919 = vpop.xlane.xlu0 %2918
      %v2920 = vsel %vm2714, %v2678, -inf
      %2921 = vmax.xlane.f32.xlu0 %v2920
      %v2922 = vpop.xlane.xlu0 %2921
      %v2923 = vsel %vm2714, %v2679, -inf
      %2924 = vmax.xlane.f32.xlu0 %v2923
      %v2925 = vpop.xlane.xlu0 %2924
      %v2926 = vsel %vm2714, %v2680, -inf
      %2927 = vmax.xlane.f32.xlu0 %v2926
      %v2928 = vpop.xlane.xlu0 %2927
      %v2929 = vsel %vm2714, %v2681, -inf
      %2930 = vmax.xlane.f32.xlu0 %v2929
      %v2931 = vpop.xlane.xlu0 %2930
      %v2932 = vsel %vm2714, %v2682, -inf
      %2933 = vmax.xlane.f32.xlu0 %v2932
      %v2934 = vpop.xlane.xlu0 %2933
      %v2935 = vsel %vm2714, %v2683, -inf
      %2936 = vmax.xlane.f32.xlu0 %v2935
      %v2937 = vpop.xlane.xlu0 %2936
      %v2938 = vsel %vm2714, %v2684, -inf
      %2939 = vmax.xlane.f32.xlu0 %v2938
      %v2940 = vpop.xlane.xlu0 %2939
      %v2941 = vsel %vm2714, %v2685, -inf
      %2942 = vmax.xlane.f32.xlu0 %v2941
      %v2943 = vpop.xlane.xlu0 %2942
      %v2944 = vsel %vm2714, %v2686, -inf
      %2945 = vmax.xlane.f32.xlu0 %v2944
      %v2946 = vpop.xlane.xlu0 %2945
      %v2947 = vsel %vm2751, %v2687, -inf
      %2948 = vmax.xlane.f32.xlu0 %v2947
      %v2949 = vpop.xlane.xlu0 %2948
      %v2950 = vsel %vm2714, %v2688, -inf
      %2951 = vmax.xlane.f32.xlu0 %v2950
      %v2952 = vpop.xlane.xlu0 %2951
      %v2953 = vsel %vm2714, %v2689, -inf
      %2954 = vmax.xlane.f32.xlu0 %v2953
      %v2955 = vpop.xlane.xlu0 %2954
      %v2956 = vsel %vm2714, %v2690, -inf
      %2957 = vmax.xlane.f32.xlu0 %v2956
      %v2958 = vpop.xlane.xlu0 %2957
      %v2959 = vsel %vm2714, %v2691, -inf
      %2960 = vmax.xlane.f32.xlu0 %v2959
      %v2961 = vpop.xlane.xlu0 %2960
      %v2962 = vsel %vm2714, %v2692, -inf
      %2963 = vmax.xlane.f32.xlu0 %v2962
      %v2964 = vpop.xlane.xlu0 %2963
      %v2965 = vsel %vm2714, %v2693, -inf
      %2966 = vmax.xlane.f32.xlu0 %v2965
      %v2967 = vpop.xlane.xlu0 %2966
      %v2968 = vsel %vm2714, %v2694, -inf
      %2969 = vmax.xlane.f32.xlu0 %v2968
      %v2970 = vpop.xlane.xlu0 %2969
      %v2971 = vsel %vm2714, %v2695, -inf
      %2972 = vmax.xlane.f32.xlu0 %v2971
      %v2973 = vpop.xlane.xlu0 %2972
      %v2974 = vsel %vm2714, %v2696, -inf
      %2975 = vmax.xlane.f32.xlu0 %v2974
      %v2976 = vpop.xlane.xlu0 %2975
      %v2977 = vsel %vm2714, %v2697, -inf
      %2978 = vmax.xlane.f32.xlu0 %v2977
      %v2979 = vpop.xlane.xlu0 %2978
      %v2980 = vsel %vm2714, %v2698, -inf
      %2981 = vmax.xlane.f32.xlu0 %v2980
      %v2982 = vpop.xlane.xlu0 %2981
      %v2983 = vsel %vm2714, %v2699, -inf
      %2984 = vmax.xlane.f32.xlu0 %v2983
      %v2985 = vpop.xlane.xlu0 %2984
      %v2986 = vsel %vm2751, %v2700, -inf
      %2987 = vmax.xlane.f32.xlu0 %v2986
      %v2988 = vpop.xlane.xlu0 %2987
      %v2989 = vsel %vm2714, %v2701, -inf
      %2990 = vmax.xlane.f32.xlu0 %v2989
      %v2991 = vpop.xlane.xlu0 %2990
      %v2992 = vsel %vm2714, %v2702, -inf
      %2993 = vmax.xlane.f32.xlu0 %v2992
      %v2994 = vpop.xlane.xlu0 %2993
      %v2995 = vsel %vm2714, %v2703, -inf
      %2996 = vmax.xlane.f32.xlu0 %v2995
      %v2997 = vpop.xlane.xlu0 %2996
      %v2998 = vsel %vm2714, %v2704, -inf
      %2999 = vmax.xlane.f32.xlu0 %v2998
      %v3000 = vpop.xlane.xlu0 %2999
      %v3001 = vsel %vm2714, %v2705, -inf
      %3002 = vmax.xlane.f32.xlu0 %v3001
      %v3003 = vpop.xlane.xlu0 %3002
      %v3004 = vsel %vm2714, %v2706, -inf
      %3005 = vmax.xlane.f32.xlu0 %v3004
      %v3006 = vpop.xlane.xlu0 %3005
      %v3007 = vsel %vm2714, %v2707, -inf
      %3008 = vmax.xlane.f32.xlu0 %v3007
      %v3009 = vpop.xlane.xlu0 %3008
      %v3010 = vsel %vm2714, %v2708, -inf
      %3011 = vmax.xlane.f32.xlu0 %v3010
      %v3012 = vpop.xlane.xlu0 %3011
      %v3013 = vsel %vm2714, %v2709, -inf
      %3014 = vmax.xlane.f32.xlu0 %v3013
      %v3015 = vpop.xlane.xlu0 %3014
      %v3016 = vsel %vm2714, %v2710, -inf
      %3017 = vmax.xlane.f32.xlu0 %v3016
      %v3018 = vpop.xlane.xlu0 %3017
      %v3019 = vsel %vm2714, %v2711, -inf
      %3020 = vmax.xlane.f32.xlu0 %v3019
      %v3021 = vpop.xlane.xlu0 %3020
      %v3022 = vsel %vm2714, %v2712, -inf
      %3023 = vmax.xlane.f32.xlu0 %v3022
      %v3024 = vpop.xlane.xlu0 %3023
      %v3025 = vsel %vm2751, %v2713, -inf
      %3026 = vmax.xlane.f32.xlu0 %v3025
      %v3027 = vpop.xlane.xlu0 %3026
      %v3028 = vmax.f32 %v2717, %v2720
      %v3029 = vmax.f32 %v3028, %v2723
      %v3030 = vmax.f32 %v3029, %v2726
      %v3031 = vmax.f32 %v3030, %v2729
      %v3032 = vmax.f32 %v3031, %v2732
      %v3033 = vmax.f32 %v3032, %v2735
      %v3034 = vmax.f32 %v3033, %v2738
      %v3035 = vmax.f32 %v3034, %v2741
      %v3036 = vmax.f32 %v3035, %v2744
      %v3037 = vmax.f32 %v3036, %v2747
      %v3038 = vmax.f32 %v3037, %v2750
      %vm3039 = vcmask 1043456
      %v3040 = vsel %vm3039, %v2754, -inf
      %v3041 = vmax.f32 %v3038, %v3040
      %v3042 = vrot.slane %v3041, 4
      %v3043 = vmax.f32 %v3041, %v3042
      %v3044 = vrot.slane %v3043, 2
      %v3045 = vmax.f32 %v3043, %v3044
      %v3046 = vrot.slane %v3045, 1
      %v3047 = vmax.f32 %v3045, %v3046
      %v3048 = vmax.f32 %v2757, %v2760
      %v3049 = vmax.f32 %v3048, %v2763
      %v3050 = vmax.f32 %v3049, %v2766
      %v3051 = vmax.f32 %v3050, %v2769
      %v3052 = vmax.f32 %v3051, %v2772
      %v3053 = vmax.f32 %v3052, %v2775
      %v3054 = vmax.f32 %v3053, %v2778
      %v3055 = vmax.f32 %v3054, %v2781
      %v3056 = vmax.f32 %v3055, %v2784
      %v3057 = vmax.f32 %v3056, %v2787
      %v3058 = vmax.f32 %v3057, %v2790
      %v3059 = vsel %vm3039, %v2793, -inf
      %v3060 = vmax.f32 %v3058, %v3059
      %v3061 = vrot.slane %v3060, 4
      %v3062 = vmax.f32 %v3060, %v3061
      %v3063 = vrot.slane %v3062, 2
      %v3064 = vmax.f32 %v3062, %v3063
      %v3065 = vrot.slane %v3064, 1
      %v3066 = vmax.f32 %v3064, %v3065
      %v3067 = vmax.f32 %v2796, %v2799
      %v3068 = vmax.f32 %v3067, %v2802
      %v3069 = vmax.f32 %v3068, %v2805
      %v3070 = vmax.f32 %v3069, %v2808
      %v3071 = vmax.f32 %v3070, %v2811
      %v3072 = vmax.f32 %v3071, %v2814
      %v3073 = vmax.f32 %v3072, %v2817
      %v3074 = vmax.f32 %v3073, %v2820
      %v3075 = vmax.f32 %v3074, %v2823
      %v3076 = vmax.f32 %v3075, %v2826
      %v3077 = vmax.f32 %v3076, %v2829
      %v3078 = vsel %vm3039, %v2832, -inf
      %v3079 = vmax.f32 %v3077, %v3078
      %v3080 = vrot.slane %v3079, 4
      %v3081 = vmax.f32 %v3079, %v3080
      %v3082 = vrot.slane %v3081, 2
      %v3083 = vmax.f32 %v3081, %v3082
      %v3084 = vrot.slane %v3083, 1
      %v3085 = vmax.f32 %v3083, %v3084
      %v3086 = vmax.f32 %v2835, %v2838
      %v3087 = vmax.f32 %v3086, %v2841
      %v3088 = vmax.f32 %v3087, %v2844
      %v3089 = vmax.f32 %v3088, %v2847
      %v3090 = vmax.f32 %v3089, %v2850
      %v3091 = vmax.f32 %v3090, %v2853
      %v3092 = vmax.f32 %v3091, %v2856
      %v3093 = vmax.f32 %v3092, %v2859
      %v3094 = vmax.f32 %v3093, %v2862
      %v3095 = vmax.f32 %v3094, %v2865
      %v3096 = vmax.f32 %v3095, %v2868
      %v3097 = vsel %vm3039, %v2871, -inf
      %v3098 = vmax.f32 %v3096, %v3097
      %v3099 = vrot.slane %v3098, 4
      %v3100 = vmax.f32 %v3098, %v3099
      %v3101 = vrot.slane %v3100, 2
      %v3102 = vmax.f32 %v3100, %v3101
      %v3103 = vrot.slane %v3102, 1
      %v3104 = vmax.f32 %v3102, %v3103
      %v3105 = vmax.f32 %v2874, %v2877
      %v3106 = vmax.f32 %v3105, %v2880
      %v3107 = vmax.f32 %v3106, %v2883
      %v3108 = vmax.f32 %v3107, %v2886
      %v3109 = vmax.f32 %v3108, %v2889
      %v3110 = vmax.f32 %v3109, %v2892
      %v3111 = vmax.f32 %v3110, %v2895
      %v3112 = vmax.f32 %v3111, %v2898
      %v3113 = vmax.f32 %v3112, %v2901
      %v3114 = vmax.f32 %v3113, %v2904
      %v3115 = vmax.f32 %v3114, %v2907
      %v3116 = vsel %vm3039, %v2910, -inf
      %v3117 = vmax.f32 %v3115, %v3116
      %v3118 = vrot.slane %v3117, 4
      %v3119 = vmax.f32 %v3117, %v3118
      %v3120 = vrot.slane %v3119, 2
      %v3121 = vmax.f32 %v3119, %v3120
      %v3122 = vrot.slane %v3121, 1
      %v3123 = vmax.f32 %v3121, %v3122
      %v3124 = vmax.f32 %v2913, %v2916
      %v3125 = vmax.f32 %v3124, %v2919
      %v3126 = vmax.f32 %v3125, %v2922
      %v3127 = vmax.f32 %v3126, %v2925
      %v3128 = vmax.f32 %v3127, %v2928
      %v3129 = vmax.f32 %v3128, %v2931
      %v3130 = vmax.f32 %v3129, %v2934
      %v3131 = vmax.f32 %v3130, %v2937
      %v3132 = vmax.f32 %v3131, %v2940
      %v3133 = vmax.f32 %v3132, %v2943
      %v3134 = vmax.f32 %v3133, %v2946
      %v3135 = vsel %vm3039, %v2949, -inf
      %v3136 = vmax.f32 %v3134, %v3135
      %v3137 = vrot.slane %v3136, 4
      %v3138 = vmax.f32 %v3136, %v3137
      %v3139 = vrot.slane %v3138, 2
      %v3140 = vmax.f32 %v3138, %v3139
      %v3141 = vrot.slane %v3140, 1
      %v3142 = vmax.f32 %v3140, %v3141
      %v3143 = vmax.f32 %v2952, %v2955
      %v3144 = vmax.f32 %v3143, %v2958
      %v3145 = vmax.f32 %v3144, %v2961
      %v3146 = vmax.f32 %v3145, %v2964
      %v3147 = vmax.f32 %v3146, %v2967
      %v3148 = vmax.f32 %v3147, %v2970
      %v3149 = vmax.f32 %v3148, %v2973
      %v3150 = vmax.f32 %v3149, %v2976
      %v3151 = vmax.f32 %v3150, %v2979
      %v3152 = vmax.f32 %v3151, %v2982
      %v3153 = vmax.f32 %v3152, %v2985
      %v3154 = vsel %vm3039, %v2988, -inf
      %v3155 = vmax.f32 %v3153, %v3154
      %v3156 = vrot.slane %v3155, 4
      %v3157 = vmax.f32 %v3155, %v3156
      %v3158 = vrot.slane %v3157, 2
      %v3159 = vmax.f32 %v3157, %v3158
      %v3160 = vrot.slane %v3159, 1
      %v3161 = vmax.f32 %v3159, %v3160
      %v3162 = vmax.f32 %v2991, %v2994
      %v3163 = vmax.f32 %v3162, %v2997
      %v3164 = vmax.f32 %v3163, %v3000
      %v3165 = vmax.f32 %v3164, %v3003
      %v3166 = vmax.f32 %v3165, %v3006
      %v3167 = vmax.f32 %v3166, %v3009
      %v3168 = vmax.f32 %v3167, %v3012
      %v3169 = vmax.f32 %v3168, %v3015
      %v3170 = vmax.f32 %v3169, %v3018
      %v3171 = vmax.f32 %v3170, %v3021
      %v3172 = vmax.f32 %v3171, %v3024
      %v3173 = vsel %vm3039, %v3027, -inf
      %v3174 = vmax.f32 %v3172, %v3173
      %v3175 = vrot.slane %v3174, 4
      %v3176 = vmax.f32 %v3174, %v3175
      %v3177 = vrot.slane %v3176, 2
      %v3178 = vmax.f32 %v3176, %v3177
      %v3179 = vrot.slane %v3178, 1
      %v3180 = vmax.f32 %v3178, %v3179
      %v3181 = vsub.f32 %v2610, %v3047
      %v3182 = vsub.f32 %v2611, %v3047
      %v3183 = vsub.f32 %v2612, %v3047
      %v3184 = vsub.f32 %v2613, %v3047
      %v3185 = vsub.f32 %v2614, %v3047
      %v3186 = vsub.f32 %v2615, %v3047
      %v3187 = vsub.f32 %v2616, %v3047
      %v3188 = vsub.f32 %v2617, %v3047
      %v3189 = vsub.f32 %v2618, %v3047
      %v3190 = vsub.f32 %v2619, %v3047
      %v3191 = vsub.f32 %v2620, %v3047
      %v3192 = vsub.f32 %v2621, %v3047
      %v3193 = vsub.f32 %v2622, %v3047
      %v3194 = vsub.f32 %v2623, %v3066
      %v3195 = vsub.f32 %v2624, %v3066
      %v3196 = vsub.f32 %v2625, %v3066
      %v3197 = vsub.f32 %v2626, %v3066
      %v3198 = vsub.f32 %v2627, %v3066
      %v3199 = vsub.f32 %v2628, %v3066
      %v3200 = vsub.f32 %v2629, %v3066
      %v3201 = vsub.f32 %v2630, %v3066
      %v3202 = vsub.f32 %v2631, %v3066
      %v3203 = vsub.f32 %v2632, %v3066
      %v3204 = vsub.f32 %v2633, %v3066
      %v3205 = vsub.f32 %v2634, %v3066
      %v3206 = vsub.f32 %v2635, %v3066
      %v3207 = vsub.f32 %v2636, %v3085
      %v3208 = vsub.f32 %v2637, %v3085
      %v3209 = vsub.f32 %v2638, %v3085
      %v3210 = vsub.f32 %v2639, %v3085
      %v3211 = vsub.f32 %v2640, %v3085
      %v3212 = vsub.f32 %v2641, %v3085
      %v3213 = vsub.f32 %v2642, %v3085
      %v3214 = vsub.f32 %v2643, %v3085
      %v3215 = vsub.f32 %v2644, %v3085
      %v3216 = vsub.f32 %v2645, %v3085
      %v3217 = vsub.f32 %v2646, %v3085
      %v3218 = vsub.f32 %v2647, %v3085
      %v3219 = vsub.f32 %v2648, %v3085
      %v3220 = vsub.f32 %v2649, %v3104
      %v3221 = vsub.f32 %v2650, %v3104
      %v3222 = vsub.f32 %v2651, %v3104
      %v3223 = vsub.f32 %v2652, %v3104
      %v3224 = vsub.f32 %v2653, %v3104
      %v3225 = vsub.f32 %v2654, %v3104
      %v3226 = vsub.f32 %v2655, %v3104
      %v3227 = vsub.f32 %v2656, %v3104
      %v3228 = vsub.f32 %v2657, %v3104
      %v3229 = vsub.f32 %v2658, %v3104
      %v3230 = vsub.f32 %v2659, %v3104
      %v3231 = vsub.f32 %v2660, %v3104
      %v3232 = vsub.f32 %v2661, %v3104
      %v3233 = vsub.f32 %v2662, %v3123
      %v3234 = vsub.f32 %v2663, %v3123
      %v3235 = vsub.f32 %v2664, %v3123
      %v3236 = vsub.f32 %v2665, %v3123
      %v3237 = vsub.f32 %v2666, %v3123
      %v3238 = vsub.f32 %v2667, %v3123
      %v3239 = vsub.f32 %v2668, %v3123
      %v3240 = vsub.f32 %v2669, %v3123
      %v3241 = vsub.f32 %v2670, %v3123
      %v3242 = vsub.f32 %v2671, %v3123
      %v3243 = vsub.f32 %v2672, %v3123
      %v3244 = vsub.f32 %v2673, %v3123
      %v3245 = vsub.f32 %v2674, %v3123
      %v3246 = vsub.f32 %v2675, %v3142
      %v3247 = vsub.f32 %v2676, %v3142
      %v3248 = vsub.f32 %v2677, %v3142
      %v3249 = vsub.f32 %v2678, %v3142
      %v3250 = vsub.f32 %v2679, %v3142
      %v3251 = vsub.f32 %v2680, %v3142
      %v3252 = vsub.f32 %v2681, %v3142
      %v3253 = vsub.f32 %v2682, %v3142
      %v3254 = vsub.f32 %v2683, %v3142
      %v3255 = vsub.f32 %v2684, %v3142
      %v3256 = vsub.f32 %v2685, %v3142
      %v3257 = vsub.f32 %v2686, %v3142
      %v3258 = vsub.f32 %v2687, %v3142
      %v3259 = vsub.f32 %v2688, %v3161
      %v3260 = vsub.f32 %v2689, %v3161
      %v3261 = vsub.f32 %v2690, %v3161
      %v3262 = vsub.f32 %v2691, %v3161
      %v3263 = vsub.f32 %v2692, %v3161
      %v3264 = vsub.f32 %v2693, %v3161
      %v3265 = vsub.f32 %v2694, %v3161
      %v3266 = vsub.f32 %v2695, %v3161
      %v3267 = vsub.f32 %v2696, %v3161
      %v3268 = vsub.f32 %v2697, %v3161
      %v3269 = vsub.f32 %v2698, %v3161
      %v3270 = vsub.f32 %v2699, %v3161
      %v3271 = vsub.f32 %v2700, %v3161
      %v3272 = vsub.f32 %v2701, %v3180
      %v3273 = vsub.f32 %v2702, %v3180
      %v3274 = vsub.f32 %v2703, %v3180
      %v3275 = vsub.f32 %v2704, %v3180
      %v3276 = vsub.f32 %v2705, %v3180
      %v3277 = vsub.f32 %v2706, %v3180
      %v3278 = vsub.f32 %v2707, %v3180
      %v3279 = vsub.f32 %v2708, %v3180
      %v3280 = vsub.f32 %v2709, %v3180
      %v3281 = vsub.f32 %v2710, %v3180
      %v3282 = vsub.f32 %v2711, %v3180
      %v3283 = vsub.f32 %v2712, %v3180
      %v3284 = vsub.f32 %v2713, %v3180
      %v3285 = vmul.f32 %v3181, 1.442695
      %v3286 = vpow.pop %v3285
      %v3287 = vmul.f32 %v3182, 1.442695
      %v3288 = vpow.pop %v3287
      %v3289 = vmul.f32 %v3183, 1.442695
      %v3290 = vpow.pop %v3289
      %v3291 = vmul.f32 %v3184, 1.442695
      %v3292 = vpow.pop %v3291
      %v3293 = vmul.f32 %v3185, 1.442695
      %v3294 = vpow.pop %v3293
      %v3295 = vmul.f32 %v3186, 1.442695
      %v3296 = vpow.pop %v3295
      %v3297 = vmul.f32 %v3187, 1.442695
      %v3298 = vpow.pop %v3297
      %v3299 = vmul.f32 %v3188, 1.442695
      %v3300 = vpow.pop %v3299
      %v3301 = vmul.f32 %v3189, 1.442695
      %v3302 = vpow.pop %v3301
      %v3303 = vmul.f32 %v3190, 1.442695
      %v3304 = vpow.pop %v3303
      %v3305 = vmul.f32 %v3191, 1.442695
      %v3306 = vpow.pop %v3305
      %v3307 = vmul.f32 %v3192, 1.442695
      %v3308 = vpow.pop %v3307
      %v3309 = vmul.f32 %v3193, 1.442695
      %v3310 = vpow.pop %v3309
      %v3311 = vmul.f32 %v3194, 1.442695
      %v3312 = vpow.pop %v3311
      %v3313 = vmul.f32 %v3195, 1.442695
      %v3314 = vpow.pop %v3313
      %v3315 = vmul.f32 %v3196, 1.442695
      %v3316 = vpow.pop %v3315
      %v3317 = vmul.f32 %v3197, 1.442695
      %v3318 = vpow.pop %v3317
      %v3319 = vmul.f32 %v3198, 1.442695
      %v3320 = vpow.pop %v3319
      %v3321 = vmul.f32 %v3199, 1.442695
      %v3322 = vpow.pop %v3321
      %v3323 = vmul.f32 %v3200, 1.442695
      %v3324 = vpow.pop %v3323
      %v3325 = vmul.f32 %v3201, 1.442695
      %v3326 = vpow.pop %v3325
      %v3327 = vmul.f32 %v3202, 1.442695
      %v3328 = vpow.pop %v3327
      %v3329 = vmul.f32 %v3203, 1.442695
      %v3330 = vpow.pop %v3329
      %v3331 = vmul.f32 %v3204, 1.442695
      %v3332 = vpow.pop %v3331
      %v3333 = vmul.f32 %v3205, 1.442695
      %v3334 = vpow.pop %v3333
      %v3335 = vmul.f32 %v3206, 1.442695
      %v3336 = vpow.pop %v3335
      %v3337 = vmul.f32 %v3207, 1.442695
      %v3338 = vpow.pop %v3337
      %v3339 = vmul.f32 %v3208, 1.442695
      %v3340 = vpow.pop %v3339
      %v3341 = vmul.f32 %v3209, 1.442695
      %v3342 = vpow.pop %v3341
      %v3343 = vmul.f32 %v3210, 1.442695
      %v3344 = vpow.pop %v3343
      %v3345 = vmul.f32 %v3211, 1.442695
      %v3346 = vpow.pop %v3345
      %v3347 = vmul.f32 %v3212, 1.442695
      %v3348 = vpow.pop %v3347
      %v3349 = vmul.f32 %v3213, 1.442695
      %v3350 = vpow.pop %v3349
      %v3351 = vmul.f32 %v3214, 1.442695
      %v3352 = vpow.pop %v3351
      %v3353 = vmul.f32 %v3215, 1.442695
      %v3354 = vpow.pop %v3353
      %v3355 = vmul.f32 %v3216, 1.442695
      %v3356 = vpow.pop %v3355
      %v3357 = vmul.f32 %v3217, 1.442695
      %v3358 = vpow.pop %v3357
      %v3359 = vmul.f32 %v3218, 1.442695
      %v3360 = vpow.pop %v3359
      %v3361 = vmul.f32 %v3219, 1.442695
      %v3362 = vpow.pop %v3361
      %v3363 = vmul.f32 %v3220, 1.442695
      %v3364 = vpow.pop %v3363
      %v3365 = vmul.f32 %v3221, 1.442695
      %v3366 = vpow.pop %v3365
      %v3367 = vmul.f32 %v3222, 1.442695
      %v3368 = vpow.pop %v3367
      %v3369 = vmul.f32 %v3223, 1.442695
      %v3370 = vpow.pop %v3369
      %v3371 = vmul.f32 %v3224, 1.442695
      %v3372 = vpow.pop %v3371
      %v3373 = vmul.f32 %v3225, 1.442695
      %v3374 = vpow.pop %v3373
      %v3375 = vmul.f32 %v3226, 1.442695
      %v3376 = vpow.pop %v3375
      %v3377 = vmul.f32 %v3227, 1.442695
      %v3378 = vpow.pop %v3377
      %v3379 = vmul.f32 %v3228, 1.442695
      %v3380 = vpow.pop %v3379
      %v3381 = vmul.f32 %v3229, 1.442695
      %v3382 = vpow.pop %v3381
      %v3383 = vmul.f32 %v3230, 1.442695
      %v3384 = vpow.pop %v3383
      %v3385 = vmul.f32 %v3231, 1.442695
      %v3386 = vpow.pop %v3385
      %v3387 = vmul.f32 %v3232, 1.442695
      %v3388 = vpow.pop %v3387
      %v3389 = vmul.f32 %v3233, 1.442695
      %v3390 = vpow.pop %v3389
      %v3391 = vmul.f32 %v3234, 1.442695
      %v3392 = vpow.pop %v3391
      %v3393 = vmul.f32 %v3235, 1.442695
      %v3394 = vpow.pop %v3393
      %v3395 = vmul.f32 %v3236, 1.442695
      %v3396 = vpow.pop %v3395
      %v3397 = vmul.f32 %v3237, 1.442695
      %v3398 = vpow.pop %v3397
      %v3399 = vmul.f32 %v3238, 1.442695
      %v3400 = vpow.pop %v3399
      %v3401 = vmul.f32 %v3239, 1.442695
      %v3402 = vpow.pop %v3401
      %v3403 = vmul.f32 %v3240, 1.442695
      %v3404 = vpow.pop %v3403
      %v3405 = vmul.f32 %v3241, 1.442695
      %v3406 = vpow.pop %v3405
      %v3407 = vmul.f32 %v3242, 1.442695
      %v3408 = vpow.pop %v3407
      %v3409 = vmul.f32 %v3243, 1.442695
      %v3410 = vpow.pop %v3409
      %v3411 = vmul.f32 %v3244, 1.442695
      %v3412 = vpow.pop %v3411
      %v3413 = vmul.f32 %v3245, 1.442695
      %v3414 = vpow.pop %v3413
      %v3415 = vmul.f32 %v3246, 1.442695
      %v3416 = vpow.pop %v3415
      %v3417 = vmul.f32 %v3247, 1.442695
      %v3418 = vpow.pop %v3417
      %v3419 = vmul.f32 %v3248, 1.442695
      %v3420 = vpow.pop %v3419
      %v3421 = vmul.f32 %v3249, 1.442695
      %v3422 = vpow.pop %v3421
      %v3423 = vmul.f32 %v3250, 1.442695
      %v3424 = vpow.pop %v3423
      %v3425 = vmul.f32 %v3251, 1.442695
      %v3426 = vpow.pop %v3425
      %v3427 = vmul.f32 %v3252, 1.442695
      %v3428 = vpow.pop %v3427
      %v3429 = vmul.f32 %v3253, 1.442695
      %v3430 = vpow.pop %v3429
      %v3431 = vmul.f32 %v3254, 1.442695
      %v3432 = vpow.pop %v3431
      %v3433 = vmul.f32 %v3255, 1.442695
      %v3434 = vpow.pop %v3433
      %v3435 = vmul.f32 %v3256, 1.442695
      %v3436 = vpow.pop %v3435
      %v3437 = vmul.f32 %v3257, 1.442695
      %v3438 = vpow.pop %v3437
      %v3439 = vmul.f32 %v3258, 1.442695
      %v3440 = vpow.pop %v3439
      %v3441 = vmul.f32 %v3259, 1.442695
      %v3442 = vpow.pop %v3441
      %v3443 = vmul.f32 %v3260, 1.442695
      %v3444 = vpow.pop %v3443
      %v3445 = vmul.f32 %v3261, 1.442695
      %v3446 = vpow.pop %v3445
      %v3447 = vmul.f32 %v3262, 1.442695
      %v3448 = vpow.pop %v3447
      %v3449 = vmul.f32 %v3263, 1.442695
      %v3450 = vpow.pop %v3449
      %v3451 = vmul.f32 %v3264, 1.442695
      %v3452 = vpow.pop %v3451
      %v3453 = vmul.f32 %v3265, 1.442695
      %v3454 = vpow.pop %v3453
      %v3455 = vmul.f32 %v3266, 1.442695
      %v3456 = vpow.pop %v3455
      %v3457 = vmul.f32 %v3267, 1.442695
      %v3458 = vpow.pop %v3457
      %v3459 = vmul.f32 %v3268, 1.442695
      %v3460 = vpow.pop %v3459
      %v3461 = vmul.f32 %v3269, 1.442695
      %v3462 = vpow.pop %v3461
      %v3463 = vmul.f32 %v3270, 1.442695
      %v3464 = vpow.pop %v3463
      %v3465 = vmul.f32 %v3271, 1.442695
      %v3466 = vpow.pop %v3465
      %v3467 = vmul.f32 %v3272, 1.442695
      %v3468 = vpow.pop %v3467
      %v3469 = vmul.f32 %v3273, 1.442695
      %v3470 = vpow.pop %v3469
      %v3471 = vmul.f32 %v3274, 1.442695
      %v3472 = vpow.pop %v3471
      %v3473 = vmul.f32 %v3275, 1.442695
      %v3474 = vpow.pop %v3473
      %v3475 = vmul.f32 %v3276, 1.442695
      %v3476 = vpow.pop %v3475
      %v3477 = vmul.f32 %v3277, 1.442695
      %v3478 = vpow.pop %v3477
      %v3479 = vmul.f32 %v3278, 1.442695
      %v3480 = vpow.pop %v3479
      %v3481 = vmul.f32 %v3279, 1.442695
      %v3482 = vpow.pop %v3481
      %v3483 = vmul.f32 %v3280, 1.442695
      %v3484 = vpow.pop %v3483
      %v3485 = vmul.f32 %v3281, 1.442695
      %v3486 = vpow.pop %v3485
      %v3487 = vmul.f32 %v3282, 1.442695
      %v3488 = vpow.pop %v3487
      %v3489 = vmul.f32 %v3283, 1.442695
      %v3490 = vpow.pop %v3489
      %v3491 = vmul.f32 %v3284, 1.442695
      %v3492 = vpow.pop %v3491
      %v3493 = vsel %vm2714, %v3286, 0.0
      %3494 = vadd.xlane.f32.xlu0 %v3493
      %v3495 = vpop.xlane.xlu0 %3494
      %v3496 = vsel %vm2714, %v3288, 0.0
      %3497 = vadd.xlane.f32.xlu0 %v3496
      %v3498 = vpop.xlane.xlu0 %3497
      %v3499 = vsel %vm2714, %v3290, 0.0
      %3500 = vadd.xlane.f32.xlu0 %v3499
      %v3501 = vpop.xlane.xlu0 %3500
      %v3502 = vsel %vm2714, %v3292, 0.0
      %3503 = vadd.xlane.f32.xlu0 %v3502
      %v3504 = vpop.xlane.xlu0 %3503
      %v3505 = vsel %vm2714, %v3294, 0.0
      %3506 = vadd.xlane.f32.xlu0 %v3505
      %v3507 = vpop.xlane.xlu0 %3506
      %v3508 = vsel %vm2714, %v3296, 0.0
      %3509 = vadd.xlane.f32.xlu0 %v3508
      %v3510 = vpop.xlane.xlu0 %3509
      %v3511 = vsel %vm2714, %v3298, 0.0
      %3512 = vadd.xlane.f32.xlu0 %v3511
      %v3513 = vpop.xlane.xlu0 %3512
      %v3514 = vsel %vm2714, %v3300, 0.0
      %3515 = vadd.xlane.f32.xlu0 %v3514
      %v3516 = vpop.xlane.xlu0 %3515
      %v3517 = vsel %vm2714, %v3302, 0.0
      %3518 = vadd.xlane.f32.xlu0 %v3517
      %v3519 = vpop.xlane.xlu0 %3518
      %v3520 = vsel %vm2714, %v3304, 0.0
      %3521 = vadd.xlane.f32.xlu0 %v3520
      %v3522 = vpop.xlane.xlu0 %3521
      %v3523 = vsel %vm2714, %v3306, 0.0
      %3524 = vadd.xlane.f32.xlu0 %v3523
      %v3525 = vpop.xlane.xlu0 %3524
      %v3526 = vsel %vm2714, %v3308, 0.0
      %3527 = vadd.xlane.f32.xlu0 %v3526
      %v3528 = vpop.xlane.xlu0 %3527
      %v3529 = vsel %vm2751, %v3310, 0.0
      %3530 = vadd.xlane.f32.xlu0 %v3529
      %v3531 = vpop.xlane.xlu0 %3530
      %v3532 = vsel %vm2714, %v3312, 0.0
      %3533 = vadd.xlane.f32.xlu0 %v3532
      %v3534 = vpop.xlane.xlu0 %3533
      %v3535 = vsel %vm2714, %v3314, 0.0
      %3536 = vadd.xlane.f32.xlu0 %v3535
      %v3537 = vpop.xlane.xlu0 %3536
      %v3538 = vsel %vm2714, %v3316, 0.0
      %3539 = vadd.xlane.f32.xlu0 %v3538
      %v3540 = vpop.xlane.xlu0 %3539
      %v3541 = vsel %vm2714, %v3318, 0.0
      %3542 = vadd.xlane.f32.xlu0 %v3541
      %v3543 = vpop.xlane.xlu0 %3542
      %v3544 = vsel %vm2714, %v3320, 0.0
      %3545 = vadd.xlane.f32.xlu0 %v3544
      %v3546 = vpop.xlane.xlu0 %3545
      %v3547 = vsel %vm2714, %v3322, 0.0
      %3548 = vadd.xlane.f32.xlu0 %v3547
      %v3549 = vpop.xlane.xlu0 %3548
      %v3550 = vsel %vm2714, %v3324, 0.0
      %3551 = vadd.xlane.f32.xlu0 %v3550
      %v3552 = vpop.xlane.xlu0 %3551
      %v3553 = vsel %vm2714, %v3326, 0.0
      %3554 = vadd.xlane.f32.xlu0 %v3553
      %v3555 = vpop.xlane.xlu0 %3554
      %v3556 = vsel %vm2714, %v3328, 0.0
      %3557 = vadd.xlane.f32.xlu0 %v3556
      %v3558 = vpop.xlane.xlu0 %3557
      %v3559 = vsel %vm2714, %v3330, 0.0
      %3560 = vadd.xlane.f32.xlu0 %v3559
      %v3561 = vpop.xlane.xlu0 %3560
      %v3562 = vsel %vm2714, %v3332, 0.0
      %3563 = vadd.xlane.f32.xlu0 %v3562
      %v3564 = vpop.xlane.xlu0 %3563
      %v3565 = vsel %vm2714, %v3334, 0.0
      %3566 = vadd.xlane.f32.xlu0 %v3565
      %v3567 = vpop.xlane.xlu0 %3566
      %v3568 = vsel %vm2751, %v3336, 0.0
      %3569 = vadd.xlane.f32.xlu0 %v3568
      %v3570 = vpop.xlane.xlu0 %3569
      %v3571 = vsel %vm2714, %v3338, 0.0
      %3572 = vadd.xlane.f32.xlu0 %v3571
      %v3573 = vpop.xlane.xlu0 %3572
      %v3574 = vsel %vm2714, %v3340, 0.0
      %3575 = vadd.xlane.f32.xlu0 %v3574
      %v3576 = vpop.xlane.xlu0 %3575
      %v3577 = vsel %vm2714, %v3342, 0.0
      %3578 = vadd.xlane.f32.xlu0 %v3577
      %v3579 = vpop.xlane.xlu0 %3578
      %v3580 = vsel %vm2714, %v3344, 0.0
      %3581 = vadd.xlane.f32.xlu0 %v3580
      %v3582 = vpop.xlane.xlu0 %3581
      %v3583 = vsel %vm2714, %v3346, 0.0
      %3584 = vadd.xlane.f32.xlu0 %v3583
      %v3585 = vpop.xlane.xlu0 %3584
      %v3586 = vsel %vm2714, %v3348, 0.0
      %3587 = vadd.xlane.f32.xlu0 %v3586
      %v3588 = vpop.xlane.xlu0 %3587
      %v3589 = vsel %vm2714, %v3350, 0.0
      %3590 = vadd.xlane.f32.xlu0 %v3589
      %v3591 = vpop.xlane.xlu0 %3590
      %v3592 = vsel %vm2714, %v3352, 0.0
      %3593 = vadd.xlane.f32.xlu0 %v3592
      %v3594 = vpop.xlane.xlu0 %3593
      %v3595 = vsel %vm2714, %v3354, 0.0
      %3596 = vadd.xlane.f32.xlu0 %v3595
      %v3597 = vpop.xlane.xlu0 %3596
      %v3598 = vsel %vm2714, %v3356, 0.0
      %3599 = vadd.xlane.f32.xlu0 %v3598
      %v3600 = vpop.xlane.xlu0 %3599
      %v3601 = vsel %vm2714, %v3358, 0.0
      %3602 = vadd.xlane.f32.xlu0 %v3601
      %v3603 = vpop.xlane.xlu0 %3602
      %v3604 = vsel %vm2714, %v3360, 0.0
      %3605 = vadd.xlane.f32.xlu0 %v3604
      %v3606 = vpop.xlane.xlu0 %3605
      %v3607 = vsel %vm2751, %v3362, 0.0
      %3608 = vadd.xlane.f32.xlu0 %v3607
      %v3609 = vpop.xlane.xlu0 %3608
      %v3610 = vsel %vm2714, %v3364, 0.0
      %3611 = vadd.xlane.f32.xlu0 %v3610
      %v3612 = vpop.xlane.xlu0 %3611
      %v3613 = vsel %vm2714, %v3366, 0.0
      %3614 = vadd.xlane.f32.xlu0 %v3613
      %v3615 = vpop.xlane.xlu0 %3614
      %v3616 = vsel %vm2714, %v3368, 0.0
      %3617 = vadd.xlane.f32.xlu0 %v3616
      %v3618 = vpop.xlane.xlu0 %3617
      %v3619 = vsel %vm2714, %v3370, 0.0
      %3620 = vadd.xlane.f32.xlu0 %v3619
      %v3621 = vpop.xlane.xlu0 %3620
      %v3622 = vsel %vm2714, %v3372, 0.0
      %3623 = vadd.xlane.f32.xlu0 %v3622
      %v3624 = vpop.xlane.xlu0 %3623
      %v3625 = vsel %vm2714, %v3374, 0.0
      %3626 = vadd.xlane.f32.xlu0 %v3625
      %v3627 = vpop.xlane.xlu0 %3626
      %v3628 = vsel %vm2714, %v3376, 0.0
      %3629 = vadd.xlane.f32.xlu0 %v3628
      %v3630 = vpop.xlane.xlu0 %3629
      %v3631 = vsel %vm2714, %v3378, 0.0
      %3632 = vadd.xlane.f32.xlu0 %v3631
      %v3633 = vpop.xlane.xlu0 %3632
      %v3634 = vsel %vm2714, %v3380, 0.0
      %3635 = vadd.xlane.f32.xlu0 %v3634
      %v3636 = vpop.xlane.xlu0 %3635
      %v3637 = vsel %vm2714, %v3382, 0.0
      %3638 = vadd.xlane.f32.xlu0 %v3637
      %v3639 = vpop.xlane.xlu0 %3638
      %v3640 = vsel %vm2714, %v3384, 0.0
      %3641 = vadd.xlane.f32.xlu0 %v3640
      %v3642 = vpop.xlane.xlu0 %3641
      %v3643 = vsel %vm2714, %v3386, 0.0
      %3644 = vadd.xlane.f32.xlu0 %v3643
      %v3645 = vpop.xlane.xlu0 %3644
      %v3646 = vsel %vm2751, %v3388, 0.0
      %3647 = vadd.xlane.f32.xlu0 %v3646
      %v3648 = vpop.xlane.xlu0 %3647
      %v3649 = vsel %vm2714, %v3390, 0.0
      %3650 = vadd.xlane.f32.xlu0 %v3649
      %v3651 = vpop.xlane.xlu0 %3650
      %v3652 = vsel %vm2714, %v3392, 0.0
      %3653 = vadd.xlane.f32.xlu0 %v3652
      %v3654 = vpop.xlane.xlu0 %3653
      %v3655 = vsel %vm2714, %v3394, 0.0
      %3656 = vadd.xlane.f32.xlu0 %v3655
      %v3657 = vpop.xlane.xlu0 %3656
      %v3658 = vsel %vm2714, %v3396, 0.0
      %3659 = vadd.xlane.f32.xlu0 %v3658
      %v3660 = vpop.xlane.xlu0 %3659
      %v3661 = vsel %vm2714, %v3398, 0.0
      %3662 = vadd.xlane.f32.xlu0 %v3661
      %v3663 = vpop.xlane.xlu0 %3662
      %v3664 = vsel %vm2714, %v3400, 0.0
      %3665 = vadd.xlane.f32.xlu0 %v3664
      %v3666 = vpop.xlane.xlu0 %3665
      %v3667 = vsel %vm2714, %v3402, 0.0
      %3668 = vadd.xlane.f32.xlu0 %v3667
      %v3669 = vpop.xlane.xlu0 %3668
      %v3670 = vsel %vm2714, %v3404, 0.0
      %3671 = vadd.xlane.f32.xlu0 %v3670
      %v3672 = vpop.xlane.xlu0 %3671
      %v3673 = vsel %vm2714, %v3406, 0.0
      %3674 = vadd.xlane.f32.xlu0 %v3673
      %v3675 = vpop.xlane.xlu0 %3674
      %v3676 = vsel %vm2714, %v3408, 0.0
      %3677 = vadd.xlane.f32.xlu0 %v3676
      %v3678 = vpop.xlane.xlu0 %3677
      %v3679 = vsel %vm2714, %v3410, 0.0
      %3680 = vadd.xlane.f32.xlu0 %v3679
      %v3681 = vpop.xlane.xlu0 %3680
      %v3682 = vsel %vm2714, %v3412, 0.0
      %3683 = vadd.xlane.f32.xlu0 %v3682
      %v3684 = vpop.xlane.xlu0 %3683
      %v3685 = vsel %vm2751, %v3414, 0.0
      %3686 = vadd.xlane.f32.xlu0 %v3685
      %v3687 = vpop.xlane.xlu0 %3686
      %v3688 = vsel %vm2714, %v3416, 0.0
      %3689 = vadd.xlane.f32.xlu0 %v3688
      %v3690 = vpop.xlane.xlu0 %3689
      %v3691 = vsel %vm2714, %v3418, 0.0
      %3692 = vadd.xlane.f32.xlu0 %v3691
      %v3693 = vpop.xlane.xlu0 %3692
      %v3694 = vsel %vm2714, %v3420, 0.0
      %3695 = vadd.xlane.f32.xlu0 %v3694
      %v3696 = vpop.xlane.xlu0 %3695
      %v3697 = vsel %vm2714, %v3422, 0.0
      %3698 = vadd.xlane.f32.xlu0 %v3697
      %v3699 = vpop.xlane.xlu0 %3698
      %v3700 = vsel %vm2714, %v3424, 0.0
      %3701 = vadd.xlane.f32.xlu0 %v3700
      %v3702 = vpop.xlane.xlu0 %3701
      %v3703 = vsel %vm2714, %v3426, 0.0
      %3704 = vadd.xlane.f32.xlu0 %v3703
      %v3705 = vpop.xlane.xlu0 %3704
      %v3706 = vsel %vm2714, %v3428, 0.0
      %3707 = vadd.xlane.f32.xlu0 %v3706
      %v3708 = vpop.xlane.xlu0 %3707
      %v3709 = vsel %vm2714, %v3430, 0.0
      %3710 = vadd.xlane.f32.xlu0 %v3709
      %v3711 = vpop.xlane.xlu0 %3710
      %v3712 = vsel %vm2714, %v3432, 0.0
      %3713 = vadd.xlane.f32.xlu0 %v3712
      %v3714 = vpop.xlane.xlu0 %3713
      %v3715 = vsel %vm2714, %v3434, 0.0
      %3716 = vadd.xlane.f32.xlu0 %v3715
      %v3717 = vpop.xlane.xlu0 %3716
      %v3718 = vsel %vm2714, %v3436, 0.0
      %3719 = vadd.xlane.f32.xlu0 %v3718
      %v3720 = vpop.xlane.xlu0 %3719
      %v3721 = vsel %vm2714, %v3438, 0.0
      %3722 = vadd.xlane.f32.xlu0 %v3721
      %v3723 = vpop.xlane.xlu0 %3722
      %v3724 = vsel %vm2751, %v3440, 0.0
      %3725 = vadd.xlane.f32.xlu0 %v3724
      %v3726 = vpop.xlane.xlu0 %3725
      %v3727 = vsel %vm2714, %v3442, 0.0
      %3728 = vadd.xlane.f32.xlu0 %v3727
      %v3729 = vpop.xlane.xlu0 %3728
      %v3730 = vsel %vm2714, %v3444, 0.0
      %3731 = vadd.xlane.f32.xlu0 %v3730
      %v3732 = vpop.xlane.xlu0 %3731
      %v3733 = vsel %vm2714, %v3446, 0.0
      %3734 = vadd.xlane.f32.xlu0 %v3733
      %v3735 = vpop.xlane.xlu0 %3734
      %v3736 = vsel %vm2714, %v3448, 0.0
      %3737 = vadd.xlane.f32.xlu0 %v3736
      %v3738 = vpop.xlane.xlu0 %3737
      %v3739 = vsel %vm2714, %v3450, 0.0
      %3740 = vadd.xlane.f32.xlu0 %v3739
      %v3741 = vpop.xlane.xlu0 %3740
      %v3742 = vsel %vm2714, %v3452, 0.0
      %3743 = vadd.xlane.f32.xlu0 %v3742
      %v3744 = vpop.xlane.xlu0 %3743
      %v3745 = vsel %vm2714, %v3454, 0.0
      %3746 = vadd.xlane.f32.xlu0 %v3745
      %v3747 = vpop.xlane.xlu0 %3746
      %v3748 = vsel %vm2714, %v3456, 0.0
      %3749 = vadd.xlane.f32.xlu0 %v3748
      %v3750 = vpop.xlane.xlu0 %3749
      %v3751 = vsel %vm2714, %v3458, 0.0
      %3752 = vadd.xlane.f32.xlu0 %v3751
      %v3753 = vpop.xlane.xlu0 %3752
      %v3754 = vsel %vm2714, %v3460, 0.0
      %3755 = vadd.xlane.f32.xlu0 %v3754
      %v3756 = vpop.xlane.xlu0 %3755
      %v3757 = vsel %vm2714, %v3462, 0.0
      %3758 = vadd.xlane.f32.xlu0 %v3757
      %v3759 = vpop.xlane.xlu0 %3758
      %v3760 = vsel %vm2714, %v3464, 0.0
      %3761 = vadd.xlane.f32.xlu0 %v3760
      %v3762 = vpop.xlane.xlu0 %3761
      %v3763 = vsel %vm2751, %v3466, 0.0
      %3764 = vadd.xlane.f32.xlu0 %v3763
      %v3765 = vpop.xlane.xlu0 %3764
      %v3766 = vsel %vm2714, %v3468, 0.0
      %3767 = vadd.xlane.f32.xlu0 %v3766
      %v3768 = vpop.xlane.xlu0 %3767
      %v3769 = vsel %vm2714, %v3470, 0.0
      %3770 = vadd.xlane.f32.xlu0 %v3769
      %v3771 = vpop.xlane.xlu0 %3770
      %v3772 = vsel %vm2714, %v3472, 0.0
      %3773 = vadd.xlane.f32.xlu0 %v3772
      %v3774 = vpop.xlane.xlu0 %3773
      %v3775 = vsel %vm2714, %v3474, 0.0
      %3776 = vadd.xlane.f32.xlu0 %v3775
      %v3777 = vpop.xlane.xlu0 %3776
      %v3778 = vsel %vm2714, %v3476, 0.0
      %3779 = vadd.xlane.f32.xlu0 %v3778
      %v3780 = vpop.xlane.xlu0 %3779
      %v3781 = vsel %vm2714, %v3478, 0.0
      %3782 = vadd.xlane.f32.xlu0 %v3781
      %v3783 = vpop.xlane.xlu0 %3782
      %v3784 = vsel %vm2714, %v3480, 0.0
      %3785 = vadd.xlane.f32.xlu0 %v3784
      %v3786 = vpop.xlane.xlu0 %3785
      %v3787 = vsel %vm2714, %v3482, 0.0
      %3788 = vadd.xlane.f32.xlu0 %v3787
      %v3789 = vpop.xlane.xlu0 %3788
      %v3790 = vsel %vm2714, %v3484, 0.0
      %3791 = vadd.xlane.f32.xlu0 %v3790
      %v3792 = vpop.xlane.xlu0 %3791
      %v3793 = vsel %vm2714, %v3486, 0.0
      %3794 = vadd.xlane.f32.xlu0 %v3793
      %v3795 = vpop.xlane.xlu0 %3794
      %v3796 = vsel %vm2714, %v3488, 0.0
      %3797 = vadd.xlane.f32.xlu0 %v3796
      %v3798 = vpop.xlane.xlu0 %3797
      %v3799 = vsel %vm2714, %v3490, 0.0
      %3800 = vadd.xlane.f32.xlu0 %v3799
      %v3801 = vpop.xlane.xlu0 %3800
      %v3802 = vsel %vm2751, %v3492, 0.0
      %3803 = vadd.xlane.f32.xlu0 %v3802
      %v3804 = vpop.xlane.xlu0 %3803
      %v3805 = vadd.f32 %v3495, %v3498
      %v3806 = vadd.f32 %v3805, %v3501
      %v3807 = vadd.f32 %v3806, %v3504
      %v3808 = vadd.f32 %v3807, %v3507
      %v3809 = vadd.f32 %v3808, %v3510
      %v3810 = vadd.f32 %v3809, %v3513
      %v3811 = vadd.f32 %v3810, %v3516
      %v3812 = vadd.f32 %v3811, %v3519
      %v3813 = vadd.f32 %v3812, %v3522
      %v3814 = vadd.f32 %v3813, %v3525
      %v3815 = vadd.f32 %v3814, %v3528
      %v3816 = vsel %vm3039, %v3531, 0.0
      %v3817 = vadd.f32 %v3815, %v3816
      %v3818 = vrot.slane %v3817, 4
      %v3819 = vadd.f32 %v3817, %v3818
      %v3820 = vrot.slane %v3819, 2
      %v3821 = vadd.f32 %v3819, %v3820
      %v3822 = vrot.slane %v3821, 1
      %v3823 = vadd.f32 %v3821, %v3822
      %v3824 = vadd.f32 %v3534, %v3537
      %v3825 = vadd.f32 %v3824, %v3540
      %v3826 = vadd.f32 %v3825, %v3543
      %v3827 = vadd.f32 %v3826, %v3546
      %v3828 = vadd.f32 %v3827, %v3549
      %v3829 = vadd.f32 %v3828, %v3552
      %v3830 = vadd.f32 %v3829, %v3555
      %v3831 = vadd.f32 %v3830, %v3558
      %v3832 = vadd.f32 %v3831, %v3561
      %v3833 = vadd.f32 %v3832, %v3564
      %v3834 = vadd.f32 %v3833, %v3567
      %v3835 = vsel %vm3039, %v3570, 0.0
      %v3836 = vadd.f32 %v3834, %v3835
      %v3837 = vrot.slane %v3836, 4
      %v3838 = vadd.f32 %v3836, %v3837
      %v3839 = vrot.slane %v3838, 2
      %v3840 = vadd.f32 %v3838, %v3839
      %v3841 = vrot.slane %v3840, 1
      %v3842 = vadd.f32 %v3840, %v3841
      %v3843 = vadd.f32 %v3573, %v3576
      %v3844 = vadd.f32 %v3843, %v3579
      %v3845 = vadd.f32 %v3844, %v3582
      %v3846 = vadd.f32 %v3845, %v3585
      %v3847 = vadd.f32 %v3846, %v3588
      %v3848 = vadd.f32 %v3847, %v3591
      %v3849 = vadd.f32 %v3848, %v3594
      %v3850 = vadd.f32 %v3849, %v3597
      %v3851 = vadd.f32 %v3850, %v3600
      %v3852 = vadd.f32 %v3851, %v3603
      %v3853 = vadd.f32 %v3852, %v3606
      %v3854 = vsel %vm3039, %v3609, 0.0
      %v3855 = vadd.f32 %v3853, %v3854
      %v3856 = vrot.slane %v3855, 4
      %v3857 = vadd.f32 %v3855, %v3856
      %v3858 = vrot.slane %v3857, 2
      %v3859 = vadd.f32 %v3857, %v3858
      %v3860 = vrot.slane %v3859, 1
      %v3861 = vadd.f32 %v3859, %v3860
      %v3862 = vadd.f32 %v3612, %v3615
      %v3863 = vadd.f32 %v3862, %v3618
      %v3864 = vadd.f32 %v3863, %v3621
      %v3865 = vadd.f32 %v3864, %v3624
      %v3866 = vadd.f32 %v3865, %v3627
      %v3867 = vadd.f32 %v3866, %v3630
      %v3868 = vadd.f32 %v3867, %v3633
      %v3869 = vadd.f32 %v3868, %v3636
      %v3870 = vadd.f32 %v3869, %v3639
      %v3871 = vadd.f32 %v3870, %v3642
      %v3872 = vadd.f32 %v3871, %v3645
      %v3873 = vsel %vm3039, %v3648, 0.0
      %v3874 = vadd.f32 %v3872, %v3873
      %v3875 = vrot.slane %v3874, 4
      %v3876 = vadd.f32 %v3874, %v3875
      %v3877 = vrot.slane %v3876, 2
      %v3878 = vadd.f32 %v3876, %v3877
      %v3879 = vrot.slane %v3878, 1
      %v3880 = vadd.f32 %v3878, %v3879
      %v3881 = vadd.f32 %v3651, %v3654
      %v3882 = vadd.f32 %v3881, %v3657
      %v3883 = vadd.f32 %v3882, %v3660
      %v3884 = vadd.f32 %v3883, %v3663
      %v3885 = vadd.f32 %v3884, %v3666
      %v3886 = vadd.f32 %v3885, %v3669
      %v3887 = vadd.f32 %v3886, %v3672
      %v3888 = vadd.f32 %v3887, %v3675
      %v3889 = vadd.f32 %v3888, %v3678
      %v3890 = vadd.f32 %v3889, %v3681
      %v3891 = vadd.f32 %v3890, %v3684
      %v3892 = vsel %vm3039, %v3687, 0.0
      %v3893 = vadd.f32 %v3891, %v3892
      %v3894 = vrot.slane %v3893, 4
      %v3895 = vadd.f32 %v3893, %v3894
      %v3896 = vrot.slane %v3895, 2
      %v3897 = vadd.f32 %v3895, %v3896
      %v3898 = vrot.slane %v3897, 1
      %v3899 = vadd.f32 %v3897, %v3898
      %v3900 = vadd.f32 %v3690, %v3693
      %v3901 = vadd.f32 %v3900, %v3696
      %v3902 = vadd.f32 %v3901, %v3699
      %v3903 = vadd.f32 %v3902, %v3702
      %v3904 = vadd.f32 %v3903, %v3705
      %v3905 = vadd.f32 %v3904, %v3708
      %v3906 = vadd.f32 %v3905, %v3711
      %v3907 = vadd.f32 %v3906, %v3714
      %v3908 = vadd.f32 %v3907, %v3717
      %v3909 = vadd.f32 %v3908, %v3720
      %v3910 = vadd.f32 %v3909, %v3723
      %v3911 = vsel %vm3039, %v3726, 0.0
      %v3912 = vadd.f32 %v3910, %v3911
      %v3913 = vrot.slane %v3912, 4
      %v3914 = vadd.f32 %v3912, %v3913
      %v3915 = vrot.slane %v3914, 2
      %v3916 = vadd.f32 %v3914, %v3915
      %v3917 = vrot.slane %v3916, 1
      %v3918 = vadd.f32 %v3916, %v3917
      %v3919 = vadd.f32 %v3729, %v3732
      %v3920 = vadd.f32 %v3919, %v3735
      %v3921 = vadd.f32 %v3920, %v3738
      %v3922 = vadd.f32 %v3921, %v3741
      %v3923 = vadd.f32 %v3922, %v3744
      %v3924 = vadd.f32 %v3923, %v3747
      %v3925 = vadd.f32 %v3924, %v3750
      %v3926 = vadd.f32 %v3925, %v3753
      %v3927 = vadd.f32 %v3926, %v3756
      %v3928 = vadd.f32 %v3927, %v3759
      %v3929 = vadd.f32 %v3928, %v3762
      %v3930 = vsel %vm3039, %v3765, 0.0
      %v3931 = vadd.f32 %v3929, %v3930
      %v3932 = vrot.slane %v3931, 4
      %v3933 = vadd.f32 %v3931, %v3932
      %v3934 = vrot.slane %v3933, 2
      %v3935 = vadd.f32 %v3933, %v3934
      %v3936 = vrot.slane %v3935, 1
      %v3937 = vadd.f32 %v3935, %v3936
      %v3938 = vadd.f32 %v3768, %v3771
      %v3939 = vadd.f32 %v3938, %v3774
      %v3940 = vadd.f32 %v3939, %v3777
      %v3941 = vadd.f32 %v3940, %v3780
      %v3942 = vadd.f32 %v3941, %v3783
      %v3943 = vadd.f32 %v3942, %v3786
      %v3944 = vadd.f32 %v3943, %v3789
      %v3945 = vadd.f32 %v3944, %v3792
      %v3946 = vadd.f32 %v3945, %v3795
      %v3947 = vadd.f32 %v3946, %v3798
      %v3948 = vadd.f32 %v3947, %v3801
      %v3949 = vsel %vm3039, %v3804, 0.0
      %v3950 = vadd.f32 %v3948, %v3949
      %v3951 = vrot.slane %v3950, 4
      %v3952 = vadd.f32 %v3950, %v3951
      %v3953 = vrot.slane %v3952, 2
      %v3954 = vadd.f32 %v3952, %v3953
      %v3955 = vrot.slane %v3954, 1
      %v3956 = vadd.f32 %v3954, %v3955
      %v3957 = vld [vmem:[%s2] sm:$0xff]
      %v3958 = vld [vmem:[%s2 + $0x8] sm:$0xff]
      %v3959 = vld [vmem:[%s2 + $0x10] sm:$0xff]
      %v3960 = vld [vmem:[%s2 + $0x18] sm:$0xff]
      %v3961 = vld [vmem:[%s2 + $0x20] sm:$0xff]
      %v3962 = vld [vmem:[%s2 + $0x28] sm:$0xff]
      %v3963 = vld [vmem:[%s2 + $0x30] sm:$0xff]
      %v3964 = vld [vmem:[%s2 + $0x38] sm:$0xff]
      %v3965 = vld [vmem:[%s2 + $0x40] sm:$0xff]
      %v3966 = vld [vmem:[%s2 + $0x48] sm:$0xff]
      %v3967 = vld [vmem:[%s2 + $0x50] sm:$0xff]
      %v3968 = vld [vmem:[%s2 + $0x58] sm:$0xff]
      %v3969 = vld [vmem:[%s2 + $0x60] sm:$0xf]
      %v3970 = vmul.f32 %v3286, %v3957
      %v3971 = vmul.f32 %v3288, %v3958
      %v3972 = vmul.f32 %v3290, %v3959
      %v3973 = vmul.f32 %v3292, %v3960
      %v3974 = vmul.f32 %v3294, %v3961
      %v3975 = vmul.f32 %v3296, %v3962
      %v3976 = vmul.f32 %v3298, %v3963
      %v3977 = vmul.f32 %v3300, %v3964
      %v3978 = vmul.f32 %v3302, %v3965
      %v3979 = vmul.f32 %v3304, %v3966
      %v3980 = vmul.f32 %v3306, %v3967
      %v3981 = vmul.f32 %v3308, %v3968
      %v3982 = vmul.f32 %v3310, %v3969
      %v3983 = vmul.f32 %v3312, %v3957
      %v3984 = vmul.f32 %v3314, %v3958
      %v3985 = vmul.f32 %v3316, %v3959
      %v3986 = vmul.f32 %v3318, %v3960
      %v3987 = vmul.f32 %v3320, %v3961
      %v3988 = vmul.f32 %v3322, %v3962
      %v3989 = vmul.f32 %v3324, %v3963
      %v3990 = vmul.f32 %v3326, %v3964
      %v3991 = vmul.f32 %v3328, %v3965
      %v3992 = vmul.f32 %v3330, %v3966
      %v3993 = vmul.f32 %v3332, %v3967
      %v3994 = vmul.f32 %v3334, %v3968
      %v3995 = vmul.f32 %v3336, %v3969
      %v3996 = vmul.f32 %v3338, %v3957
      %v3997 = vmul.f32 %v3340, %v3958
      %v3998 = vmul.f32 %v3342, %v3959
      %v3999 = vmul.f32 %v3344, %v3960
      %v4000 = vmul.f32 %v3346, %v3961
      %v4001 = vmul.f32 %v3348, %v3962
      %v4002 = vmul.f32 %v3350, %v3963
      %v4003 = vmul.f32 %v3352, %v3964
      %v4004 = vmul.f32 %v3354, %v3965
      %v4005 = vmul.f32 %v3356, %v3966
      %v4006 = vmul.f32 %v3358, %v3967
      %v4007 = vmul.f32 %v3360, %v3968
      %v4008 = vmul.f32 %v3362, %v3969
      %v4009 = vmul.f32 %v3364, %v3957
      %v4010 = vmul.f32 %v3366, %v3958
      %v4011 = vmul.f32 %v3368, %v3959
      %v4012 = vmul.f32 %v3370, %v3960
      %v4013 = vmul.f32 %v3372, %v3961
      %v4014 = vmul.f32 %v3374, %v3962
      %v4015 = vmul.f32 %v3376, %v3963
      %v4016 = vmul.f32 %v3378, %v3964
      %v4017 = vmul.f32 %v3380, %v3965
      %v4018 = vmul.f32 %v3382, %v3966
      %v4019 = vmul.f32 %v3384, %v3967
      %v4020 = vmul.f32 %v3386, %v3968
      %v4021 = vmul.f32 %v3388, %v3969
      %v4022 = vmul.f32 %v3390, %v3957
      %v4023 = vmul.f32 %v3392, %v3958
      %v4024 = vmul.f32 %v3394, %v3959
      %v4025 = vmul.f32 %v3396, %v3960
      %v4026 = vmul.f32 %v3398, %v3961
      %v4027 = vmul.f32 %v3400, %v3962
      %v4028 = vmul.f32 %v3402, %v3963
      %v4029 = vmul.f32 %v3404, %v3964
      %v4030 = vmul.f32 %v3406, %v3965
      %v4031 = vmul.f32 %v3408, %v3966
      %v4032 = vmul.f32 %v3410, %v3967
      %v4033 = vmul.f32 %v3412, %v3968
      %v4034 = vmul.f32 %v3414, %v3969
      %v4035 = vmul.f32 %v3416, %v3957
      %v4036 = vmul.f32 %v3418, %v3958
      %v4037 = vmul.f32 %v3420, %v3959
      %v4038 = vmul.f32 %v3422, %v3960
      %v4039 = vmul.f32 %v3424, %v3961
      %v4040 = vmul.f32 %v3426, %v3962
      %v4041 = vmul.f32 %v3428, %v3963
      %v4042 = vmul.f32 %v3430, %v3964
      %v4043 = vmul.f32 %v3432, %v3965
      %v4044 = vmul.f32 %v3434, %v3966
      %v4045 = vmul.f32 %v3436, %v3967
      %v4046 = vmul.f32 %v3438, %v3968
      %v4047 = vmul.f32 %v3440, %v3969
      %v4048 = vmul.f32 %v3442, %v3957
      %v4049 = vmul.f32 %v3444, %v3958
      %v4050 = vmul.f32 %v3446, %v3959
      %v4051 = vmul.f32 %v3448, %v3960
      %v4052 = vmul.f32 %v3450, %v3961
      %v4053 = vmul.f32 %v3452, %v3962
      %v4054 = vmul.f32 %v3454, %v3963
      %v4055 = vmul.f32 %v3456, %v3964
      %v4056 = vmul.f32 %v3458, %v3965
      %v4057 = vmul.f32 %v3460, %v3966
      %v4058 = vmul.f32 %v3462, %v3967
      %v4059 = vmul.f32 %v3464, %v3968
      %v4060 = vmul.f32 %v3466, %v3969
      %v4061 = vmul.f32 %v3468, %v3957
      %v4062 = vmul.f32 %v3470, %v3958
      %v4063 = vmul.f32 %v3472, %v3959
      %v4064 = vmul.f32 %v3474, %v3960
      %v4065 = vmul.f32 %v3476, %v3961
      %v4066 = vmul.f32 %v3478, %v3962
      %v4067 = vmul.f32 %v3480, %v3963
      %v4068 = vmul.f32 %v3482, %v3964
      %v4069 = vmul.f32 %v3484, %v3965
      %v4070 = vmul.f32 %v3486, %v3966
      %v4071 = vmul.f32 %v3488, %v3967
      %v4072 = vmul.f32 %v3490, %v3968
      %v4073 = vmul.f32 %v3492, %v3969
      %v4074 = vsel %vm2714, %v3970, 0.0
      %4075 = vadd.xlane.f32.xlu0 %v4074
      %v4076 = vpop.xlane.xlu0 %4075
      %v4077 = vsel %vm2714, %v3971, 0.0
      %4078 = vadd.xlane.f32.xlu0 %v4077
      %v4079 = vpop.xlane.xlu0 %4078
      %v4080 = vsel %vm2714, %v3972, 0.0
      %4081 = vadd.xlane.f32.xlu0 %v4080
      %v4082 = vpop.xlane.xlu0 %4081
      %v4083 = vsel %vm2714, %v3973, 0.0
      %4084 = vadd.xlane.f32.xlu0 %v4083
      %v4085 = vpop.xlane.xlu0 %4084
      %v4086 = vsel %vm2714, %v3974, 0.0
      %4087 = vadd.xlane.f32.xlu0 %v4086
      %v4088 = vpop.xlane.xlu0 %4087
      %v4089 = vsel %vm2714, %v3975, 0.0
      %4090 = vadd.xlane.f32.xlu0 %v4089
      %v4091 = vpop.xlane.xlu0 %4090
      %v4092 = vsel %vm2714, %v3976, 0.0
      %4093 = vadd.xlane.f32.xlu0 %v4092
      %v4094 = vpop.xlane.xlu0 %4093
      %v4095 = vsel %vm2714, %v3977, 0.0
      %4096 = vadd.xlane.f32.xlu0 %v4095
      %v4097 = vpop.xlane.xlu0 %4096
      %v4098 = vsel %vm2714, %v3978, 0.0
      %4099 = vadd.xlane.f32.xlu0 %v4098
      %v4100 = vpop.xlane.xlu0 %4099
      %v4101 = vsel %vm2714, %v3979, 0.0
      %4102 = vadd.xlane.f32.xlu0 %v4101
      %v4103 = vpop.xlane.xlu0 %4102
      %v4104 = vsel %vm2714, %v3980, 0.0
      %4105 = vadd.xlane.f32.xlu0 %v4104
      %v4106 = vpop.xlane.xlu0 %4105
      %v4107 = vsel %vm2714, %v3981, 0.0
      %4108 = vadd.xlane.f32.xlu0 %v4107
      %v4109 = vpop.xlane.xlu0 %4108
      %v4110 = vsel %vm2751, %v3982, 0.0
      %4111 = vadd.xlane.f32.xlu0 %v4110
      %v4112 = vpop.xlane.xlu0 %4111
      %v4113 = vsel %vm2714, %v3983, 0.0
      %4114 = vadd.xlane.f32.xlu0 %v4113
      %v4115 = vpop.xlane.xlu0 %4114
      %v4116 = vsel %vm2714, %v3984, 0.0
      %4117 = vadd.xlane.f32.xlu0 %v4116
      %v4118 = vpop.xlane.xlu0 %4117
      %v4119 = vsel %vm2714, %v3985, 0.0
      %4120 = vadd.xlane.f32.xlu0 %v4119
      %v4121 = vpop.xlane.xlu0 %4120
      %v4122 = vsel %vm2714, %v3986, 0.0
      %4123 = vadd.xlane.f32.xlu0 %v4122
      %v4124 = vpop.xlane.xlu0 %4123
      %v4125 = vsel %vm2714, %v3987, 0.0
      %4126 = vadd.xlane.f32.xlu0 %v4125
      %v4127 = vpop.xlane.xlu0 %4126
      %v4128 = vsel %vm2714, %v3988, 0.0
      %4129 = vadd.xlane.f32.xlu0 %v4128
      %v4130 = vpop.xlane.xlu0 %4129
      %v4131 = vsel %vm2714, %v3989, 0.0
      %4132 = vadd.xlane.f32.xlu0 %v4131
      %v4133 = vpop.xlane.xlu0 %4132
      %v4134 = vsel %vm2714, %v3990, 0.0
      %4135 = vadd.xlane.f32.xlu0 %v4134
      %v4136 = vpop.xlane.xlu0 %4135
      %v4137 = vsel %vm2714, %v3991, 0.0
      %4138 = vadd.xlane.f32.xlu0 %v4137
      %v4139 = vpop.xlane.xlu0 %4138
      %v4140 = vsel %vm2714, %v3992, 0.0
      %4141 = vadd.xlane.f32.xlu0 %v4140
      %v4142 = vpop.xlane.xlu0 %4141
      %v4143 = vsel %vm2714, %v3993, 0.0
      %4144 = vadd.xlane.f32.xlu0 %v4143
      %v4145 = vpop.xlane.xlu0 %4144
      %v4146 = vsel %vm2714, %v3994, 0.0
      %4147 = vadd.xlane.f32.xlu0 %v4146
      %v4148 = vpop.xlane.xlu0 %4147
      %v4149 = vsel %vm2751, %v3995, 0.0
      %4150 = vadd.xlane.f32.xlu0 %v4149
      %v4151 = vpop.xlane.xlu0 %4150
      %v4152 = vsel %vm2714, %v3996, 0.0
      %4153 = vadd.xlane.f32.xlu0 %v4152
      %v4154 = vpop.xlane.xlu0 %4153
      %v4155 = vsel %vm2714, %v3997, 0.0
      %4156 = vadd.xlane.f32.xlu0 %v4155
      %v4157 = vpop.xlane.xlu0 %4156
      %v4158 = vsel %vm2714, %v3998, 0.0
      %4159 = vadd.xlane.f32.xlu0 %v4158
      %v4160 = vpop.xlane.xlu0 %4159
      %v4161 = vsel %vm2714, %v3999, 0.0
      %4162 = vadd.xlane.f32.xlu0 %v4161
      %v4163 = vpop.xlane.xlu0 %4162
      %v4164 = vsel %vm2714, %v4000, 0.0
      %4165 = vadd.xlane.f32.xlu0 %v4164
      %v4166 = vpop.xlane.xlu0 %4165
      %v4167 = vsel %vm2714, %v4001, 0.0
      %4168 = vadd.xlane.f32.xlu0 %v4167
      %v4169 = vpop.xlane.xlu0 %4168
      %v4170 = vsel %vm2714, %v4002, 0.0
      %4171 = vadd.xlane.f32.xlu0 %v4170
      %v4172 = vpop.xlane.xlu0 %4171
      %v4173 = vsel %vm2714, %v4003, 0.0
      %4174 = vadd.xlane.f32.xlu0 %v4173
      %v4175 = vpop.xlane.xlu0 %4174
      %v4176 = vsel %vm2714, %v4004, 0.0
      %4177 = vadd.xlane.f32.xlu0 %v4176
      %v4178 = vpop.xlane.xlu0 %4177
      %v4179 = vsel %vm2714, %v4005, 0.0
      %4180 = vadd.xlane.f32.xlu0 %v4179
      %v4181 = vpop.xlane.xlu0 %4180
      %v4182 = vsel %vm2714, %v4006, 0.0
      %4183 = vadd.xlane.f32.xlu0 %v4182
      %v4184 = vpop.xlane.xlu0 %4183
      %v4185 = vsel %vm2714, %v4007, 0.0
      %4186 = vadd.xlane.f32.xlu0 %v4185
      %v4187 = vpop.xlane.xlu0 %4186
      %v4188 = vsel %vm2751, %v4008, 0.0
      %4189 = vadd.xlane.f32.xlu0 %v4188
      %v4190 = vpop.xlane.xlu0 %4189
      %v4191 = vsel %vm2714, %v4009, 0.0
      %4192 = vadd.xlane.f32.xlu0 %v4191
      %v4193 = vpop.xlane.xlu0 %4192
      %v4194 = vsel %vm2714, %v4010, 0.0
      %4195 = vadd.xlane.f32.xlu0 %v4194
      %v4196 = vpop.xlane.xlu0 %4195
      %v4197 = vsel %vm2714, %v4011, 0.0
      %4198 = vadd.xlane.f32.xlu0 %v4197
      %v4199 = vpop.xlane.xlu0 %4198
      %v4200 = vsel %vm2714, %v4012, 0.0
      %4201 = vadd.xlane.f32.xlu0 %v4200
      %v4202 = vpop.xlane.xlu0 %4201
      %v4203 = vsel %vm2714, %v4013, 0.0
      %4204 = vadd.xlane.f32.xlu0 %v4203
      %v4205 = vpop.xlane.xlu0 %4204
      %v4206 = vsel %vm2714, %v4014, 0.0
      %4207 = vadd.xlane.f32.xlu0 %v4206
      %v4208 = vpop.xlane.xlu0 %4207
      %v4209 = vsel %vm2714, %v4015, 0.0
      %4210 = vadd.xlane.f32.xlu0 %v4209
      %v4211 = vpop.xlane.xlu0 %4210
      %v4212 = vsel %vm2714, %v4016, 0.0
      %4213 = vadd.xlane.f32.xlu0 %v4212
      %v4214 = vpop.xlane.xlu0 %4213
      %v4215 = vsel %vm2714, %v4017, 0.0
      %4216 = vadd.xlane.f32.xlu0 %v4215
      %v4217 = vpop.xlane.xlu0 %4216
      %v4218 = vsel %vm2714, %v4018, 0.0
      %4219 = vadd.xlane.f32.xlu0 %v4218
      %v4220 = vpop.xlane.xlu0 %4219
      %v4221 = vsel %vm2714, %v4019, 0.0
      %4222 = vadd.xlane.f32.xlu0 %v4221
      %v4223 = vpop.xlane.xlu0 %4222
      %v4224 = vsel %vm2714, %v4020, 0.0
      %4225 = vadd.xlane.f32.xlu0 %v4224
      %v4226 = vpop.xlane.xlu0 %4225
      %v4227 = vsel %vm2751, %v4021, 0.0
      %4228 = vadd.xlane.f32.xlu0 %v4227
      %v4229 = vpop.xlane.xlu0 %4228
      %v4230 = vsel %vm2714, %v4022, 0.0
      %4231 = vadd.xlane.f32.xlu0 %v4230
      %v4232 = vpop.xlane.xlu0 %4231
      %v4233 = vsel %vm2714, %v4023, 0.0
      %4234 = vadd.xlane.f32.xlu0 %v4233
      %v4235 = vpop.xlane.xlu0 %4234
      %v4236 = vsel %vm2714, %v4024, 0.0
      %4237 = vadd.xlane.f32.xlu0 %v4236
      %v4238 = vpop.xlane.xlu0 %4237
      %v4239 = vsel %vm2714, %v4025, 0.0
      %4240 = vadd.xlane.f32.xlu0 %v4239
      %v4241 = vpop.xlane.xlu0 %4240
      %v4242 = vsel %vm2714, %v4026, 0.0
      %4243 = vadd.xlane.f32.xlu0 %v4242
      %v4244 = vpop.xlane.xlu0 %4243
      %v4245 = vsel %vm2714, %v4027, 0.0
      %4246 = vadd.xlane.f32.xlu0 %v4245
      %v4247 = vpop.xlane.xlu0 %4246
      %v4248 = vsel %vm2714, %v4028, 0.0
      %4249 = vadd.xlane.f32.xlu0 %v4248
      %v4250 = vpop.xlane.xlu0 %4249
      %v4251 = vsel %vm2714, %v4029, 0.0
      %4252 = vadd.xlane.f32.xlu0 %v4251
      %v4253 = vpop.xlane.xlu0 %4252
      %v4254 = vsel %vm2714, %v4030, 0.0
      %4255 = vadd.xlane.f32.xlu0 %v4254
      %v4256 = vpop.xlane.xlu0 %4255
      %v4257 = vsel %vm2714, %v4031, 0.0
      %4258 = vadd.xlane.f32.xlu0 %v4257
      %v4259 = vpop.xlane.xlu0 %4258
      %v4260 = vsel %vm2714, %v4032, 0.0
      %4261 = vadd.xlane.f32.xlu0 %v4260
      %v4262 = vpop.xlane.xlu0 %4261
      %v4263 = vsel %vm2714, %v4033, 0.0
      %4264 = vadd.xlane.f32.xlu0 %v4263
      %v4265 = vpop.xlane.xlu0 %4264
      %v4266 = vsel %vm2751, %v4034, 0.0
      %4267 = vadd.xlane.f32.xlu0 %v4266
      %v4268 = vpop.xlane.xlu0 %4267
      %v4269 = vsel %vm2714, %v4035, 0.0
      %4270 = vadd.xlane.f32.xlu0 %v4269
      %v4271 = vpop.xlane.xlu0 %4270
      %v4272 = vsel %vm2714, %v4036, 0.0
      %4273 = vadd.xlane.f32.xlu0 %v4272
      %v4274 = vpop.xlane.xlu0 %4273
      %v4275 = vsel %vm2714, %v4037, 0.0
      %4276 = vadd.xlane.f32.xlu0 %v4275
      %v4277 = vpop.xlane.xlu0 %4276
      %v4278 = vsel %vm2714, %v4038, 0.0
      %4279 = vadd.xlane.f32.xlu0 %v4278
      %v4280 = vpop.xlane.xlu0 %4279
      %v4281 = vsel %vm2714, %v4039, 0.0
      %4282 = vadd.xlane.f32.xlu0 %v4281
      %v4283 = vpop.xlane.xlu0 %4282
      %v4284 = vsel %vm2714, %v4040, 0.0
      %4285 = vadd.xlane.f32.xlu0 %v4284
      %v4286 = vpop.xlane.xlu0 %4285
      %v4287 = vsel %vm2714, %v4041, 0.0
      %4288 = vadd.xlane.f32.xlu0 %v4287
      %v4289 = vpop.xlane.xlu0 %4288
      %v4290 = vsel %vm2714, %v4042, 0.0
      %4291 = vadd.xlane.f32.xlu0 %v4290
      %v4292 = vpop.xlane.xlu0 %4291
      %v4293 = vsel %vm2714, %v4043, 0.0
      %4294 = vadd.xlane.f32.xlu0 %v4293
      %v4295 = vpop.xlane.xlu0 %4294
      %v4296 = vsel %vm2714, %v4044, 0.0
      %4297 = vadd.xlane.f32.xlu0 %v4296
      %v4298 = vpop.xlane.xlu0 %4297
      %v4299 = vsel %vm2714, %v4045, 0.0
      %4300 = vadd.xlane.f32.xlu0 %v4299
      %v4301 = vpop.xlane.xlu0 %4300
      %v4302 = vsel %vm2714, %v4046, 0.0
      %4303 = vadd.xlane.f32.xlu0 %v4302
      %v4304 = vpop.xlane.xlu0 %4303
      %v4305 = vsel %vm2751, %v4047, 0.0
      %4306 = vadd.xlane.f32.xlu0 %v4305
      %v4307 = vpop.xlane.xlu0 %4306
      %v4308 = vsel %vm2714, %v4048, 0.0
      %4309 = vadd.xlane.f32.xlu0 %v4308
      %v4310 = vpop.xlane.xlu0 %4309
      %v4311 = vsel %vm2714, %v4049, 0.0
      %4312 = vadd.xlane.f32.xlu0 %v4311
      %v4313 = vpop.xlane.xlu0 %4312
      %v4314 = vsel %vm2714, %v4050, 0.0
      %4315 = vadd.xlane.f32.xlu0 %v4314
      %v4316 = vpop.xlane.xlu0 %4315
      %v4317 = vsel %vm2714, %v4051, 0.0
      %4318 = vadd.xlane.f32.xlu0 %v4317
      %v4319 = vpop.xlane.xlu0 %4318
      %v4320 = vsel %vm2714, %v4052, 0.0
      %4321 = vadd.xlane.f32.xlu0 %v4320
      %v4322 = vpop.xlane.xlu0 %4321
      %v4323 = vsel %vm2714, %v4053, 0.0
      %4324 = vadd.xlane.f32.xlu0 %v4323
      %v4325 = vpop.xlane.xlu0 %4324
      %v4326 = vsel %vm2714, %v4054, 0.0
      %4327 = vadd.xlane.f32.xlu0 %v4326
      %v4328 = vpop.xlane.xlu0 %4327
      %v4329 = vsel %vm2714, %v4055, 0.0
      %4330 = vadd.xlane.f32.xlu0 %v4329
      %v4331 = vpop.xlane.xlu0 %4330
      %v4332 = vsel %vm2714, %v4056, 0.0
      %4333 = vadd.xlane.f32.xlu0 %v4332
      %v4334 = vpop.xlane.xlu0 %4333
      %v4335 = vsel %vm2714, %v4057, 0.0
      %4336 = vadd.xlane.f32.xlu0 %v4335
      %v4337 = vpop.xlane.xlu0 %4336
      %v4338 = vsel %vm2714, %v4058, 0.0
      %4339 = vadd.xlane.f32.xlu0 %v4338
      %v4340 = vpop.xlane.xlu0 %4339
      %v4341 = vsel %vm2714, %v4059, 0.0
      %4342 = vadd.xlane.f32.xlu0 %v4341
      %v4343 = vpop.xlane.xlu0 %4342
      %v4344 = vsel %vm2751, %v4060, 0.0
      %4345 = vadd.xlane.f32.xlu0 %v4344
      %v4346 = vpop.xlane.xlu0 %4345
      %v4347 = vsel %vm2714, %v4061, 0.0
      %4348 = vadd.xlane.f32.xlu0 %v4347
      %v4349 = vpop.xlane.xlu0 %4348
      %v4350 = vsel %vm2714, %v4062, 0.0
      %4351 = vadd.xlane.f32.xlu0 %v4350
      %v4352 = vpop.xlane.xlu0 %4351
      %v4353 = vsel %vm2714, %v4063, 0.0
      %4354 = vadd.xlane.f32.xlu0 %v4353
      %v4355 = vpop.xlane.xlu0 %4354
      %v4356 = vsel %vm2714, %v4064, 0.0
      %4357 = vadd.xlane.f32.xlu0 %v4356
      %v4358 = vpop.xlane.xlu0 %4357
      %v4359 = vsel %vm2714, %v4065, 0.0
      %4360 = vadd.xlane.f32.xlu0 %v4359
      %v4361 = vpop.xlane.xlu0 %4360
      %v4362 = vsel %vm2714, %v4066, 0.0
      %4363 = vadd.xlane.f32.xlu0 %v4362
      %v4364 = vpop.xlane.xlu0 %4363
      %v4365 = vsel %vm2714, %v4067, 0.0
      %4366 = vadd.xlane.f32.xlu0 %v4365
      %v4367 = vpop.xlane.xlu0 %4366
      %v4368 = vsel %vm2714, %v4068, 0.0
      %4369 = vadd.xlane.f32.xlu0 %v4368
      %v4370 = vpop.xlane.xlu0 %4369
      %v4371 = vsel %vm2714, %v4069, 0.0
      %4372 = vadd.xlane.f32.xlu0 %v4371
      %v4373 = vpop.xlane.xlu0 %4372
      %v4374 = vsel %vm2714, %v4070, 0.0
      %4375 = vadd.xlane.f32.xlu0 %v4374
      %v4376 = vpop.xlane.xlu0 %4375
      %v4377 = vsel %vm2714, %v4071, 0.0
      %4378 = vadd.xlane.f32.xlu0 %v4377
      %v4379 = vpop.xlane.xlu0 %4378
      %v4380 = vsel %vm2714, %v4072, 0.0
      %4381 = vadd.xlane.f32.xlu0 %v4380
      %v4382 = vpop.xlane.xlu0 %4381
      %v4383 = vsel %vm2751, %v4073, 0.0
      %4384 = vadd.xlane.f32.xlu0 %v4383
      %v4385 = vpop.xlane.xlu0 %4384
      %v4386 = vadd.f32 %v4076, %v4079
      %v4387 = vadd.f32 %v4386, %v4082
      %v4388 = vadd.f32 %v4387, %v4085
      %v4389 = vadd.f32 %v4388, %v4088
      %v4390 = vadd.f32 %v4389, %v4091
      %v4391 = vadd.f32 %v4390, %v4094
      %v4392 = vadd.f32 %v4391, %v4097
      %v4393 = vadd.f32 %v4392, %v4100
      %v4394 = vadd.f32 %v4393, %v4103
      %v4395 = vadd.f32 %v4394, %v4106
      %v4396 = vadd.f32 %v4395, %v4109
      %v4397 = vsel %vm3039, %v4112, 0.0
      %v4398 = vadd.f32 %v4396, %v4397
      %v4399 = vrot.slane %v4398, 4
      %v4400 = vadd.f32 %v4398, %v4399
      %v4401 = vrot.slane %v4400, 2
      %v4402 = vadd.f32 %v4400, %v4401
      %v4403 = vrot.slane %v4402, 1
      %v4404 = vadd.f32 %v4402, %v4403
      %v4405 = vadd.f32 %v4115, %v4118
      %v4406 = vadd.f32 %v4405, %v4121
      %v4407 = vadd.f32 %v4406, %v4124
      %v4408 = vadd.f32 %v4407, %v4127
      %v4409 = vadd.f32 %v4408, %v4130
      %v4410 = vadd.f32 %v4409, %v4133
      %v4411 = vadd.f32 %v4410, %v4136
      %v4412 = vadd.f32 %v4411, %v4139
      %v4413 = vadd.f32 %v4412, %v4142
      %v4414 = vadd.f32 %v4413, %v4145
      %v4415 = vadd.f32 %v4414, %v4148
      %v4416 = vsel %vm3039, %v4151, 0.0
      %v4417 = vadd.f32 %v4415, %v4416
      %v4418 = vrot.slane %v4417, 4
      %v4419 = vadd.f32 %v4417, %v4418
      %v4420 = vrot.slane %v4419, 2
      %v4421 = vadd.f32 %v4419, %v4420
      %v4422 = vrot.slane %v4421, 1
      %v4423 = vadd.f32 %v4421, %v4422
      %v4424 = vadd.f32 %v4154, %v4157
      %v4425 = vadd.f32 %v4424, %v4160
      %v4426 = vadd.f32 %v4425, %v4163
      %v4427 = vadd.f32 %v4426, %v4166
      %v4428 = vadd.f32 %v4427, %v4169
      %v4429 = vadd.f32 %v4428, %v4172
      %v4430 = vadd.f32 %v4429, %v4175
      %v4431 = vadd.f32 %v4430, %v4178
      %v4432 = vadd.f32 %v4431, %v4181
      %v4433 = vadd.f32 %v4432, %v4184
      %v4434 = vadd.f32 %v4433, %v4187
      %v4435 = vsel %vm3039, %v4190, 0.0
      %v4436 = vadd.f32 %v4434, %v4435
      %v4437 = vrot.slane %v4436, 4
      %v4438 = vadd.f32 %v4436, %v4437
      %v4439 = vrot.slane %v4438, 2
      %v4440 = vadd.f32 %v4438, %v4439
      %v4441 = vrot.slane %v4440, 1
      %v4442 = vadd.f32 %v4440, %v4441
      %v4443 = vadd.f32 %v4193, %v4196
      %v4444 = vadd.f32 %v4443, %v4199
      %v4445 = vadd.f32 %v4444, %v4202
      %v4446 = vadd.f32 %v4445, %v4205
      %v4447 = vadd.f32 %v4446, %v4208
      %v4448 = vadd.f32 %v4447, %v4211
      %v4449 = vadd.f32 %v4448, %v4214
      %v4450 = vadd.f32 %v4449, %v4217
      %v4451 = vadd.f32 %v4450, %v4220
      %v4452 = vadd.f32 %v4451, %v4223
      %v4453 = vadd.f32 %v4452, %v4226
      %v4454 = vsel %vm3039, %v4229, 0.0
      %v4455 = vadd.f32 %v4453, %v4454
      %v4456 = vrot.slane %v4455, 4
      %v4457 = vadd.f32 %v4455, %v4456
      %v4458 = vrot.slane %v4457, 2
      %v4459 = vadd.f32 %v4457, %v4458
      %v4460 = vrot.slane %v4459, 1
      %v4461 = vadd.f32 %v4459, %v4460
      %v4462 = vadd.f32 %v4232, %v4235
      %v4463 = vadd.f32 %v4462, %v4238
      %v4464 = vadd.f32 %v4463, %v4241
      %v4465 = vadd.f32 %v4464, %v4244
      %v4466 = vadd.f32 %v4465, %v4247
      %v4467 = vadd.f32 %v4466, %v4250
      %v4468 = vadd.f32 %v4467, %v4253
      %v4469 = vadd.f32 %v4468, %v4256
      %v4470 = vadd.f32 %v4469, %v4259
      %v4471 = vadd.f32 %v4470, %v4262
      %v4472 = vadd.f32 %v4471, %v4265
      %v4473 = vsel %vm3039, %v4268, 0.0
      %v4474 = vadd.f32 %v4472, %v4473
      %v4475 = vrot.slane %v4474, 4
      %v4476 = vadd.f32 %v4474, %v4475
      %v4477 = vrot.slane %v4476, 2
      %v4478 = vadd.f32 %v4476, %v4477
      %v4479 = vrot.slane %v4478, 1
      %v4480 = vadd.f32 %v4478, %v4479
      %v4481 = vadd.f32 %v4271, %v4274
      %v4482 = vadd.f32 %v4481, %v4277
      %v4483 = vadd.f32 %v4482, %v4280
      %v4484 = vadd.f32 %v4483, %v4283
      %v4485 = vadd.f32 %v4484, %v4286
      %v4486 = vadd.f32 %v4485, %v4289
      %v4487 = vadd.f32 %v4486, %v4292
      %v4488 = vadd.f32 %v4487, %v4295
      %v4489 = vadd.f32 %v4488, %v4298
      %v4490 = vadd.f32 %v4489, %v4301
      %v4491 = vadd.f32 %v4490, %v4304
      %v4492 = vsel %vm3039, %v4307, 0.0
      %v4493 = vadd.f32 %v4491, %v4492
      %v4494 = vrot.slane %v4493, 4
      %v4495 = vadd.f32 %v4493, %v4494
      %v4496 = vrot.slane %v4495, 2
      %v4497 = vadd.f32 %v4495, %v4496
      %v4498 = vrot.slane %v4497, 1
      %v4499 = vadd.f32 %v4497, %v4498
      %v4500 = vadd.f32 %v4310, %v4313
      %v4501 = vadd.f32 %v4500, %v4316
      %v4502 = vadd.f32 %v4501, %v4319
      %v4503 = vadd.f32 %v4502, %v4322
      %v4504 = vadd.f32 %v4503, %v4325
      %v4505 = vadd.f32 %v4504, %v4328
      %v4506 = vadd.f32 %v4505, %v4331
      %v4507 = vadd.f32 %v4506, %v4334
      %v4508 = vadd.f32 %v4507, %v4337
      %v4509 = vadd.f32 %v4508, %v4340
      %v4510 = vadd.f32 %v4509, %v4343
      %v4511 = vsel %vm3039, %v4346, 0.0
      %v4512 = vadd.f32 %v4510, %v4511
      %v4513 = vrot.slane %v4512, 4
      %v4514 = vadd.f32 %v4512, %v4513
      %v4515 = vrot.slane %v4514, 2
      %v4516 = vadd.f32 %v4514, %v4515
      %v4517 = vrot.slane %v4516, 1
      %v4518 = vadd.f32 %v4516, %v4517
      %v4519 = vadd.f32 %v4349, %v4352
      %v4520 = vadd.f32 %v4519, %v4355
      %v4521 = vadd.f32 %v4520, %v4358
      %v4522 = vadd.f32 %v4521, %v4361
      %v4523 = vadd.f32 %v4522, %v4364
      %v4524 = vadd.f32 %v4523, %v4367
      %v4525 = vadd.f32 %v4524, %v4370
      %v4526 = vadd.f32 %v4525, %v4373
      %v4527 = vadd.f32 %v4526, %v4376
      %v4528 = vadd.f32 %v4527, %v4379
      %v4529 = vadd.f32 %v4528, %v4382
      %v4530 = vsel %vm3039, %v4385, 0.0
      %v4531 = vadd.f32 %v4529, %v4530
      %v4532 = vrot.slane %v4531, 4
      %v4533 = vadd.f32 %v4531, %v4532
      %v4534 = vrot.slane %v4533, 2
      %v4535 = vadd.f32 %v4533, %v4534
      %v4536 = vrot.slane %v4535, 1
      %v4537 = vadd.f32 %v4535, %v4536
      %v4538 = vld [vmem:[%s3] sm:$0xff]
      %v4539 = vld [vmem:[%s3 + $0x8] sm:$0xff]
      %v4540 = vld [vmem:[%s3 + $0x10] sm:$0xff]
      %v4541 = vld [vmem:[%s3 + $0x18] sm:$0xff]
      %v4542 = vld [vmem:[%s3 + $0x20] sm:$0xff]
      %v4543 = vld [vmem:[%s3 + $0x28] sm:$0xff]
      %v4544 = vld [vmem:[%s3 + $0x30] sm:$0xff]
      %v4545 = vld [vmem:[%s3 + $0x38] sm:$0xff]
      %v4546 = vld [vmem:[%s3 + $0x40] sm:$0xff]
      %v4547 = vld [vmem:[%s3 + $0x48] sm:$0xff]
      %v4548 = vld [vmem:[%s3 + $0x50] sm:$0xff]
      %v4549 = vld [vmem:[%s3 + $0x58] sm:$0xff]
      %v4550 = vld [vmem:[%s3 + $0x60] sm:$0xf]
      %v4551 = vmul.f32 %v3286, %v4538
      %v4552 = vmul.f32 %v3288, %v4539
      %v4553 = vmul.f32 %v3290, %v4540
      %v4554 = vmul.f32 %v3292, %v4541
      %v4555 = vmul.f32 %v3294, %v4542
      %v4556 = vmul.f32 %v3296, %v4543
      %v4557 = vmul.f32 %v3298, %v4544
      %v4558 = vmul.f32 %v3300, %v4545
      %v4559 = vmul.f32 %v3302, %v4546
      %v4560 = vmul.f32 %v3304, %v4547
      %v4561 = vmul.f32 %v3306, %v4548
      %v4562 = vmul.f32 %v3308, %v4549
      %v4563 = vmul.f32 %v3310, %v4550
      %v4564 = vmul.f32 %v3312, %v4538
      %v4565 = vmul.f32 %v3314, %v4539
      %v4566 = vmul.f32 %v3316, %v4540
      %v4567 = vmul.f32 %v3318, %v4541
      %v4568 = vmul.f32 %v3320, %v4542
      %v4569 = vmul.f32 %v3322, %v4543
      %v4570 = vmul.f32 %v3324, %v4544
      %v4571 = vmul.f32 %v3326, %v4545
      %v4572 = vmul.f32 %v3328, %v4546
      %v4573 = vmul.f32 %v3330, %v4547
      %v4574 = vmul.f32 %v3332, %v4548
      %v4575 = vmul.f32 %v3334, %v4549
      %v4576 = vmul.f32 %v3336, %v4550
      %v4577 = vmul.f32 %v3338, %v4538
      %v4578 = vmul.f32 %v3340, %v4539
      %v4579 = vmul.f32 %v3342, %v4540
      %v4580 = vmul.f32 %v3344, %v4541
      %v4581 = vmul.f32 %v3346, %v4542
      %v4582 = vmul.f32 %v3348, %v4543
      %v4583 = vmul.f32 %v3350, %v4544
      %v4584 = vmul.f32 %v3352, %v4545
      %v4585 = vmul.f32 %v3354, %v4546
      %v4586 = vmul.f32 %v3356, %v4547
      %v4587 = vmul.f32 %v3358, %v4548
      %v4588 = vmul.f32 %v3360, %v4549
      %v4589 = vmul.f32 %v3362, %v4550
      %v4590 = vmul.f32 %v3364, %v4538
      %v4591 = vmul.f32 %v3366, %v4539
      %v4592 = vmul.f32 %v3368, %v4540
      %v4593 = vmul.f32 %v3370, %v4541
      %v4594 = vmul.f32 %v3372, %v4542
      %v4595 = vmul.f32 %v3374, %v4543
      %v4596 = vmul.f32 %v3376, %v4544
      %v4597 = vmul.f32 %v3378, %v4545
      %v4598 = vmul.f32 %v3380, %v4546
      %v4599 = vmul.f32 %v3382, %v4547
      %v4600 = vmul.f32 %v3384, %v4548
      %v4601 = vmul.f32 %v3386, %v4549
      %v4602 = vmul.f32 %v3388, %v4550
      %v4603 = vmul.f32 %v3390, %v4538
      %v4604 = vmul.f32 %v3392, %v4539
      %v4605 = vmul.f32 %v3394, %v4540
      %v4606 = vmul.f32 %v3396, %v4541
      %v4607 = vmul.f32 %v3398, %v4542
      %v4608 = vmul.f32 %v3400, %v4543
      %v4609 = vmul.f32 %v3402, %v4544
      %v4610 = vmul.f32 %v3404, %v4545
      %v4611 = vmul.f32 %v3406, %v4546
      %v4612 = vmul.f32 %v3408, %v4547
      %v4613 = vmul.f32 %v3410, %v4548
      %v4614 = vmul.f32 %v3412, %v4549
      %v4615 = vmul.f32 %v3414, %v4550
      %v4616 = vmul.f32 %v3416, %v4538
      %v4617 = vmul.f32 %v3418, %v4539
      %v4618 = vmul.f32 %v3420, %v4540
      %v4619 = vmul.f32 %v3422, %v4541
      %v4620 = vmul.f32 %v3424, %v4542
      %v4621 = vmul.f32 %v3426, %v4543
      %v4622 = vmul.f32 %v3428, %v4544
      %v4623 = vmul.f32 %v3430, %v4545
      %v4624 = vmul.f32 %v3432, %v4546
      %v4625 = vmul.f32 %v3434, %v4547
      %v4626 = vmul.f32 %v3436, %v4548
      %v4627 = vmul.f32 %v3438, %v4549
      %v4628 = vmul.f32 %v3440, %v4550
      %v4629 = vmul.f32 %v3442, %v4538
      %v4630 = vmul.f32 %v3444, %v4539
      %v4631 = vmul.f32 %v3446, %v4540
      %v4632 = vmul.f32 %v3448, %v4541
      %v4633 = vmul.f32 %v3450, %v4542
      %v4634 = vmul.f32 %v3452, %v4543
      %v4635 = vmul.f32 %v3454, %v4544
      %v4636 = vmul.f32 %v3456, %v4545
      %v4637 = vmul.f32 %v3458, %v4546
      %v4638 = vmul.f32 %v3460, %v4547
      %v4639 = vmul.f32 %v3462, %v4548
      %v4640 = vmul.f32 %v3464, %v4549
      %v4641 = vmul.f32 %v3466, %v4550
      %v4642 = vmul.f32 %v3468, %v4538
      %v4643 = vmul.f32 %v3470, %v4539
      %v4644 = vmul.f32 %v3472, %v4540
      %v4645 = vmul.f32 %v3474, %v4541
      %v4646 = vmul.f32 %v3476, %v4542
      %v4647 = vmul.f32 %v3478, %v4543
      %v4648 = vmul.f32 %v3480, %v4544
      %v4649 = vmul.f32 %v3482, %v4545
      %v4650 = vmul.f32 %v3484, %v4546
      %v4651 = vmul.f32 %v3486, %v4547
      %v4652 = vmul.f32 %v3488, %v4548
      %v4653 = vmul.f32 %v3490, %v4549
      %v4654 = vmul.f32 %v3492, %v4550
      %v4655 = vsel %vm2714, %v4551, 0.0
      %4656 = vadd.xlane.f32.xlu0 %v4655
      %v4657 = vpop.xlane.xlu0 %4656
      %v4658 = vsel %vm2714, %v4552, 0.0
      %4659 = vadd.xlane.f32.xlu0 %v4658
      %v4660 = vpop.xlane.xlu0 %4659
      %v4661 = vsel %vm2714, %v4553, 0.0
      %4662 = vadd.xlane.f32.xlu0 %v4661
      %v4663 = vpop.xlane.xlu0 %4662
      %v4664 = vsel %vm2714, %v4554, 0.0
      %4665 = vadd.xlane.f32.xlu0 %v4664
      %v4666 = vpop.xlane.xlu0 %4665
      %v4667 = vsel %vm2714, %v4555, 0.0
      %4668 = vadd.xlane.f32.xlu0 %v4667
      %v4669 = vpop.xlane.xlu0 %4668
      %v4670 = vsel %vm2714, %v4556, 0.0
      %4671 = vadd.xlane.f32.xlu0 %v4670
      %v4672 = vpop.xlane.xlu0 %4671
      %v4673 = vsel %vm2714, %v4557, 0.0
      %4674 = vadd.xlane.f32.xlu0 %v4673
      %v4675 = vpop.xlane.xlu0 %4674
      %v4676 = vsel %vm2714, %v4558, 0.0
      %4677 = vadd.xlane.f32.xlu0 %v4676
      %v4678 = vpop.xlane.xlu0 %4677
      %v4679 = vsel %vm2714, %v4559, 0.0
      %4680 = vadd.xlane.f32.xlu0 %v4679
      %v4681 = vpop.xlane.xlu0 %4680
      %v4682 = vsel %vm2714, %v4560, 0.0
      %4683 = vadd.xlane.f32.xlu0 %v4682
      %v4684 = vpop.xlane.xlu0 %4683
      %v4685 = vsel %vm2714, %v4561, 0.0
      %4686 = vadd.xlane.f32.xlu0 %v4685
      %v4687 = vpop.xlane.xlu0 %4686
      %v4688 = vsel %vm2714, %v4562, 0.0
      %4689 = vadd.xlane.f32.xlu0 %v4688
      %v4690 = vpop.xlane.xlu0 %4689
      %v4691 = vsel %vm2751, %v4563, 0.0
      %4692 = vadd.xlane.f32.xlu0 %v4691
      %v4693 = vpop.xlane.xlu0 %4692
      %v4694 = vsel %vm2714, %v4564, 0.0
      %4695 = vadd.xlane.f32.xlu0 %v4694
      %v4696 = vpop.xlane.xlu0 %4695
      %v4697 = vsel %vm2714, %v4565, 0.0
      %4698 = vadd.xlane.f32.xlu0 %v4697
      %v4699 = vpop.xlane.xlu0 %4698
      %v4700 = vsel %vm2714, %v4566, 0.0
      %4701 = vadd.xlane.f32.xlu0 %v4700
      %v4702 = vpop.xlane.xlu0 %4701
      %v4703 = vsel %vm2714, %v4567, 0.0
      %4704 = vadd.xlane.f32.xlu0 %v4703
      %v4705 = vpop.xlane.xlu0 %4704
      %v4706 = vsel %vm2714, %v4568, 0.0
      %4707 = vadd.xlane.f32.xlu0 %v4706
      %v4708 = vpop.xlane.xlu0 %4707
      %v4709 = vsel %vm2714, %v4569, 0.0
      %4710 = vadd.xlane.f32.xlu0 %v4709
      %v4711 = vpop.xlane.xlu0 %4710
      %v4712 = vsel %vm2714, %v4570, 0.0
      %4713 = vadd.xlane.f32.xlu0 %v4712
      %v4714 = vpop.xlane.xlu0 %4713
      %v4715 = vsel %vm2714, %v4571, 0.0
      %4716 = vadd.xlane.f32.xlu0 %v4715
      %v4717 = vpop.xlane.xlu0 %4716
      %v4718 = vsel %vm2714, %v4572, 0.0
      %4719 = vadd.xlane.f32.xlu0 %v4718
      %v4720 = vpop.xlane.xlu0 %4719
      %v4721 = vsel %vm2714, %v4573, 0.0
      %4722 = vadd.xlane.f32.xlu0 %v4721
      %v4723 = vpop.xlane.xlu0 %4722
      %v4724 = vsel %vm2714, %v4574, 0.0
      %4725 = vadd.xlane.f32.xlu0 %v4724
      %v4726 = vpop.xlane.xlu0 %4725
      %v4727 = vsel %vm2714, %v4575, 0.0
      %4728 = vadd.xlane.f32.xlu0 %v4727
      %v4729 = vpop.xlane.xlu0 %4728
      %v4730 = vsel %vm2751, %v4576, 0.0
      %4731 = vadd.xlane.f32.xlu0 %v4730
      %v4732 = vpop.xlane.xlu0 %4731
      %v4733 = vsel %vm2714, %v4577, 0.0
      %4734 = vadd.xlane.f32.xlu0 %v4733
      %v4735 = vpop.xlane.xlu0 %4734
      %v4736 = vsel %vm2714, %v4578, 0.0
      %4737 = vadd.xlane.f32.xlu0 %v4736
      %v4738 = vpop.xlane.xlu0 %4737
      %v4739 = vsel %vm2714, %v4579, 0.0
      %4740 = vadd.xlane.f32.xlu0 %v4739
      %v4741 = vpop.xlane.xlu0 %4740
      %v4742 = vsel %vm2714, %v4580, 0.0
      %4743 = vadd.xlane.f32.xlu0 %v4742
      %v4744 = vpop.xlane.xlu0 %4743
      %v4745 = vsel %vm2714, %v4581, 0.0
      %4746 = vadd.xlane.f32.xlu0 %v4745
      %v4747 = vpop.xlane.xlu0 %4746
      %v4748 = vsel %vm2714, %v4582, 0.0
      %4749 = vadd.xlane.f32.xlu0 %v4748
      %v4750 = vpop.xlane.xlu0 %4749
      %v4751 = vsel %vm2714, %v4583, 0.0
      %4752 = vadd.xlane.f32.xlu0 %v4751
      %v4753 = vpop.xlane.xlu0 %4752
      %v4754 = vsel %vm2714, %v4584, 0.0
      %4755 = vadd.xlane.f32.xlu0 %v4754
      %v4756 = vpop.xlane.xlu0 %4755
      %v4757 = vsel %vm2714, %v4585, 0.0
      %4758 = vadd.xlane.f32.xlu0 %v4757
      %v4759 = vpop.xlane.xlu0 %4758
      %v4760 = vsel %vm2714, %v4586, 0.0
      %4761 = vadd.xlane.f32.xlu0 %v4760
      %v4762 = vpop.xlane.xlu0 %4761
      %v4763 = vsel %vm2714, %v4587, 0.0
      %4764 = vadd.xlane.f32.xlu0 %v4763
      %v4765 = vpop.xlane.xlu0 %4764
      %v4766 = vsel %vm2714, %v4588, 0.0
      %4767 = vadd.xlane.f32.xlu0 %v4766
      %v4768 = vpop.xlane.xlu0 %4767
      %v4769 = vsel %vm2751, %v4589, 0.0
      %4770 = vadd.xlane.f32.xlu0 %v4769
      %v4771 = vpop.xlane.xlu0 %4770
      %v4772 = vsel %vm2714, %v4590, 0.0
      %4773 = vadd.xlane.f32.xlu0 %v4772
      %v4774 = vpop.xlane.xlu0 %4773
      %v4775 = vsel %vm2714, %v4591, 0.0
      %4776 = vadd.xlane.f32.xlu0 %v4775
      %v4777 = vpop.xlane.xlu0 %4776
      %v4778 = vsel %vm2714, %v4592, 0.0
      %4779 = vadd.xlane.f32.xlu0 %v4778
      %v4780 = vpop.xlane.xlu0 %4779
      %v4781 = vsel %vm2714, %v4593, 0.0
      %4782 = vadd.xlane.f32.xlu0 %v4781
      %v4783 = vpop.xlane.xlu0 %4782
      %v4784 = vsel %vm2714, %v4594, 0.0
      %4785 = vadd.xlane.f32.xlu0 %v4784
      %v4786 = vpop.xlane.xlu0 %4785
      %v4787 = vsel %vm2714, %v4595, 0.0
      %4788 = vadd.xlane.f32.xlu0 %v4787
      %v4789 = vpop.xlane.xlu0 %4788
      %v4790 = vsel %vm2714, %v4596, 0.0
      %4791 = vadd.xlane.f32.xlu0 %v4790
      %v4792 = vpop.xlane.xlu0 %4791
      %v4793 = vsel %vm2714, %v4597, 0.0
      %4794 = vadd.xlane.f32.xlu0 %v4793
      %v4795 = vpop.xlane.xlu0 %4794
      %v4796 = vsel %vm2714, %v4598, 0.0
      %4797 = vadd.xlane.f32.xlu0 %v4796
      %v4798 = vpop.xlane.xlu0 %4797
      %v4799 = vsel %vm2714, %v4599, 0.0
      %4800 = vadd.xlane.f32.xlu0 %v4799
      %v4801 = vpop.xlane.xlu0 %4800
      %v4802 = vsel %vm2714, %v4600, 0.0
      %4803 = vadd.xlane.f32.xlu0 %v4802
      %v4804 = vpop.xlane.xlu0 %4803
      %v4805 = vsel %vm2714, %v4601, 0.0
      %4806 = vadd.xlane.f32.xlu0 %v4805
      %v4807 = vpop.xlane.xlu0 %4806
      %v4808 = vsel %vm2751, %v4602, 0.0
      %4809 = vadd.xlane.f32.xlu0 %v4808
      %v4810 = vpop.xlane.xlu0 %4809
      %v4811 = vsel %vm2714, %v4603, 0.0
      %4812 = vadd.xlane.f32.xlu0 %v4811
      %v4813 = vpop.xlane.xlu0 %4812
      %v4814 = vsel %vm2714, %v4604, 0.0
      %4815 = vadd.xlane.f32.xlu0 %v4814
      %v4816 = vpop.xlane.xlu0 %4815
      %v4817 = vsel %vm2714, %v4605, 0.0
      %4818 = vadd.xlane.f32.xlu0 %v4817
      %v4819 = vpop.xlane.xlu0 %4818
      %v4820 = vsel %vm2714, %v4606, 0.0
      %4821 = vadd.xlane.f32.xlu0 %v4820
      %v4822 = vpop.xlane.xlu0 %4821
      %v4823 = vsel %vm2714, %v4607, 0.0
      %4824 = vadd.xlane.f32.xlu0 %v4823
      %v4825 = vpop.xlane.xlu0 %4824
      %v4826 = vsel %vm2714, %v4608, 0.0
      %4827 = vadd.xlane.f32.xlu0 %v4826
      %v4828 = vpop.xlane.xlu0 %4827
      %v4829 = vsel %vm2714, %v4609, 0.0
      %4830 = vadd.xlane.f32.xlu0 %v4829
      %v4831 = vpop.xlane.xlu0 %4830
      %v4832 = vsel %vm2714, %v4610, 0.0
      %4833 = vadd.xlane.f32.xlu0 %v4832
      %v4834 = vpop.xlane.xlu0 %4833
      %v4835 = vsel %vm2714, %v4611, 0.0
      %4836 = vadd.xlane.f32.xlu0 %v4835
      %v4837 = vpop.xlane.xlu0 %4836
      %v4838 = vsel %vm2714, %v4612, 0.0
      %4839 = vadd.xlane.f32.xlu0 %v4838
      %v4840 = vpop.xlane.xlu0 %4839
      %v4841 = vsel %vm2714, %v4613, 0.0
      %4842 = vadd.xlane.f32.xlu0 %v4841
      %v4843 = vpop.xlane.xlu0 %4842
      %v4844 = vsel %vm2714, %v4614, 0.0
      %4845 = vadd.xlane.f32.xlu0 %v4844
      %v4846 = vpop.xlane.xlu0 %4845
      %v4847 = vsel %vm2751, %v4615, 0.0
      %4848 = vadd.xlane.f32.xlu0 %v4847
      %v4849 = vpop.xlane.xlu0 %4848
      %v4850 = vsel %vm2714, %v4616, 0.0
      %4851 = vadd.xlane.f32.xlu0 %v4850
      %v4852 = vpop.xlane.xlu0 %4851
      %v4853 = vsel %vm2714, %v4617, 0.0
      %4854 = vadd.xlane.f32.xlu0 %v4853
      %v4855 = vpop.xlane.xlu0 %4854
      %v4856 = vsel %vm2714, %v4618, 0.0
      %4857 = vadd.xlane.f32.xlu0 %v4856
      %v4858 = vpop.xlane.xlu0 %4857
      %v4859 = vsel %vm2714, %v4619, 0.0
      %4860 = vadd.xlane.f32.xlu0 %v4859
      %v4861 = vpop.xlane.xlu0 %4860
      %v4862 = vsel %vm2714, %v4620, 0.0
      %4863 = vadd.xlane.f32.xlu0 %v4862
      %v4864 = vpop.xlane.xlu0 %4863
      %v4865 = vsel %vm2714, %v4621, 0.0
      %4866 = vadd.xlane.f32.xlu0 %v4865
      %v4867 = vpop.xlane.xlu0 %4866
      %v4868 = vsel %vm2714, %v4622, 0.0
      %4869 = vadd.xlane.f32.xlu0 %v4868
      %v4870 = vpop.xlane.xlu0 %4869
      %v4871 = vsel %vm2714, %v4623, 0.0
      %4872 = vadd.xlane.f32.xlu0 %v4871
      %v4873 = vpop.xlane.xlu0 %4872
      %v4874 = vsel %vm2714, %v4624, 0.0
      %4875 = vadd.xlane.f32.xlu0 %v4874
      %v4876 = vpop.xlane.xlu0 %4875
      %v4877 = vsel %vm2714, %v4625, 0.0
      %4878 = vadd.xlane.f32.xlu0 %v4877
      %v4879 = vpop.xlane.xlu0 %4878
      %v4880 = vsel %vm2714, %v4626, 0.0
      %4881 = vadd.xlane.f32.xlu0 %v4880
      %v4882 = vpop.xlane.xlu0 %4881
      %v4883 = vsel %vm2714, %v4627, 0.0
      %4884 = vadd.xlane.f32.xlu0 %v4883
      %v4885 = vpop.xlane.xlu0 %4884
      %v4886 = vsel %vm2751, %v4628, 0.0
      %4887 = vadd.xlane.f32.xlu0 %v4886
      %v4888 = vpop.xlane.xlu0 %4887
      %v4889 = vsel %vm2714, %v4629, 0.0
      %4890 = vadd.xlane.f32.xlu0 %v4889
      %v4891 = vpop.xlane.xlu0 %4890
      %v4892 = vsel %vm2714, %v4630, 0.0
      %4893 = vadd.xlane.f32.xlu0 %v4892
      %v4894 = vpop.xlane.xlu0 %4893
      %v4895 = vsel %vm2714, %v4631, 0.0
      %4896 = vadd.xlane.f32.xlu0 %v4895
      %v4897 = vpop.xlane.xlu0 %4896
      %v4898 = vsel %vm2714, %v4632, 0.0
      %4899 = vadd.xlane.f32.xlu0 %v4898
      %v4900 = vpop.xlane.xlu0 %4899
      %v4901 = vsel %vm2714, %v4633, 0.0
      %4902 = vadd.xlane.f32.xlu0 %v4901
      %v4903 = vpop.xlane.xlu0 %4902
      %v4904 = vsel %vm2714, %v4634, 0.0
      %4905 = vadd.xlane.f32.xlu0 %v4904
      %v4906 = vpop.xlane.xlu0 %4905
      %v4907 = vsel %vm2714, %v4635, 0.0
      %4908 = vadd.xlane.f32.xlu0 %v4907
      %v4909 = vpop.xlane.xlu0 %4908
      %v4910 = vsel %vm2714, %v4636, 0.0
      %4911 = vadd.xlane.f32.xlu0 %v4910
      %v4912 = vpop.xlane.xlu0 %4911
      %v4913 = vsel %vm2714, %v4637, 0.0
      %4914 = vadd.xlane.f32.xlu0 %v4913
      %v4915 = vpop.xlane.xlu0 %4914
      %v4916 = vsel %vm2714, %v4638, 0.0
      %4917 = vadd.xlane.f32.xlu0 %v4916
      %v4918 = vpop.xlane.xlu0 %4917
      %v4919 = vsel %vm2714, %v4639, 0.0
      %4920 = vadd.xlane.f32.xlu0 %v4919
      %v4921 = vpop.xlane.xlu0 %4920
      %v4922 = vsel %vm2714, %v4640, 0.0
      %4923 = vadd.xlane.f32.xlu0 %v4922
      %v4924 = vpop.xlane.xlu0 %4923
      %v4925 = vsel %vm2751, %v4641, 0.0
      %4926 = vadd.xlane.f32.xlu0 %v4925
      %v4927 = vpop.xlane.xlu0 %4926
      %v4928 = vsel %vm2714, %v4642, 0.0
      %4929 = vadd.xlane.f32.xlu0 %v4928
      %v4930 = vpop.xlane.xlu0 %4929
      %v4931 = vsel %vm2714, %v4643, 0.0
      %4932 = vadd.xlane.f32.xlu0 %v4931
      %v4933 = vpop.xlane.xlu0 %4932
      %v4934 = vsel %vm2714, %v4644, 0.0
      %4935 = vadd.xlane.f32.xlu0 %v4934
      %v4936 = vpop.xlane.xlu0 %4935
      %v4937 = vsel %vm2714, %v4645, 0.0
      %4938 = vadd.xlane.f32.xlu0 %v4937
      %v4939 = vpop.xlane.xlu0 %4938
      %v4940 = vsel %vm2714, %v4646, 0.0
      %4941 = vadd.xlane.f32.xlu0 %v4940
      %v4942 = vpop.xlane.xlu0 %4941
      %v4943 = vsel %vm2714, %v4647, 0.0
      %4944 = vadd.xlane.f32.xlu0 %v4943
      %v4945 = vpop.xlane.xlu0 %4944
      %v4946 = vsel %vm2714, %v4648, 0.0
      %4947 = vadd.xlane.f32.xlu0 %v4946
      %v4948 = vpop.xlane.xlu0 %4947
      %v4949 = vsel %vm2714, %v4649, 0.0
      %4950 = vadd.xlane.f32.xlu0 %v4949
      %v4951 = vpop.xlane.xlu0 %4950
      %v4952 = vsel %vm2714, %v4650, 0.0
      %4953 = vadd.xlane.f32.xlu0 %v4952
      %v4954 = vpop.xlane.xlu0 %4953
      %v4955 = vsel %vm2714, %v4651, 0.0
      %4956 = vadd.xlane.f32.xlu0 %v4955
      %v4957 = vpop.xlane.xlu0 %4956
      %v4958 = vsel %vm2714, %v4652, 0.0
      %4959 = vadd.xlane.f32.xlu0 %v4958
      %v4960 = vpop.xlane.xlu0 %4959
      %v4961 = vsel %vm2714, %v4653, 0.0
      %4962 = vadd.xlane.f32.xlu0 %v4961
      %v4963 = vpop.xlane.xlu0 %4962
      %v4964 = vsel %vm2751, %v4654, 0.0
      %4965 = vadd.xlane.f32.xlu0 %v4964
      %v4966 = vpop.xlane.xlu0 %4965
      %v4967 = vadd.f32 %v4657, %v4660
      %v4968 = vadd.f32 %v4967, %v4663
      %v4969 = vadd.f32 %v4968, %v4666
      %v4970 = vadd.f32 %v4969, %v4669
      %v4971 = vadd.f32 %v4970, %v4672
      %v4972 = vadd.f32 %v4971, %v4675
      %v4973 = vadd.f32 %v4972, %v4678
      %v4974 = vadd.f32 %v4973, %v4681
      %v4975 = vadd.f32 %v4974, %v4684
      %v4976 = vadd.f32 %v4975, %v4687
      %v4977 = vadd.f32 %v4976, %v4690
      %v4978 = vsel %vm3039, %v4693, 0.0
      %v4979 = vadd.f32 %v4977, %v4978
      %v4980 = vrot.slane %v4979, 4
      %v4981 = vadd.f32 %v4979, %v4980
      %v4982 = vrot.slane %v4981, 2
      %v4983 = vadd.f32 %v4981, %v4982
      %v4984 = vrot.slane %v4983, 1
      %v4985 = vadd.f32 %v4983, %v4984
      %v4986 = vadd.f32 %v4696, %v4699
      %v4987 = vadd.f32 %v4986, %v4702
      %v4988 = vadd.f32 %v4987, %v4705
      %v4989 = vadd.f32 %v4988, %v4708
      %v4990 = vadd.f32 %v4989, %v4711
      %v4991 = vadd.f32 %v4990, %v4714
      %v4992 = vadd.f32 %v4991, %v4717
      %v4993 = vadd.f32 %v4992, %v4720
      %v4994 = vadd.f32 %v4993, %v4723
      %v4995 = vadd.f32 %v4994, %v4726
      %v4996 = vadd.f32 %v4995, %v4729
      %v4997 = vsel %vm3039, %v4732, 0.0
      %v4998 = vadd.f32 %v4996, %v4997
      %v4999 = vrot.slane %v4998, 4
      %v5000 = vadd.f32 %v4998, %v4999
      %v5001 = vrot.slane %v5000, 2
      %v5002 = vadd.f32 %v5000, %v5001
      %v5003 = vrot.slane %v5002, 1
      %v5004 = vadd.f32 %v5002, %v5003
      %v5005 = vadd.f32 %v4735, %v4738
      %v5006 = vadd.f32 %v5005, %v4741
      %v5007 = vadd.f32 %v5006, %v4744
      %v5008 = vadd.f32 %v5007, %v4747
      %v5009 = vadd.f32 %v5008, %v4750
      %v5010 = vadd.f32 %v5009, %v4753
      %v5011 = vadd.f32 %v5010, %v4756
      %v5012 = vadd.f32 %v5011, %v4759
      %v5013 = vadd.f32 %v5012, %v4762
      %v5014 = vadd.f32 %v5013, %v4765
      %v5015 = vadd.f32 %v5014, %v4768
      %v5016 = vsel %vm3039, %v4771, 0.0
      %v5017 = vadd.f32 %v5015, %v5016
      %v5018 = vrot.slane %v5017, 4
      %v5019 = vadd.f32 %v5017, %v5018
      %v5020 = vrot.slane %v5019, 2
      %v5021 = vadd.f32 %v5019, %v5020
      %v5022 = vrot.slane %v5021, 1
      %v5023 = vadd.f32 %v5021, %v5022
      %v5024 = vadd.f32 %v4774, %v4777
      %v5025 = vadd.f32 %v5024, %v4780
      %v5026 = vadd.f32 %v5025, %v4783
      %v5027 = vadd.f32 %v5026, %v4786
      %v5028 = vadd.f32 %v5027, %v4789
      %v5029 = vadd.f32 %v5028, %v4792
      %v5030 = vadd.f32 %v5029, %v4795
      %v5031 = vadd.f32 %v5030, %v4798
      %v5032 = vadd.f32 %v5031, %v4801
      %v5033 = vadd.f32 %v5032, %v4804
      %v5034 = vadd.f32 %v5033, %v4807
      %v5035 = vsel %vm3039, %v4810, 0.0
      %v5036 = vadd.f32 %v5034, %v5035
      %v5037 = vrot.slane %v5036, 4
      %v5038 = vadd.f32 %v5036, %v5037
      %v5039 = vrot.slane %v5038, 2
      %v5040 = vadd.f32 %v5038, %v5039
      %v5041 = vrot.slane %v5040, 1
      %v5042 = vadd.f32 %v5040, %v5041
      %v5043 = vadd.f32 %v4813, %v4816
      %v5044 = vadd.f32 %v5043, %v4819
      %v5045 = vadd.f32 %v5044, %v4822
      %v5046 = vadd.f32 %v5045, %v4825
      %v5047 = vadd.f32 %v5046, %v4828
      %v5048 = vadd.f32 %v5047, %v4831
      %v5049 = vadd.f32 %v5048, %v4834
      %v5050 = vadd.f32 %v5049, %v4837
      %v5051 = vadd.f32 %v5050, %v4840
      %v5052 = vadd.f32 %v5051, %v4843
      %v5053 = vadd.f32 %v5052, %v4846
      %v5054 = vsel %vm3039, %v4849, 0.0
      %v5055 = vadd.f32 %v5053, %v5054
      %v5056 = vrot.slane %v5055, 4
      %v5057 = vadd.f32 %v5055, %v5056
      %v5058 = vrot.slane %v5057, 2
      %v5059 = vadd.f32 %v5057, %v5058
      %v5060 = vrot.slane %v5059, 1
      %v5061 = vadd.f32 %v5059, %v5060
      %v5062 = vadd.f32 %v4852, %v4855
      %v5063 = vadd.f32 %v5062, %v4858
      %v5064 = vadd.f32 %v5063, %v4861
      %v5065 = vadd.f32 %v5064, %v4864
      %v5066 = vadd.f32 %v5065, %v4867
      %v5067 = vadd.f32 %v5066, %v4870
      %v5068 = vadd.f32 %v5067, %v4873
      %v5069 = vadd.f32 %v5068, %v4876
      %v5070 = vadd.f32 %v5069, %v4879
      %v5071 = vadd.f32 %v5070, %v4882
      %v5072 = vadd.f32 %v5071, %v4885
      %v5073 = vsel %vm3039, %v4888, 0.0
      %v5074 = vadd.f32 %v5072, %v5073
      %v5075 = vrot.slane %v5074, 4
      %v5076 = vadd.f32 %v5074, %v5075
      %v5077 = vrot.slane %v5076, 2
      %v5078 = vadd.f32 %v5076, %v5077
      %v5079 = vrot.slane %v5078, 1
      %v5080 = vadd.f32 %v5078, %v5079
      %v5081 = vadd.f32 %v4891, %v4894
      %v5082 = vadd.f32 %v5081, %v4897
      %v5083 = vadd.f32 %v5082, %v4900
      %v5084 = vadd.f32 %v5083, %v4903
      %v5085 = vadd.f32 %v5084, %v4906
      %v5086 = vadd.f32 %v5085, %v4909
      %v5087 = vadd.f32 %v5086, %v4912
      %v5088 = vadd.f32 %v5087, %v4915
      %v5089 = vadd.f32 %v5088, %v4918
      %v5090 = vadd.f32 %v5089, %v4921
      %v5091 = vadd.f32 %v5090, %v4924
      %v5092 = vsel %vm3039, %v4927, 0.0
      %v5093 = vadd.f32 %v5091, %v5092
      %v5094 = vrot.slane %v5093, 4
      %v5095 = vadd.f32 %v5093, %v5094
      %v5096 = vrot.slane %v5095, 2
      %v5097 = vadd.f32 %v5095, %v5096
      %v5098 = vrot.slane %v5097, 1
      %v5099 = vadd.f32 %v5097, %v5098
      %v5100 = vadd.f32 %v4930, %v4933
      %v5101 = vadd.f32 %v5100, %v4936
      %v5102 = vadd.f32 %v5101, %v4939
      %v5103 = vadd.f32 %v5102, %v4942
      %v5104 = vadd.f32 %v5103, %v4945
      %v5105 = vadd.f32 %v5104, %v4948
      %v5106 = vadd.f32 %v5105, %v4951
      %v5107 = vadd.f32 %v5106, %v4954
      %v5108 = vadd.f32 %v5107, %v4957
      %v5109 = vadd.f32 %v5108, %v4960
      %v5110 = vadd.f32 %v5109, %v4963
      %v5111 = vsel %vm3039, %v4966, 0.0
      %v5112 = vadd.f32 %v5110, %v5111
      %v5113 = vrot.slane %v5112, 4
      %v5114 = vadd.f32 %v5112, %v5113
      %v5115 = vrot.slane %v5114, 2
      %v5116 = vadd.f32 %v5114, %v5115
      %v5117 = vrot.slane %v5116, 1
      %v5118 = vadd.f32 %v5116, %v5117
      %v5119 = vrcp.pop %v3823
      %v5120 = vmul.f32 1.0, %v5119
      %v5121 = vrcp.pop %v3842
      %v5122 = vmul.f32 1.0, %v5121
      %v5123 = vrcp.pop %v3861
      %v5124 = vmul.f32 1.0, %v5123
      %v5125 = vrcp.pop %v3880
      %v5126 = vmul.f32 1.0, %v5125
      %v5127 = vrcp.pop %v3899
      %v5128 = vmul.f32 1.0, %v5127
      %v5129 = vrcp.pop %v3918
      %v5130 = vmul.f32 1.0, %v5129
      %v5131 = vrcp.pop %v3937
      %v5132 = vmul.f32 1.0, %v5131
      %v5133 = vrcp.pop %v3956
      %v5134 = vmul.f32 1.0, %v5133
      %v5135 = vmul.f32 %v4404, %v5120
      %v5136 = vmul.f32 %v4423, %v5122
      %v5137 = vmul.f32 %v4442, %v5124
      %v5138 = vmul.f32 %v4461, %v5126
      %v5139 = vmul.f32 %v4480, %v5128
      %v5140 = vmul.f32 %v4499, %v5130
      %v5141 = vmul.f32 %v4518, %v5132
      %v5142 = vmul.f32 %v4537, %v5134
      %v5143 = vmul.f32 %v5135, 12.0
      %v5144 = vmul.f32 %v5136, 12.0
      %v5145 = vmul.f32 %v5137, 12.0
      %v5146 = vmul.f32 %v5138, 12.0
      %v5147 = vmul.f32 %v5139, 12.0
      %v5148 = vmul.f32 %v5140, 12.0
      %v5149 = vmul.f32 %v5141, 12.0
      %v5150 = vmul.f32 %v5142, 12.0
      %v5151 = vmul.f32 %v4985, %v5120
      %v5152 = vmul.f32 %v5004, %v5122
      %v5153 = vmul.f32 %v5023, %v5124
      %v5154 = vmul.f32 %v5042, %v5126
      %v5155 = vmul.f32 %v5061, %v5128
      %v5156 = vmul.f32 %v5080, %v5130
      %v5157 = vmul.f32 %v5099, %v5132
      %v5158 = vmul.f32 %v5118, %v5134
      %v5159 = vsub.f32 %v5151, 1.0
      %v5160 = vsub.f32 %v5152, 1.0
      %v5161 = vsub.f32 %v5153, 1.0
      %v5162 = vsub.f32 %v5154, 1.0
      %v5163 = vsub.f32 %v5155, 1.0
      %v5164 = vsub.f32 %v5156, 1.0
      %v5165 = vsub.f32 %v5157, 1.0
      %v5166 = vsub.f32 %v5158, 1.0
      %v5167 = vmul.f32 %v5159, 12.0
      %v5168 = vmul.f32 %v5160, 12.0
      %v5169 = vmul.f32 %v5161, 12.0
      %v5170 = vmul.f32 %v5162, 12.0
      %v5171 = vmul.f32 %v5163, 12.0
      %v5172 = vmul.f32 %v5164, 12.0
      %v5173 = vmul.f32 %v5165, 12.0
      %v5174 = vmul.f32 %v5166, 12.0
      %vm5183 = vcmask 1041409
      %v5184 = vsel %vm5183, %v5144, %v5143
      %vm5185 = vcmask 1042434
      %v5186 = vsel %vm5185, %v5145, %v5184
      %vm5187 = vcmask 1043459
      %v5188 = vsel %vm5187, %v5146, %v5186
      %vm5189 = vcmask 1044484
      %v5190 = vsel %vm5189, %v5147, %v5188
      %vm5191 = vcmask 1045509
      %v5192 = vsel %vm5191, %v5148, %v5190
      %vm5193 = vcmask 1046534
      %v5194 = vsel %vm5193, %v5149, %v5192
      %vm5195 = vcmask 1047559
      %v5196 = vsel %vm5195, %v5150, %v5194
      %vm5198 = vcmask 7168
      %5199 = vst.msk [vmem:[%s251] sm:$0xff] %vm5198, %v5196
      %v5208 = vsel %vm5183, %v5168, %v5167
      %v5209 = vsel %vm5185, %v5169, %v5208
      %v5210 = vsel %vm5187, %v5170, %v5209
      %v5211 = vsel %vm5189, %v5171, %v5210
      %v5212 = vsel %vm5191, %v5172, %v5211
      %v5213 = vsel %vm5193, %v5173, %v5212
      %v5214 = vsel %vm5195, %v5174, %v5213
      %vm5216 = vcmask 15368
      %5217 = vst.msk [vmem:[%s251] sm:$0xff] %vm5216, %v5214
      %p5218 = scmp.lt.s32.totalorder %s19, 1
      %s5219 = scalar_select %p5218, %s19, 1
      %p5220 = scmp.lt.s32.totalorder %s20, 0
      %s5221 = scalar_select %p5220, %s20, 0
      %s5222 = sadd.s32 %s5221, %s5219
      %s5223 = smul.addr %s5222, 8
      %s5224 = scalar_lea.vmem %s4, %s5223
      // Predicated region
      $region37: #{multipath_generator_forward.1} parent=35 // pred_check
        %p5225 = pneg %p143
      $region38: #{multipath_generator_forward.1} parent=35 // pred_check_branch
        %5227 = sbr.rel (%p5225) target = $region40
      $region39: #{multipath_generator_forward.1} parent=35 // pred_region
        _
      $region40: #{multipath_generator_forward.1} parent=35 // pred_fallthru
        _
    $region36: #{multipath_generator_forward.1} parent=5 // pred_fallthru
      _
    %p5228 = scmp.le.s32.totalorder 2, %s10
    // Predicated region
    $region41: #{multipath_generator_forward.1} parent=5 // pred_check
      %p5229 = pneg %p5228
    $region42: #{multipath_generator_forward.1} parent=5 // pred_check_branch
      %5231 = sbr.rel (%p5229) target = $region44
    $region43: #{multipath_generator_forward.1} parent=5 // pred_region
      %s5232 = ssub.s32 %s10, 2
      // Predicated region
      $region45: #{multipath_generator_forward.1} parent=43 // pred_check
        %p5233 = pneg %p149
      $region46: #{multipath_generator_forward.1} parent=43 // pred_check_branch
        %5235 = sbr.rel (%p5233) target = $region48
      $region47: #{multipath_generator_forward.1} parent=43 // pred_region
        %p5236 = scmp.lt.s32.totalorder %s21, 1
        %s5237 = scalar_select %p5236, %s21, 1
        %p5238 = scmp.lt.s32.totalorder %s22, 0
        %s5239 = scalar_select %p5238, %s22, 0
        %s5240 = sadd.s32 %s5239, %s5237
        %s5241 = smul.addr %s5240, 8
        %s5242 = scalar_lea.vmem %s4, %s5241
      $region48: #{multipath_generator_forward.1} parent=43 // pred_fallthru
        _
    $region44: #{multipath_generator_forward.1} parent=5 // pred_fallthru
      _
  $region6: #{multipath_generator_forward.1} parent=0 // loop_footer
    %s14 = sadd.s32 1, %s10
  $region7: #{multipath_generator_forward.1} parent=0 // loop_footer_branch
    %9 = sbr.rel target = $region3
  $region8: #{multipath_generator_forward.1} parent=0 // loop_exit
    _

</llo_original>
